<compile_context>
chip_gen: v6e
topology: v6e:2x2x1
jax: 0.10.0
libtpu: 0.0.40
codegen_flags: <defaults>
</compile_context>

<pallas_src>
import functools

import jax
import jax.numpy as jnp
from jax.experimental import pallas as pl
from jax.experimental.pallas import tpu as pltpu

NEG_SLOPE = 0.01  # PyTorch nn.LeakyReLU default


def _leaky_relu(v):
    return jnp.where(v > 0, v, NEG_SLOPE * v)


def autoencoder_kernel(x_ref,
                       w1_ref, b1_ref,
                       w2_ref, b2_ref,
                       w3_ref, b3_ref,
                       w4_ref, b4_ref,
                       enc_ref, dec_ref):
    # Matmul inputs run in the weights' dtype (bf16 by default); accumulation,
    # bias add and LeakyReLU stay in f32.
    cdt = w1_ref.dtype
    x = x_ref[...]

    # encoder: Linear(d, k) + LeakyReLU
    h = jnp.dot(x.astype(cdt), w1_ref[...], preferred_element_type=jnp.float32)
    h = _leaky_relu(h + b1_ref[...])
    # NOTE: k=32 < 128 lanes -> masked partial stores; amortized by the large tb.
    enc_ref[...] = h.astype(enc_ref.dtype)

    # decoder: Linear(k, 256) + LeakyReLU
    h2 = jnp.dot(h.astype(cdt), w2_ref[...], preferred_element_type=jnp.float32)
    h2 = _leaky_relu(h2 + b2_ref[...])

    # Linear(256, 512) + LeakyReLU
    h3 = jnp.dot(h2.astype(cdt), w3_ref[...], preferred_element_type=jnp.float32)
    h3 = _leaky_relu(h3 + b3_ref[...])

    # Linear(512, d) + LeakyReLU
    h4 = jnp.dot(h3.astype(cdt), w4_ref[...], preferred_element_type=jnp.float32)
    h4 = _leaky_relu(h4 + b4_ref[...])
    dec_ref[...] = h4.astype(dec_ref.dtype)


@functools.partial(jax.jit, static_argnames=("tb", "use_bf16"))
def autoencoder_forward(x, params, *, tb=256, use_bf16=True):
    """params = dict of (in,out) weights w1..w4 and (1,out) biases b1..b4 (f32).

    tb: batch tile.  Keep it a multiple of 128 (fills v5e MXU rows) and such that
    the grid (padded_B // tb) has >= 2 steps so both v7x TensorCores are used.
    """
    B, d = x.shape
    k = params["w1"].shape[1]

    # Clamp / align the tile and pad ragged batches to a whole number of tiles.
    tb = max(8, min(tb, B))
    tb -= tb % 8
    B_pad = pl.cdiv(B, tb) * tb
    x_in = jnp.pad(x, ((0, B_pad - B), (0, 0))) if B_pad != B else x

    wdt = jnp.bfloat16 if use_bf16 else x.dtype
    w1 = params["w1"].astype(wdt)
    w2 = params["w2"].astype(wdt)
    w3 = params["w3"].astype(wdt)
    w4 = params["w4"].astype(wdt)
    b1 = params["b1"].astype(jnp.float32)
    b2 = params["b2"].astype(jnp.float32)
    b3 = params["b3"].astype(jnp.float32)
    b4 = params["b4"].astype(jnp.float32)

    def const_spec(arr):
        return pl.BlockSpec(arr.shape, lambda i: (0, 0))

    grid = (B_pad // tb,)
    in_specs = [
        pl.BlockSpec((tb, d), lambda i: (i, 0)),             # x tile
        const_spec(w1), const_spec(b1),
        const_spec(w2), const_spec(b2),
        const_spec(w3), const_spec(b3),
        const_spec(w4), const_spec(b4),
    ]
    out_specs = (
        pl.BlockSpec((tb, k), lambda i: (i, 0)),             # encoded tile
        pl.BlockSpec((tb, d), lambda i: (i, 0)),             # decoded tile
    )
    out_shape = (
        jax.ShapeDtypeStruct((B_pad, k), x.dtype),
        jax.ShapeDtypeStruct((B_pad, d), x.dtype),
    )

    itemsize = jnp.dtype(x.dtype).itemsize
    w_bytes = sum(int(w.size) * jnp.dtype(wdt).itemsize for w in (w1, w2, w3, w4))
    b_bytes = sum(int(b.size) * 4 for b in (b1, b2, b3, b4))
    flops = 2 * B_pad * (d * k + k * 256 + 256 * 512 + 512 * d)
    bytes_accessed = (B_pad * d * itemsize            # x
                      + B_pad * (k + d) * itemsize    # encoded + decoded
                      + w_bytes + b_bytes)
    cost = pl.CostEstimate(flops=int(flops), transcendentals=0,
                           bytes_accessed=int(bytes_accessed))

    encoded, decoded = pl.pallas_call(
        autoencoder_kernel,
        grid=grid,
        in_specs=in_specs,
        out_specs=out_specs,
        out_shape=out_shape,
        cost_estimate=cost,
        compiler_params=pltpu.CompilerParams(
            dimension_semantics=("parallel",)),
    )(x_in,
      w1, b1,
      w2, b2,
      w3, b3,
      w4, b4)

    if B_pad != B:
        encoded = encoded[:B]
        decoded = decoded[:B]
    return encoded, decoded


def init_params(key, d, k, dtype=jnp.float32):
    """Deterministic init matching PyTorch Linear default: U(-1/sqrt(in), 1/sqrt(in)).
    Weights are stored transposed as (in, out)."""
    dims = [(d, k), (k, 256), (256, 512), (512, d)]
    params = {}
    keys = jax.random.split(key, 2 * len(dims))
    for idx, (fan_in, fan_out) in enumerate(dims):
        bound = 1.0 / jnp.sqrt(jnp.asarray(fan_in, dtype=jnp.float32))
        wk, bk = keys[2 * idx], keys[2 * idx + 1]
        params[f"w{idx + 1}"] = jax.random.uniform(
            wk, (fan_in, fan_out), dtype=dtype, minval=-bound, maxval=bound)
        params[f"b{idx + 1}"] = jax.random.uniform(
            bk, (1, fan_out), dtype=dtype, minval=-bound, maxval=bound)
    return params


def reference_forward(x, params):
    """Pure-f32 jnp reference (mirrors the PyTorch module)."""
    def leaky(v):
        return jnp.where(v > 0, v, NEG_SLOPE * v)
    enc = leaky(x @ params["w1"] + params["b1"])
    h = leaky(enc @ params["w2"] + params["b2"])
    h = leaky(h @ params["w3"] + params["b3"])
    dec = leaky(h @ params["w4"] + params["b4"])
    return enc, dec


if __name__ == "__main__":
    # Small-but-MXU-friendly test shapes: batch 512, d=128 features, k=32 code.
    B, d, k = 512, 128, 32
    key = jax.random.PRNGKey(0)
    xkey, pkey = jax.random.split(key)
    x = jax.random.normal(xkey, (B, d), dtype=jnp.float32)
    params = init_params(pkey, d, k)

    # tb=256 -> grid of 2 parallel steps (keeps both v7x TensorCores busy,
    # multiple of 128 for v5e MXU rows).
    encoded, decoded = autoencoder_forward(x, params, tb=256)
    jax.block_until_ready((encoded, decoded))

    enc_ref, dec_ref = reference_forward(x, params)
    assert encoded.shape == (B, k) and decoded.shape == (B, d)
    # bf16 MXU inputs with f32 accumulation -> loose tolerance vs. f32 reference.
    assert jnp.allclose(encoded, enc_ref, atol=3e-2, rtol=3e-2)
    assert jnp.allclose(decoded, dec_ref, atol=3e-2, rtol=3e-2)

    # Exact f32 path must match the reference tightly.
    enc_f32, dec_f32 = autoencoder_forward(x, params, tb=256, use_bf16=False)
    jax.block_until_ready((enc_f32, dec_f32))
    assert jnp.allclose(enc_f32, enc_ref, atol=1e-5, rtol=1e-5)
    assert jnp.allclose(dec_f32, dec_ref, atol=1e-4, rtol=1e-4)

    # Ragged-batch path (padding + slice) also works.
    enc_r, dec_r = autoencoder_forward(x[:100], params, tb=256)
    jax.block_until_ready((enc_r, dec_r))
    assert enc_r.shape == (100, k) and dec_r.shape == (100, d)
    assert jnp.allclose(enc_r, enc_ref[:100], atol=3e-2, rtol=3e-2)

    print("KERNEL_OK")
</pallas_src>

<mosaic_0001>
module attributes {stable_mosaic.version = 11 : i64} {
  func.func @autoencoder_kernel(%arg0: i32, %arg1: memref<256x128xf32, #tpu.memory_space<vmem>>, %arg2: memref<128x32xbf16, #tpu.memory_space<vmem>>, %arg3: memref<1x32xf32, #tpu.memory_space<vmem>>, %arg4: memref<32x256xbf16, #tpu.memory_space<vmem>>, %arg5: memref<1x256xf32, #tpu.memory_space<vmem>>, %arg6: memref<256x512xbf16, #tpu.memory_space<vmem>>, %arg7: memref<1x512xf32, #tpu.memory_space<vmem>>, %arg8: memref<512x128xbf16, #tpu.memory_space<vmem>>, %arg9: memref<1x128xf32, #tpu.memory_space<vmem>>, %arg10: memref<256x32xf32, #tpu.memory_space<vmem>>, %arg11: memref<256x128xf32, #tpu.memory_space<vmem>>) attributes {dimension_semantics = [#tpu.dimension_semantics<parallel>], iteration_bounds = array<i64: 2>, scalar_prefetch = 0 : i64, scratch_operands = 0 : i64, tpu.core_type = #tpu.core_type<tc>, window_params = [{transform_indices = @transform_0, window_bounds = array<i64: 256, 128>}, {pipeline_mode = #tpu.pipeline_mode<synchronous>, transform_indices = @transform_1, window_bounds = array<i64: 128, 32>}, {pipeline_mode = #tpu.pipeline_mode<synchronous>, transform_indices = @transform_2, window_bounds = array<i64: 1, 32>}, {pipeline_mode = #tpu.pipeline_mode<synchronous>, transform_indices = @transform_3, window_bounds = array<i64: 32, 256>}, {pipeline_mode = #tpu.pipeline_mode<synchronous>, transform_indices = @transform_4, window_bounds = array<i64: 1, 256>}, {pipeline_mode = #tpu.pipeline_mode<synchronous>, transform_indices = @transform_5, window_bounds = array<i64: 256, 512>}, {pipeline_mode = #tpu.pipeline_mode<synchronous>, transform_indices = @transform_6, window_bounds = array<i64: 1, 512>}, {pipeline_mode = #tpu.pipeline_mode<synchronous>, transform_indices = @transform_7, window_bounds = array<i64: 512, 128>}, {pipeline_mode = #tpu.pipeline_mode<synchronous>, transform_indices = @transform_8, window_bounds = array<i64: 1, 128>}, {transform_indices = @transform_9, window_bounds = array<i64: 256, 32>}, {transform_indices = @transform_10, window_bounds = array<i64: 256, 128>}]} {
    %c0 = arith.constant 0 : index
    %c0_0 = arith.constant 0 : index
    %0 = vector.load %arg1[%c0, %c0_0] : memref<256x128xf32, #tpu.memory_space<vmem>>, vector<256x128xf32>
    %1 = arith.truncf %0 : vector<256x128xf32> to vector<256x128xbf16>
    %c0_1 = arith.constant 0 : index
    %c0_2 = arith.constant 0 : index
    %2 = vector.load %arg2[%c0_1, %c0_2] : memref<128x32xbf16, #tpu.memory_space<vmem>>, vector<128x32xbf16>
    %cst = arith.constant dense<0.000000e+00> : vector<256x32xf32>
    %3 = tpu.matmul %1, %2, %cst {dimension_numbers = #tpu.dot_dimension_numbers<[1], [0], [0], [1], [0, 0, 1, 1], [], []>} : vector<256x128xbf16>, vector<128x32xbf16>, vector<256x32xf32> -> vector<256x32xf32>
    %c0_3 = arith.constant 0 : index
    %c0_4 = arith.constant 0 : index
    %4 = vector.load %arg3[%c0_3, %c0_4] : memref<1x32xf32, #tpu.memory_space<vmem>>, vector<1x32xf32>
    %5 = vector.broadcast %4 : vector<1x32xf32> to vector<256x32xf32>
    %6 = arith.addf %3, %5 : vector<256x32xf32>
    %cst_5 = arith.constant 0.000000e+00 : f32
    %7 = vector.broadcast %cst_5 : f32 to vector<256x32xf32>
    %8 = arith.cmpf ogt, %6, %7 : vector<256x32xf32>
    %cst_6 = arith.constant 0.00999999977 : f32
    %9 = vector.broadcast %cst_6 : f32 to vector<256x32xf32>
    %10 = arith.mulf %9, %6 : vector<256x32xf32>
    %11 = arith.select %8, %6, %10 : vector<256x32xi1>, vector<256x32xf32>
    %c0_7 = arith.constant 0 : index
    %c0_8 = arith.constant 0 : index
    %12 = vector.load %arg10[%c0_7, %c0_8] : memref<256x32xf32, #tpu.memory_space<vmem>>, vector<256x32xf32>
    tpu.vector_store %arg10[%c0_7, %c0_8], %11 {strides = array<i32>} : memref<256x32xf32, #tpu.memory_space<vmem>>, vector<256x32xf32>,
    %13 = arith.truncf %11 : vector<256x32xf32> to vector<256x32xbf16>
    %c0_9 = arith.constant 0 : index
    %c0_10 = arith.constant 0 : index
    %14 = vector.load %arg4[%c0_9, %c0_10] : memref<32x256xbf16, #tpu.memory_space<vmem>>, vector<32x256xbf16>
    %cst_11 = arith.constant dense<0.000000e+00> : vector<256x256xf32>
    %15 = tpu.matmul %13, %14, %cst_11 {dimension_numbers = #tpu.dot_dimension_numbers<[1], [0], [0], [1], [0, 0, 1, 1], [], []>} : vector<256x32xbf16>, vector<32x256xbf16>, vector<256x256xf32> -> vector<256x256xf32>
    %c0_12 = arith.constant 0 : index
    %c0_13 = arith.constant 0 : index
    %16 = vector.load %arg5[%c0_12, %c0_13] : memref<1x256xf32, #tpu.memory_space<vmem>>, vector<1x256xf32>
    %17 = vector.broadcast %16 : vector<1x256xf32> to vector<256x256xf32>
    %18 = arith.addf %15, %17 : vector<256x256xf32>
    %cst_14 = arith.constant 0.000000e+00 : f32
    %19 = vector.broadcast %cst_14 : f32 to vector<256x256xf32>
    %20 = arith.cmpf ogt, %18, %19 : vector<256x256xf32>
    %cst_15 = arith.constant 0.00999999977 : f32
    %21 = vector.broadcast %cst_15 : f32 to vector<256x256xf32>
    %22 = arith.mulf %21, %18 : vector<256x256xf32>
    %23 = arith.select %20, %18, %22 : vector<256x256xi1>, vector<256x256xf32>
    %24 = arith.truncf %23 : vector<256x256xf32> to vector<256x256xbf16>
    %c0_16 = arith.constant 0 : index
    %c0_17 = arith.constant 0 : index
    %25 = vector.load %arg6[%c0_16, %c0_17] : memref<256x512xbf16, #tpu.memory_space<vmem>>, vector<256x512xbf16>
    %cst_18 = arith.constant dense<0.000000e+00> : vector<256x512xf32>
    %26 = tpu.matmul %24, %25, %cst_18 {dimension_numbers = #tpu.dot_dimension_numbers<[1], [0], [0], [1], [0, 0, 1, 1], [], []>} : vector<256x256xbf16>, vector<256x512xbf16>, vector<256x512xf32> -> vector<256x512xf32>
    %c0_19 = arith.constant 0 : index
    %c0_20 = arith.constant 0 : index
    %27 = vector.load %arg7[%c0_19, %c0_20] : memref<1x512xf32, #tpu.memory_space<vmem>>, vector<1x512xf32>
    %28 = vector.broadcast %27 : vector<1x512xf32> to vector<256x512xf32>
    %29 = arith.addf %26, %28 : vector<256x512xf32>
    %cst_21 = arith.constant 0.000000e+00 : f32
    %30 = vector.broadcast %cst_21 : f32 to vector<256x512xf32>
    %31 = arith.cmpf ogt, %29, %30 : vector<256x512xf32>
    %cst_22 = arith.constant 0.00999999977 : f32
    %32 = vector.broadcast %cst_22 : f32 to vector<256x512xf32>
    %33 = arith.mulf %32, %29 : vector<256x512xf32>
    %34 = arith.select %31, %29, %33 : vector<256x512xi1>, vector<256x512xf32>
    %35 = arith.truncf %34 : vector<256x512xf32> to vector<256x512xbf16>
    %c0_23 = arith.constant 0 : index
    %c0_24 = arith.constant 0 : index
    %36 = vector.load %arg8[%c0_23, %c0_24] : memref<512x128xbf16, #tpu.memory_space<vmem>>, vector<512x128xbf16>
    %cst_25 = arith.constant dense<0.000000e+00> : vector<256x128xf32>
    %37 = tpu.matmul %35, %36, %cst_25 {dimension_numbers = #tpu.dot_dimension_numbers<[1], [0], [0], [1], [0, 0, 1, 1], [], []>} : vector<256x512xbf16>, vector<512x128xbf16>, vector<256x128xf32> -> vector<256x128xf32>
    %c0_26 = arith.constant 0 : index
    %c0_27 = arith.constant 0 : index
    %38 = vector.load %arg9[%c0_26, %c0_27] : memref<1x128xf32, #tpu.memory_space<vmem>>, vector<1x128xf32>
    %39 = vector.broadcast %38 : vector<1x128xf32> to vector<256x128xf32>
    %40 = arith.addf %37, %39 : vector<256x128xf32>
    %cst_28 = arith.constant 0.000000e+00 : f32
    %41 = vector.broadcast %cst_28 : f32 to vector<256x128xf32>
    %42 = arith.cmpf ogt, %40, %41 : vector<256x128xf32>
    %cst_29 = arith.constant 0.00999999977 : f32
    %43 = vector.broadcast %cst_29 : f32 to vector<256x128xf32>
    %44 = arith.mulf %43, %40 : vector<256x128xf32>
    %45 = arith.select %42, %40, %44 : vector<256x128xi1>, vector<256x128xf32>
    %c0_30 = arith.constant 0 : index
    %c0_31 = arith.constant 0 : index
    %46 = vector.load %arg11[%c0_30, %c0_31] : memref<256x128xf32, #tpu.memory_space<vmem>>, vector<256x128xf32>
    tpu.vector_store %arg11[%c0_30, %c0_31], %45 {strides = array<i32>} : memref<256x128xf32, #tpu.memory_space<vmem>>, vector<256x128xf32>,
    return
  }
  func.func @transform_0(%arg0: i32) -> (i32, i32) {
    %c0_i32 = arith.constant 0 : i32
    %c0_i32_0 = arith.constant 0 : i32
    return %arg0, %c0_i32 : i32, i32
  }
  func.func @transform_1(%arg0: i32) -> (i32, i32) {
    %c0_i32 = arith.constant 0 : i32
    %c0_i32_0 = arith.constant 0 : i32
    %c0_i32_1 = arith.constant 0 : i32
    return %c0_i32, %c0_i32_0 : i32, i32
  }
  func.func @transform_2(%arg0: i32) -> (i32, i32) {
    %c0_i32 = arith.constant 0 : i32
    %c0_i32_0 = arith.constant 0 : i32
    %c0_i32_1 = arith.constant 0 : i32
    return %c0_i32, %c0_i32_0 : i32, i32
  }
  func.func @transform_3(%arg0: i32) -> (i32, i32) {
    %c0_i32 = arith.constant 0 : i32
    %c0_i32_0 = arith.constant 0 : i32
    %c0_i32_1 = arith.constant 0 : i32
    return %c0_i32, %c0_i32_0 : i32, i32
  }
  func.func @transform_4(%arg0: i32) -> (i32, i32) {
    %c0_i32 = arith.constant 0 : i32
    %c0_i32_0 = arith.constant 0 : i32
    %c0_i32_1 = arith.constant 0 : i32
    return %c0_i32, %c0_i32_0 : i32, i32
  }
  func.func @transform_5(%arg0: i32) -> (i32, i32) {
    %c0_i32 = arith.constant 0 : i32
    %c0_i32_0 = arith.constant 0 : i32
    %c0_i32_1 = arith.constant 0 : i32
    return %c0_i32, %c0_i32_0 : i32, i32
  }
  func.func @transform_6(%arg0: i32) -> (i32, i32) {
    %c0_i32 = arith.constant 0 : i32
    %c0_i32_0 = arith.constant 0 : i32
    %c0_i32_1 = arith.constant 0 : i32
    return %c0_i32, %c0_i32_0 : i32, i32
  }
  func.func @transform_7(%arg0: i32) -> (i32, i32) {
    %c0_i32 = arith.constant 0 : i32
    %c0_i32_0 = arith.constant 0 : i32
    %c0_i32_1 = arith.constant 0 : i32
    return %c0_i32, %c0_i32_0 : i32, i32
  }
  func.func @transform_8(%arg0: i32) -> (i32, i32) {
    %c0_i32 = arith.constant 0 : i32
    %c0_i32_0 = arith.constant 0 : i32
    %c0_i32_1 = arith.constant 0 : i32
    return %c0_i32, %c0_i32_0 : i32, i32
  }
  func.func @transform_9(%arg0: i32) -> (i32, i32) {
    %c0_i32 = arith.constant 0 : i32
    %c0_i32_0 = arith.constant 0 : i32
    return %arg0, %c0_i32 : i32, i32
  }
  func.func @transform_10(%arg0: i32) -> (i32, i32) {
    %c0_i32 = arith.constant 0 : i32
    %c0_i32_0 = arith.constant 0 : i32
    return %arg0, %c0_i32 : i32, i32
  }
}

</mosaic_0001>

<llo_original>
// kernel: autoencoder_forward.1
$region0: #{autoencoder_forward.1}
  #allocation0 [shape = 'u32[]', space=smem, size = 0x4, offset = 0x4, fixed_abs, tag = 'smem constant byte address 0x4 - core index']
  #allocation1 [shape = 'u32[144,128]{1,0:T(1,128)}', space=vmem, size = 0x12000, scoped, tag = 'internal scratch']
  %s0 = inlined_call_operand.vmem [shape: f32[512,128], index: 0, kind: input, shape index: {}]
  %s1 = inlined_call_operand.vmem [shape: bf16[128,32], index: 1, kind: input, shape index: {}]
  %s2 = inlined_call_operand.vmem [shape: f32[1,32], index: 2, kind: input, shape index: {}]
  %s3 = inlined_call_operand.vmem [shape: bf16[32,256], index: 3, kind: input, shape index: {}]
  %s4 = inlined_call_operand.vmem [shape: f32[1,256], index: 4, kind: input, shape index: {}]
  %s5 = inlined_call_operand.vmem [shape: bf16[256,512], index: 5, kind: input, shape index: {}]
  %s6 = inlined_call_operand.vmem [shape: f32[1,512], index: 6, kind: input, shape index: {}]
  %s7 = inlined_call_operand.vmem [shape: bf16[512,128], index: 7, kind: input, shape index: {}]
  %s8 = inlined_call_operand.vmem [shape: f32[1,128], index: 8, kind: input, shape index: {}]
  %s9 = inlined_call_operand.vmem [shape: f32[512,32], index: 9, kind: output, shape index: {0}]
  %s10 = inlined_call_operand.hbm [shape: f32[512,128], index: 10, kind: output, shape index: {1}]
  %11 = xla_tuple %s9, %s10
  %s12 = sld [smem:[#allocation0]]
  $region77: #{autoencoder_forward.1} parent=0
    _
  %s14 = ssub.s32 1, %s12
  %s15 = scalar_select 0, %s14, %s12
  $region1: #{autoencoder_forward.1} parent=0
    #allocation2 [shape = 'u8[262144]{0}', space=vmem, size = 0x40000, scoped, tag = 'output window, operand 1']
    #allocation3 [shape = 's32[2]{0}', space=sflag, size = 0x8, scoped, tag = 'scoped memory for autoencoder_forward.1']
    %16 = vsyncpa [#allocation3], 0
    %s17 = scalar_lea.sflag [#allocation3], 1
    %18 = vsyncpa %s17, 0
    loop: start=0, step=1, limit=4
    $region2: #{autoencoder_forward.1} parent=1 // loop_pre_header
      _
    $region3: #{autoencoder_forward.1} parent=1 // loop_header
      %s20 = sphi 0, %s24
      %p21 = scmp.ge.s32.totalorder %s20, 4
      %s30 = sphi 0, %s32
      %s33 = sphi 0, %s30
      %s34 = sphi 0, %s33
      %s50 = sphi 0, %s34
      %s54 = sphi 0, %s54
      %s56 = sphi 0, %s54
      %s57 = sphi 0, %s56
      %s71 = sphi 0, %s57
      %s75 = sphi 0, %s75
      %s77 = sphi 0, %s75
      %s78 = sphi 0, %s77
      %s92 = sphi 0, %s78
      %s96 = sphi 0, %s96
      %s98 = sphi 0, %s96
      %s99 = sphi 0, %s98
      %s113 = sphi 0, %s99
      %s117 = sphi 0, %s117
      %s119 = sphi 0, %s117
      %s120 = sphi 0, %s119
      %s134 = sphi 0, %s120
      %s138 = sphi 0, %s138
      %s140 = sphi 0, %s138
      %s141 = sphi 0, %s140
      %s155 = sphi 0, %s141
      %s159 = sphi 0, %s159
      %s161 = sphi 0, %s159
      %s162 = sphi 0, %s161
      %s176 = sphi 0, %s162
      %s180 = sphi 0, %s180
      %s182 = sphi 0, %s180
      %s183 = sphi 0, %s182
      %s197 = sphi 0, %s183
      %s201 = sphi 0, %s201
      %s203 = sphi 0, %s201
      %s204 = sphi 0, %s203
      %s218 = sphi 0, %s204
      %s224 = sphi 0, %s226
      %s227 = sphi 0, %s224
      %s228 = sphi 0, %s227
      %s244 = sphi 0, %s228
      %s250 = sphi 0, %s252
      %s253 = sphi 0, %s250
      %s254 = sphi 0, %s253
      %s270 = sphi 0, %s254
    $region4: #{autoencoder_forward.1} parent=1 // loop_header_branch
      %23 = sbr.rel (%p21) target = $region8
    $region5: #{autoencoder_forward.1} parent=1 // loop_body
      %s25 = ssub.s32 %s20, 1
      %s26 = ssub.s32 %s20, 2
      %s27 = sadd.s32 %s20, 1
      %s28 = ssub.s32 %s20, %s27
      %p29 = scmp.eq.s32.totalorder %s28, 0
      %s31 = sadd.s32 %s30, 1
      %s32 = scalar_select %p29, %s30, %s31
      %p35 = pneg %p29
      %p36 = scmp.eq.s32.totalorder %s20, 1
      %p37 = por %p35, %p36
      %p38 = scmp.ne.s32.totalorder %s30, %s33
      %p39 = scmp.eq.s32.totalorder %s20, 0
      %p40 = por %p38, %p39
      %p41 = scmp.ne.s32.totalorder %s30, %s33
      %p42 = scmp.eq.s32.totalorder %s25, 1
      %p43 = por %p41, %p42
      %p44 = scmp.ne.s32.totalorder %s33, %s34
      %p45 = scmp.eq.s32.totalorder %s25, 0
      %p46 = por %p44, %p45
      %p47 = scmp.ne.s32.totalorder %s33, %s34
      %p48 = scmp.eq.s32.totalorder %s26, 1
      %p49 = por %p47, %p48
      %p51 = scmp.ne.s32.totalorder %s34, %s50
      %p52 = scmp.eq.s32.totalorder %s26, 0
      %p53 = por %p51, %p52
      %s55 = sadd.s32 %s54, 1
      %p58 = scmp.eq.s32.totalorder %s20, 1
      %p59 = scmp.ne.s32.totalorder %s54, %s56
      %p60 = scmp.eq.s32.totalorder %s20, 0
      %p61 = por %p59, %p60
      %p62 = scmp.ne.s32.totalorder %s54, %s56
      %p63 = scmp.eq.s32.totalorder %s25, 1
      %p64 = por %p62, %p63
      %p65 = scmp.ne.s32.totalorder %s56, %s57
      %p66 = scmp.eq.s32.totalorder %s25, 0
      %p67 = por %p65, %p66
      %p68 = scmp.ne.s32.totalorder %s56, %s57
      %p69 = scmp.eq.s32.totalorder %s26, 1
      %p70 = por %p68, %p69
      %p72 = scmp.ne.s32.totalorder %s57, %s71
      %p73 = scmp.eq.s32.totalorder %s26, 0
      %p74 = por %p72, %p73
      %s76 = sadd.s32 %s75, 1
      %p79 = scmp.eq.s32.totalorder %s20, 1
      %p80 = scmp.ne.s32.totalorder %s75, %s77
      %p81 = scmp.eq.s32.totalorder %s20, 0
      %p82 = por %p80, %p81
      %p83 = scmp.ne.s32.totalorder %s75, %s77
      %p84 = scmp.eq.s32.totalorder %s25, 1
      %p85 = por %p83, %p84
      %p86 = scmp.ne.s32.totalorder %s77, %s78
      %p87 = scmp.eq.s32.totalorder %s25, 0
      %p88 = por %p86, %p87
      %p89 = scmp.ne.s32.totalorder %s77, %s78
      %p90 = scmp.eq.s32.totalorder %s26, 1
      %p91 = por %p89, %p90
      %p93 = scmp.ne.s32.totalorder %s78, %s92
      %p94 = scmp.eq.s32.totalorder %s26, 0
      %p95 = por %p93, %p94
      %s97 = sadd.s32 %s96, 1
      %p100 = scmp.eq.s32.totalorder %s20, 1
      %p101 = scmp.ne.s32.totalorder %s96, %s98
      %p102 = scmp.eq.s32.totalorder %s20, 0
      %p103 = por %p101, %p102
      %p104 = scmp.ne.s32.totalorder %s96, %s98
      %p105 = scmp.eq.s32.totalorder %s25, 1
      %p106 = por %p104, %p105
      %p107 = scmp.ne.s32.totalorder %s98, %s99
      %p108 = scmp.eq.s32.totalorder %s25, 0
      %p109 = por %p107, %p108
      %p110 = scmp.ne.s32.totalorder %s98, %s99
      %p111 = scmp.eq.s32.totalorder %s26, 1
      %p112 = por %p110, %p111
      %p114 = scmp.ne.s32.totalorder %s99, %s113
      %p115 = scmp.eq.s32.totalorder %s26, 0
      %p116 = por %p114, %p115
      %s118 = sadd.s32 %s117, 1
      %p121 = scmp.eq.s32.totalorder %s20, 1
      %p122 = scmp.ne.s32.totalorder %s117, %s119
      %p123 = scmp.eq.s32.totalorder %s20, 0
      %p124 = por %p122, %p123
      %p125 = scmp.ne.s32.totalorder %s117, %s119
      %p126 = scmp.eq.s32.totalorder %s25, 1
      %p127 = por %p125, %p126
      %p128 = scmp.ne.s32.totalorder %s119, %s120
      %p129 = scmp.eq.s32.totalorder %s25, 0
      %p130 = por %p128, %p129
      %p131 = scmp.ne.s32.totalorder %s119, %s120
      %p132 = scmp.eq.s32.totalorder %s26, 1
      %p133 = por %p131, %p132
      %p135 = scmp.ne.s32.totalorder %s120, %s134
      %p136 = scmp.eq.s32.totalorder %s26, 0
      %p137 = por %p135, %p136
      %s139 = sadd.s32 %s138, 1
      %p142 = scmp.eq.s32.totalorder %s20, 1
      %p143 = scmp.ne.s32.totalorder %s138, %s140
      %p144 = scmp.eq.s32.totalorder %s20, 0
      %p145 = por %p143, %p144
      %p146 = scmp.ne.s32.totalorder %s138, %s140
      %p147 = scmp.eq.s32.totalorder %s25, 1
      %p148 = por %p146, %p147
      %p149 = scmp.ne.s32.totalorder %s140, %s141
      %p150 = scmp.eq.s32.totalorder %s25, 0
      %p151 = por %p149, %p150
      %p152 = scmp.ne.s32.totalorder %s140, %s141
      %p153 = scmp.eq.s32.totalorder %s26, 1
      %p154 = por %p152, %p153
      %p156 = scmp.ne.s32.totalorder %s141, %s155
      %p157 = scmp.eq.s32.totalorder %s26, 0
      %p158 = por %p156, %p157
      %s160 = sadd.s32 %s159, 1
      %p163 = scmp.eq.s32.totalorder %s20, 1
      %p164 = scmp.ne.s32.totalorder %s159, %s161
      %p165 = scmp.eq.s32.totalorder %s20, 0
      %p166 = por %p164, %p165
      %p167 = scmp.ne.s32.totalorder %s159, %s161
      %p168 = scmp.eq.s32.totalorder %s25, 1
      %p169 = por %p167, %p168
      %p170 = scmp.ne.s32.totalorder %s161, %s162
      %p171 = scmp.eq.s32.totalorder %s25, 0
      %p172 = por %p170, %p171
      %p173 = scmp.ne.s32.totalorder %s161, %s162
      %p174 = scmp.eq.s32.totalorder %s26, 1
      %p175 = por %p173, %p174
      %p177 = scmp.ne.s32.totalorder %s162, %s176
      %p178 = scmp.eq.s32.totalorder %s26, 0
      %p179 = por %p177, %p178
      %s181 = sadd.s32 %s180, 1
      %p184 = scmp.eq.s32.totalorder %s20, 1
      %p185 = scmp.ne.s32.totalorder %s180, %s182
      %p186 = scmp.eq.s32.totalorder %s20, 0
      %p187 = por %p185, %p186
      %p188 = scmp.ne.s32.totalorder %s180, %s182
      %p189 = scmp.eq.s32.totalorder %s25, 1
      %p190 = por %p188, %p189
      %p191 = scmp.ne.s32.totalorder %s182, %s183
      %p192 = scmp.eq.s32.totalorder %s25, 0
      %p193 = por %p191, %p192
      %p194 = scmp.ne.s32.totalorder %s182, %s183
      %p195 = scmp.eq.s32.totalorder %s26, 1
      %p196 = por %p194, %p195
      %p198 = scmp.ne.s32.totalorder %s183, %s197
      %p199 = scmp.eq.s32.totalorder %s26, 0
      %p200 = por %p198, %p199
      %s202 = sadd.s32 %s201, 1
      %p205 = scmp.eq.s32.totalorder %s20, 1
      %p206 = scmp.ne.s32.totalorder %s201, %s203
      %p207 = scmp.eq.s32.totalorder %s20, 0
      %p208 = por %p206, %p207
      %p209 = scmp.ne.s32.totalorder %s201, %s203
      %p210 = scmp.eq.s32.totalorder %s25, 1
      %p211 = por %p209, %p210
      %p212 = scmp.ne.s32.totalorder %s203, %s204
      %p213 = scmp.eq.s32.totalorder %s25, 0
      %p214 = por %p212, %p213
      %p215 = scmp.ne.s32.totalorder %s203, %s204
      %p216 = scmp.eq.s32.totalorder %s26, 1
      %p217 = por %p215, %p216
      %p219 = scmp.ne.s32.totalorder %s204, %s218
      %p220 = scmp.eq.s32.totalorder %s26, 0
      %p221 = por %p219, %p220
      %s222 = ssub.s32 %s20, %s27
      %p223 = scmp.eq.s32.totalorder %s222, 0
      %s225 = sadd.s32 %s224, 1
      %s226 = scalar_select %p223, %s224, %s225
      %p229 = pneg %p223
      %p230 = scmp.eq.s32.totalorder %s20, 1
      %p231 = por %p229, %p230
      %p232 = scmp.ne.s32.totalorder %s224, %s227
      %p233 = scmp.eq.s32.totalorder %s20, 0
      %p234 = por %p232, %p233
      %p235 = scmp.ne.s32.totalorder %s224, %s227
      %p236 = scmp.eq.s32.totalorder %s25, 1
      %p237 = por %p235, %p236
      %p238 = scmp.ne.s32.totalorder %s227, %s228
      %p239 = scmp.eq.s32.totalorder %s25, 0
      %p240 = por %p238, %p239
      %p241 = scmp.ne.s32.totalorder %s227, %s228
      %p242 = scmp.eq.s32.totalorder %s26, 1
      %p243 = por %p241, %p242
      %p245 = scmp.ne.s32.totalorder %s228, %s244
      %p246 = scmp.eq.s32.totalorder %s26, 0
      %p247 = por %p245, %p246
      %s248 = ssub.s32 %s20, %s27
      %p249 = scmp.eq.s32.totalorder %s248, 0
      %s251 = sadd.s32 %s250, 1
      %s252 = scalar_select %p249, %s250, %s251
      %p255 = pneg %p249
      %p256 = scmp.eq.s32.totalorder %s20, 1
      %p257 = por %p255, %p256
      %p258 = scmp.ne.s32.totalorder %s250, %s253
      %p259 = scmp.eq.s32.totalorder %s20, 0
      %p260 = por %p258, %p259
      %p261 = scmp.ne.s32.totalorder %s250, %s253
      %p262 = scmp.eq.s32.totalorder %s25, 1
      %p263 = por %p261, %p262
      %p264 = scmp.ne.s32.totalorder %s253, %s254
      %p265 = scmp.eq.s32.totalorder %s25, 0
      %p266 = por %p264, %p265
      %p267 = scmp.ne.s32.totalorder %s253, %s254
      %p268 = scmp.eq.s32.totalorder %s26, 1
      %p269 = por %p267, %p268
      %p271 = scmp.ne.s32.totalorder %s254, %s270
      %p272 = scmp.eq.s32.totalorder %s26, 0
      %p273 = por %p271, %p272
      %p274 = scmp.le.s32.totalorder 1, %s20
      %p275 = scmp.lt.s32.totalorder %s20, 3
      %p276 = pnand %p274, %p275
      %p277 = pneg %p276
      // Predicated region
      $region9: #{autoencoder_forward.1} parent=5 // pred_check
        _
      $region10: #{autoencoder_forward.1} parent=5 // pred_check_branch
        %279 = sbr.rel (%p276) target = $region12
      $region11: #{autoencoder_forward.1} parent=5 // pred_region
        %s280 = ssub.s32 %s20, 1
        // Predicated region
        $region13: #{autoencoder_forward.1} parent=11 // pred_check
          %p281 = pneg %p67
        $region14: #{autoencoder_forward.1} parent=11 // pred_check_branch
          %283 = sbr.rel (%p281) target = $region16
        $region15: #{autoencoder_forward.1} parent=11 // pred_region
          _
        $region16: #{autoencoder_forward.1} parent=11 // pred_fallthru
          _
        // Predicated region
        $region17: #{autoencoder_forward.1} parent=11 // pred_check
          %p284 = pneg %p88
        $region18: #{autoencoder_forward.1} parent=11 // pred_check_branch
          %286 = sbr.rel (%p284) target = $region20
        $region19: #{autoencoder_forward.1} parent=11 // pred_region
          _
        $region20: #{autoencoder_forward.1} parent=11 // pred_fallthru
          _
        // Predicated region
        $region21: #{autoencoder_forward.1} parent=11 // pred_check
          %p287 = pneg %p109
        $region22: #{autoencoder_forward.1} parent=11 // pred_check_branch
          %289 = sbr.rel (%p287) target = $region24
        $region23: #{autoencoder_forward.1} parent=11 // pred_region
          _
        $region24: #{autoencoder_forward.1} parent=11 // pred_fallthru
          _
        // Predicated region
        $region25: #{autoencoder_forward.1} parent=11 // pred_check
          %p290 = pneg %p130
        $region26: #{autoencoder_forward.1} parent=11 // pred_check_branch
          %292 = sbr.rel (%p290) target = $region28
        $region27: #{autoencoder_forward.1} parent=11 // pred_region
          _
        $region28: #{autoencoder_forward.1} parent=11 // pred_fallthru
          _
        // Predicated region
        $region29: #{autoencoder_forward.1} parent=11 // pred_check
          %p293 = pneg %p151
        $region30: #{autoencoder_forward.1} parent=11 // pred_check_branch
          %295 = sbr.rel (%p293) target = $region32
        $region31: #{autoencoder_forward.1} parent=11 // pred_region
          _
        $region32: #{autoencoder_forward.1} parent=11 // pred_fallthru
          _
        // Predicated region
        $region33: #{autoencoder_forward.1} parent=11 // pred_check
          %p296 = pneg %p172
        $region34: #{autoencoder_forward.1} parent=11 // pred_check_branch
          %298 = sbr.rel (%p296) target = $region36
        $region35: #{autoencoder_forward.1} parent=11 // pred_region
          _
        $region36: #{autoencoder_forward.1} parent=11 // pred_fallthru
          _
        // Predicated region
        $region37: #{autoencoder_forward.1} parent=11 // pred_check
          %p299 = pneg %p193
        $region38: #{autoencoder_forward.1} parent=11 // pred_check_branch
          %301 = sbr.rel (%p299) target = $region40
        $region39: #{autoencoder_forward.1} parent=11 // pred_region
          _
        $region40: #{autoencoder_forward.1} parent=11 // pred_fallthru
          _
        // Predicated region
        $region41: #{autoencoder_forward.1} parent=11 // pred_check
          %p302 = pneg %p214
        $region42: #{autoencoder_forward.1} parent=11 // pred_check_branch
          %304 = sbr.rel (%p302) target = $region44
        $region43: #{autoencoder_forward.1} parent=11 // pred_region
          _
        $region44: #{autoencoder_forward.1} parent=11 // pred_fallthru
          _
      $region12: #{autoencoder_forward.1} parent=5 // pred_fallthru
        _
      %p305 = scmp.lt.s32.totalorder %s20, 2
      // Predicated region
      $region45: #{autoencoder_forward.1} parent=5 // pred_check
        %p306 = pneg %p305
      $region46: #{autoencoder_forward.1} parent=5 // pred_check_branch
        %308 = sbr.rel (%p306) target = $region48
      $region47: #{autoencoder_forward.1} parent=5 // pred_region
        // Predicated region
        $region49: #{autoencoder_forward.1} parent=47 // pred_check
          %p309 = pneg %p40
        $region50: #{autoencoder_forward.1} parent=47 // pred_check_branch
          %311 = sbr.rel (%p309) target = $region52
        $region51: #{autoencoder_forward.1} parent=47 // pred_region
          %s312 = smul.u32 32, %s20
          %p313 = scmp.lt.s32.totalorder %s312, 63
          %s314 = scalar_select %p313, %s312, 63
          %s315 = smul.addr %s314, 8
          %s316 = scalar_lea.vmem %s0, %s315
          %s317 = smul.u32 32, %s20
        $region52: #{autoencoder_forward.1} parent=47 // pred_fallthru
          _
      $region48: #{autoencoder_forward.1} parent=5 // pred_fallthru
        _
      %p318 = scmp.le.s32.totalorder 1, %s20
      %p319 = scmp.lt.s32.totalorder %s20, 3
      %p320 = pnand %p318, %p319
      %p321 = pneg %p320
      // Predicated region
      $region53: #{autoencoder_forward.1} parent=5 // pred_check
        _
      $region54: #{autoencoder_forward.1} parent=5 // pred_check_branch
        %323 = sbr.rel (%p320) target = $region56
      $region55: #{autoencoder_forward.1} parent=5 // pred_region
        %s324 = ssub.s32 %s20, 1
        %s325 = smul.u32 32, %s25
        %p326 = scmp.lt.s32.totalorder %s325, 63
        %s327 = scalar_select %p326, %s325, 63
        %s328 = smul.addr %s327, 8
        %s329 = scalar_lea.vmem %s0, %s328
        %p330 = pneg %p46
        %p331 = pneg %p43
        %p332 = pneg %p67
        %p333 = pneg %p64
        %p334 = pneg %p88
        %p335 = pneg %p85
        %p336 = pneg %p109
        %p337 = pneg %p106
        %p338 = pneg %p130
        %p339 = pneg %p127
        %p340 = pneg %p151
        %p341 = pneg %p148
        %p342 = pneg %p172
        %p343 = pneg %p169
        %p344 = pneg %p193
        %p345 = pneg %p190
        %p346 = pneg %p214
        %p347 = pneg %p211
        %p348 = pneg %p240
        %p349 = pneg %p237
        %s350 = smul.u32 32, %s25
        %p351 = scmp.lt.s32.totalorder %s350, 63
        %s352 = scalar_select %p351, %s350, 63
        %s353 = smul.addr %s352, 8
        %s354 = scalar_lea.vmem %s9, %s353
        %p355 = pneg %p266
        %p356 = pneg %p263
        %s357 = sand.u32 %s253, 1
        %s358 = scalar_lea.sflag [#allocation3], %s357
        %s359 = sand.u32 %s253, 1
        %s360 = smul.addr %s359, 256
        %s361 = scalar_lea.vmem [#allocation2], %s360
        %s362 = smul.u32 32, %s25
        %p363 = scmp.lt.s32.totalorder %s362, 63
        %s364 = scalar_select %p363, %s362, 63
        %s365 = smul.addr %s364, 8
        %s366 = scalar_lea.vmem %s0, %s365
        %s367 = smul.u32 32, %s25
        %s368 = smul.u32 32, %s25
        %p369 = scmp.lt.s32.totalorder %s368, 63
        %s370 = scalar_select %p369, %s368, 63
        %s371 = smul.addr %s370, 8
        %s372 = scalar_lea.vmem %s9, %s371
        %s373 = smul.u32 32, %s25
        %s374 = smul.u32 32, %s25
        %v376 = vld [vmem:[%s366] sm:$0xff]
        %v377 = vld [vmem:[%s366 + $0x8] sm:$0xff]
        %v378 = vld [vmem:[%s366 + $0x10] sm:$0xff]
        %v379 = vld [vmem:[%s366 + $0x18] sm:$0xff]
        %v380 = vld [vmem:[%s366 + $0x20] sm:$0xff]
        %v381 = vld [vmem:[%s366 + $0x28] sm:$0xff]
        %v382 = vld [vmem:[%s366 + $0x30] sm:$0xff]
        %v383 = vld [vmem:[%s366 + $0x38] sm:$0xff]
        %v384 = vld [vmem:[%s366 + $0x40] sm:$0xff]
        %v385 = vld [vmem:[%s366 + $0x48] sm:$0xff]
        %v386 = vld [vmem:[%s366 + $0x50] sm:$0xff]
        %v387 = vld [vmem:[%s366 + $0x58] sm:$0xff]
        %v388 = vld [vmem:[%s366 + $0x60] sm:$0xff]
        %v389 = vld [vmem:[%s366 + $0x68] sm:$0xff]
        %v390 = vld [vmem:[%s366 + $0x70] sm:$0xff]
        %v391 = vld [vmem:[%s366 + $0x78] sm:$0xff]
        %v392 = vld [vmem:[%s366 + $0x80] sm:$0xff]
        %v393 = vld [vmem:[%s366 + $0x88] sm:$0xff]
        %v394 = vld [vmem:[%s366 + $0x90] sm:$0xff]
        %v395 = vld [vmem:[%s366 + $0x98] sm:$0xff]
        %v396 = vld [vmem:[%s366 + $0xa0] sm:$0xff]
        %v397 = vld [vmem:[%s366 + $0xa8] sm:$0xff]
        %v398 = vld [vmem:[%s366 + $0xb0] sm:$0xff]
        %v399 = vld [vmem:[%s366 + $0xb8] sm:$0xff]
        %v400 = vld [vmem:[%s366 + $0xc0] sm:$0xff]
        %v401 = vld [vmem:[%s366 + $0xc8] sm:$0xff]
        %v402 = vld [vmem:[%s366 + $0xd0] sm:$0xff]
        %v403 = vld [vmem:[%s366 + $0xd8] sm:$0xff]
        %v404 = vld [vmem:[%s366 + $0xe0] sm:$0xff]
        %v405 = vld [vmem:[%s366 + $0xe8] sm:$0xff]
        %v406 = vld [vmem:[%s366 + $0xf0] sm:$0xff]
        %v407 = vld [vmem:[%s366 + $0xf8] sm:$0xff]
        %v408 = vpack.c.bf16 %v377, %v376
        %v409 = vpack.c.bf16 %v379, %v378
        %v410 = vpack.c.bf16 %v381, %v380
        %v411 = vpack.c.bf16 %v383, %v382
        %v412 = vpack.c.bf16 %v385, %v384
        %v413 = vpack.c.bf16 %v387, %v386
        %v414 = vpack.c.bf16 %v389, %v388
        %v415 = vpack.c.bf16 %v391, %v390
        %v416 = vpack.c.bf16 %v393, %v392
        %v417 = vpack.c.bf16 %v395, %v394
        %v418 = vpack.c.bf16 %v397, %v396
        %v419 = vpack.c.bf16 %v399, %v398
        %v420 = vpack.c.bf16 %v401, %v400
        %v421 = vpack.c.bf16 %v403, %v402
        %v422 = vpack.c.bf16 %v405, %v404
        %v423 = vpack.c.bf16 %v407, %v406
        %v424 = vld [vmem:[%s1] sm:$0xf]
        %v425 = vld [vmem:[%s1 + $0x4] sm:$0xf]
        %v426 = vld [vmem:[%s1 + $0x8] sm:$0xf]
        %v427 = vld [vmem:[%s1 + $0xc] sm:$0xf]
        %v428 = vld [vmem:[%s1 + $0x10] sm:$0xf]
        %v429 = vld [vmem:[%s1 + $0x14] sm:$0xf]
        %v430 = vld [vmem:[%s1 + $0x18] sm:$0xf]
        %v431 = vld [vmem:[%s1 + $0x1c] sm:$0xf]
        %v432 = vld [vmem:[%s1 + $0x20] sm:$0xf]
        %v433 = vld [vmem:[%s1 + $0x24] sm:$0xf]
        %v434 = vld [vmem:[%s1 + $0x28] sm:$0xf]
        %v435 = vld [vmem:[%s1 + $0x2c] sm:$0xf]
        %v436 = vld [vmem:[%s1 + $0x30] sm:$0xf]
        %v437 = vld [vmem:[%s1 + $0x34] sm:$0xf]
        %v438 = vld [vmem:[%s1 + $0x38] sm:$0xf]
        %v439 = vld [vmem:[%s1 + $0x3c] sm:$0xf]
        %v440 = vld [vmem:[%s2] sm:$0x1]
        %v442 = vlaneseq
        %v443 = vshrl.u32 %v442, 7
        %v444 = vsub.s32 0, %v443
        %v445 = vrot.slane %v440, %v444
        %v463 = vunpack.c.l.b16 %v424
        %v464 = vunpack.c.l.b16 %v425
        %v465 = vunpack.c.l.b16 %v426
        %v466 = vunpack.c.l.b16 %v427
        %v467 = vunpack.c.l.b16 %v428
        %v468 = vunpack.c.l.b16 %v429
        %v469 = vunpack.c.l.b16 %v430
        %v470 = vunpack.c.l.b16 %v431
        %v471 = vunpack.c.l.b16 %v432
        %v472 = vunpack.c.l.b16 %v433
        %v473 = vunpack.c.l.b16 %v434
        %v474 = vunpack.c.l.b16 %v435
        %v475 = vunpack.c.l.b16 %v436
        %v476 = vunpack.c.l.b16 %v437
        %v477 = vunpack.c.l.b16 %v438
        %v478 = vunpack.c.l.b16 %v439
        %v479 = vpack.c.b16 %v464, %v463
        %v480 = vpack.c.b16 %v466, %v465
        %v481 = vpack.c.b16 %v468, %v467
        %v482 = vpack.c.b16 %v470, %v469
        %v483 = vpack.c.b16 %v472, %v471
        %v484 = vpack.c.b16 %v474, %v473
        %v485 = vpack.c.b16 %v476, %v475
        %v486 = vpack.c.b16 %v478, %v477
        %495 = vmatprep.subr.bf16.mxu0 0
        %496 = vmatpush1.bf16.msra.mxu0 %v486
        %497 = vmatprep.subr.bf16.mxu0 0
        %498 = vmatpush1.bf16.msra.mxu0 %v485
        %499 = vmatprep.subr.bf16.mxu0 0
        %500 = vmatpush1.bf16.msra.mxu0 %v484
        %501 = vmatprep.subr.bf16.mxu0 0
        %502 = vmatpush1.bf16.msra.mxu0 %v483
        %503 = vmatprep.subr.bf16.mxu0 0
        %504 = vmatpush1.bf16.msra.mxu0 %v482
        %505 = vmatprep.subr.bf16.mxu0 0
        %506 = vmatpush1.bf16.msra.mxu0 %v481
        %507 = vmatprep.subr.bf16.mxu0 0
        %508 = vmatpush1.bf16.msra.mxu0 %v480
        %509 = vmatprep.subr.bf16.mxu0 0
        %510 = vmatpush1.bf16.msra.mxu0 %v479
        %511 = vmatprep.subr.bf16.mxu0 0
        %512 = vmatpush2.bf16.msra.mxu0 0
        %513 = vmatprep.subr.bf16.mxu0 0
        %514 = vmatpush2.bf16.msra.mxu0 0
        %515 = vmatprep.subr.bf16.mxu0 0
        %516 = vmatpush2.bf16.msra.mxu0 0
        %517 = vmatprep.subr.bf16.mxu0 0
        %518 = vmatpush2.bf16.msra.mxu0 0
        %519 = vmatprep.subr.bf16.mxu0 0
        %520 = vmatpush2.bf16.msra.mxu0 0
        %521 = vmatprep.subr.bf16.mxu0 0
        %522 = vmatpush2.bf16.msra.mxu0 0
        %523 = vmatprep.subr.bf16.mxu0 0
        %524 = vmatpush2.bf16.msra.mxu0 0
        %525 = vmatprep.subr.bf16.mxu0 0
        %526 = vmatpush2.bf16.msra.mxu0 0
        %527 = vmatprep.mubr.bf16.mxu0 0
        %528 = vmatmul.mubr.bf16.gmra.mxu0 %v408
        %v529 = vpop.f32.mrf.mxu0
        %v530 = vadd.f32 %v445, %v529
        %v531 = vpop.f32.mrf.mxu0
        %v532 = vpop.f32.mrf.mxu0
        %v533 = vadd.f32 %v445, %v532
        %v534 = vpop.f32.mrf.mxu0
        %535 = vmatprep.mubr.bf16.mxu0 0
        %536 = vmatmul.mubr.bf16.gmra.mxu0 %v409
        %v537 = vpop.f32.mrf.mxu0
        %v538 = vadd.f32 %v445, %v537
        %v539 = vpop.f32.mrf.mxu0
        %v540 = vpop.f32.mrf.mxu0
        %v541 = vadd.f32 %v445, %v540
        %v542 = vpop.f32.mrf.mxu0
        %543 = vmatprep.mubr.bf16.mxu0 0
        %544 = vmatmul.mubr.bf16.gmra.mxu0 %v410
        %v545 = vpop.f32.mrf.mxu0
        %v546 = vadd.f32 %v445, %v545
        %v547 = vpop.f32.mrf.mxu0
        %v548 = vpop.f32.mrf.mxu0
        %v549 = vadd.f32 %v445, %v548
        %v550 = vpop.f32.mrf.mxu0
        %551 = vmatprep.mubr.bf16.mxu0 0
        %552 = vmatmul.mubr.bf16.gmra.mxu0 %v411
        %v553 = vpop.f32.mrf.mxu0
        %v554 = vadd.f32 %v445, %v553
        %v555 = vpop.f32.mrf.mxu0
        %v556 = vpop.f32.mrf.mxu0
        %v557 = vadd.f32 %v445, %v556
        %v558 = vpop.f32.mrf.mxu0
        %559 = vmatprep.mubr.bf16.mxu0 0
        %560 = vmatmul.mubr.bf16.gmra.mxu0 %v412
        %v561 = vpop.f32.mrf.mxu0
        %v562 = vadd.f32 %v445, %v561
        %v563 = vpop.f32.mrf.mxu0
        %v564 = vpop.f32.mrf.mxu0
        %v565 = vadd.f32 %v445, %v564
        %v566 = vpop.f32.mrf.mxu0
        %567 = vmatprep.mubr.bf16.mxu0 0
        %568 = vmatmul.mubr.bf16.gmra.mxu0 %v413
        %v569 = vpop.f32.mrf.mxu0
        %v570 = vadd.f32 %v445, %v569
        %v571 = vpop.f32.mrf.mxu0
        %v572 = vpop.f32.mrf.mxu0
        %v573 = vadd.f32 %v445, %v572
        %v574 = vpop.f32.mrf.mxu0
        %575 = vmatprep.mubr.bf16.mxu0 0
        %576 = vmatmul.mubr.bf16.gmra.mxu0 %v414
        %v577 = vpop.f32.mrf.mxu0
        %v578 = vadd.f32 %v445, %v577
        %v579 = vpop.f32.mrf.mxu0
        %v580 = vpop.f32.mrf.mxu0
        %v581 = vadd.f32 %v445, %v580
        %v582 = vpop.f32.mrf.mxu0
        %583 = vmatprep.mubr.bf16.mxu0 0
        %584 = vmatmul.mubr.bf16.gmra.mxu0 %v415
        %v585 = vpop.f32.mrf.mxu0
        %v586 = vadd.f32 %v445, %v585
        %v587 = vpop.f32.mrf.mxu0
        %v588 = vpop.f32.mrf.mxu0
        %v589 = vadd.f32 %v445, %v588
        %v590 = vpop.f32.mrf.mxu0
        %591 = vmatprep.mubr.bf16.mxu0 0
        %592 = vmatmul.mubr.bf16.gmra.mxu0 %v416
        %v593 = vpop.f32.mrf.mxu0
        %v594 = vadd.f32 %v445, %v593
        %v595 = vpop.f32.mrf.mxu0
        %v596 = vpop.f32.mrf.mxu0
        %v597 = vadd.f32 %v445, %v596
        %v598 = vpop.f32.mrf.mxu0
        %599 = vmatprep.mubr.bf16.mxu0 0
        %600 = vmatmul.mubr.bf16.gmra.mxu0 %v417
        %v601 = vpop.f32.mrf.mxu0
        %v602 = vadd.f32 %v445, %v601
        %v603 = vpop.f32.mrf.mxu0
        %v604 = vpop.f32.mrf.mxu0
        %v605 = vadd.f32 %v445, %v604
        %v606 = vpop.f32.mrf.mxu0
        %607 = vmatprep.mubr.bf16.mxu0 0
        %608 = vmatmul.mubr.bf16.gmra.mxu0 %v418
        %v609 = vpop.f32.mrf.mxu0
        %v610 = vadd.f32 %v445, %v609
        %v611 = vpop.f32.mrf.mxu0
        %v612 = vpop.f32.mrf.mxu0
        %v613 = vadd.f32 %v445, %v612
        %v614 = vpop.f32.mrf.mxu0
        %615 = vmatprep.mubr.bf16.mxu0 0
        %616 = vmatmul.mubr.bf16.gmra.mxu0 %v419
        %v617 = vpop.f32.mrf.mxu0
        %v618 = vadd.f32 %v445, %v617
        %v619 = vpop.f32.mrf.mxu0
        %v620 = vpop.f32.mrf.mxu0
        %v621 = vadd.f32 %v445, %v620
        %v622 = vpop.f32.mrf.mxu0
        %623 = vmatprep.mubr.bf16.mxu0 0
        %624 = vmatmul.mubr.bf16.gmra.mxu0 %v420
        %v625 = vpop.f32.mrf.mxu0
        %v626 = vadd.f32 %v445, %v625
        %v627 = vpop.f32.mrf.mxu0
        %v628 = vpop.f32.mrf.mxu0
        %v629 = vadd.f32 %v445, %v628
        %v630 = vpop.f32.mrf.mxu0
        %631 = vmatprep.mubr.bf16.mxu0 0
        %632 = vmatmul.mubr.bf16.gmra.mxu0 %v421
        %v633 = vpop.f32.mrf.mxu0
        %v634 = vadd.f32 %v445, %v633
        %v635 = vpop.f32.mrf.mxu0
        %v636 = vpop.f32.mrf.mxu0
        %v637 = vadd.f32 %v445, %v636
        %v638 = vpop.f32.mrf.mxu0
        %639 = vmatprep.mubr.bf16.mxu0 0
        %640 = vmatmul.mubr.bf16.gmra.mxu0 %v422
        %v641 = vpop.f32.mrf.mxu0
        %v642 = vadd.f32 %v445, %v641
        %v643 = vpop.f32.mrf.mxu0
        %v644 = vpop.f32.mrf.mxu0
        %v645 = vadd.f32 %v445, %v644
        %v646 = vpop.f32.mrf.mxu0
        %647 = vmatprep.mubr.bf16.mxu0 0
        %648 = vmatmul.mubr.bf16.gmra.mxu0 %v423
        %v649 = vpop.f32.mrf.mxu0
        %v650 = vadd.f32 %v445, %v649
        %v651 = vpop.f32.mrf.mxu0
        %v652 = vpop.f32.mrf.mxu0
        %v653 = vadd.f32 %v445, %v652
        %v654 = vpop.f32.mrf.mxu0
        %655 = vdwg.mxu0
        %vm656 = vcmp.gt.f32.partialorder %v530, 0.0
        %vm657 = vcmp.gt.f32.partialorder %v533, 0.0
        %vm658 = vcmp.gt.f32.partialorder %v538, 0.0
        %vm659 = vcmp.gt.f32.partialorder %v541, 0.0
        %vm660 = vcmp.gt.f32.partialorder %v546, 0.0
        %vm661 = vcmp.gt.f32.partialorder %v549, 0.0
        %vm662 = vcmp.gt.f32.partialorder %v554, 0.0
        %vm663 = vcmp.gt.f32.partialorder %v557, 0.0
        %vm664 = vcmp.gt.f32.partialorder %v562, 0.0
        %vm665 = vcmp.gt.f32.partialorder %v565, 0.0
        %vm666 = vcmp.gt.f32.partialorder %v570, 0.0
        %vm667 = vcmp.gt.f32.partialorder %v573, 0.0
        %vm668 = vcmp.gt.f32.partialorder %v578, 0.0
        %vm669 = vcmp.gt.f32.partialorder %v581, 0.0
        %vm670 = vcmp.gt.f32.partialorder %v586, 0.0
        %vm671 = vcmp.gt.f32.partialorder %v589, 0.0
        %vm672 = vcmp.gt.f32.partialorder %v594, 0.0
        %vm673 = vcmp.gt.f32.partialorder %v597, 0.0
        %vm674 = vcmp.gt.f32.partialorder %v602, 0.0
        %vm675 = vcmp.gt.f32.partialorder %v605, 0.0
        %vm676 = vcmp.gt.f32.partialorder %v610, 0.0
        %vm677 = vcmp.gt.f32.partialorder %v613, 0.0
        %vm678 = vcmp.gt.f32.partialorder %v618, 0.0
        %vm679 = vcmp.gt.f32.partialorder %v621, 0.0
        %vm680 = vcmp.gt.f32.partialorder %v626, 0.0
        %vm681 = vcmp.gt.f32.partialorder %v629, 0.0
        %vm682 = vcmp.gt.f32.partialorder %v634, 0.0
        %vm683 = vcmp.gt.f32.partialorder %v637, 0.0
        %vm684 = vcmp.gt.f32.partialorder %v642, 0.0
        %vm685 = vcmp.gt.f32.partialorder %v645, 0.0
        %vm686 = vcmp.gt.f32.partialorder %v650, 0.0
        %vm687 = vcmp.gt.f32.partialorder %v653, 0.0
        %v688 = vmul.f32 %v530, 0.01
        %v689 = vmul.f32 %v533, 0.01
        %v690 = vmul.f32 %v538, 0.01
        %v691 = vmul.f32 %v541, 0.01
        %v692 = vmul.f32 %v546, 0.01
        %v693 = vmul.f32 %v549, 0.01
        %v694 = vmul.f32 %v554, 0.01
        %v695 = vmul.f32 %v557, 0.01
        %v696 = vmul.f32 %v562, 0.01
        %v697 = vmul.f32 %v565, 0.01
        %v698 = vmul.f32 %v570, 0.01
        %v699 = vmul.f32 %v573, 0.01
        %v700 = vmul.f32 %v578, 0.01
        %v701 = vmul.f32 %v581, 0.01
        %v702 = vmul.f32 %v586, 0.01
        %v703 = vmul.f32 %v589, 0.01
        %v704 = vmul.f32 %v594, 0.01
        %v705 = vmul.f32 %v597, 0.01
        %v706 = vmul.f32 %v602, 0.01
        %v707 = vmul.f32 %v605, 0.01
        %v708 = vmul.f32 %v610, 0.01
        %v709 = vmul.f32 %v613, 0.01
        %v710 = vmul.f32 %v618, 0.01
        %v711 = vmul.f32 %v621, 0.01
        %v712 = vmul.f32 %v626, 0.01
        %v713 = vmul.f32 %v629, 0.01
        %v714 = vmul.f32 %v634, 0.01
        %v715 = vmul.f32 %v637, 0.01
        %v716 = vmul.f32 %v642, 0.01
        %v717 = vmul.f32 %v645, 0.01
        %v718 = vmul.f32 %v650, 0.01
        %v719 = vmul.f32 %v653, 0.01
        %v720 = vsel %vm656, %v530, %v688
        %v721 = vsel %vm657, %v533, %v689
        %v722 = vsel %vm658, %v538, %v690
        %v723 = vsel %vm659, %v541, %v691
        %v724 = vsel %vm660, %v546, %v692
        %v725 = vsel %vm661, %v549, %v693
        %v726 = vsel %vm662, %v554, %v694
        %v727 = vsel %vm663, %v557, %v695
        %v728 = vsel %vm664, %v562, %v696
        %v729 = vsel %vm665, %v565, %v697
        %v730 = vsel %vm666, %v570, %v698
        %v731 = vsel %vm667, %v573, %v699
        %v732 = vsel %vm668, %v578, %v700
        %v733 = vsel %vm669, %v581, %v701
        %v734 = vsel %vm670, %v586, %v702
        %v735 = vsel %vm671, %v589, %v703
        %v736 = vsel %vm672, %v594, %v704
        %v737 = vsel %vm673, %v597, %v705
        %v738 = vsel %vm674, %v602, %v706
        %v739 = vsel %vm675, %v605, %v707
        %v740 = vsel %vm676, %v610, %v708
        %v741 = vsel %vm677, %v613, %v709
        %v742 = vsel %vm678, %v618, %v710
        %v743 = vsel %vm679, %v621, %v711
        %v744 = vsel %vm680, %v626, %v712
        %v745 = vsel %vm681, %v629, %v713
        %v746 = vsel %vm682, %v634, %v714
        %v747 = vsel %vm683, %v637, %v715
        %v748 = vsel %vm684, %v642, %v716
        %v749 = vsel %vm685, %v645, %v717
        %v750 = vsel %vm686, %v650, %v718
        %v751 = vsel %vm687, %v653, %v719
        %vm752 = vcmask 261120
        %753 = vst.msk [vmem:[%s372] sm:$0xff] %vm752, %v720
        %754 = vst.msk [vmem:[%s372 + $0x8] sm:$0xff] %vm752, %v721
        %755 = vst.msk [vmem:[%s372 + $0x10] sm:$0xff] %vm752, %v722
        %756 = vst.msk [vmem:[%s372 + $0x18] sm:$0xff] %vm752, %v723
        %757 = vst.msk [vmem:[%s372 + $0x20] sm:$0xff] %vm752, %v724
        %758 = vst.msk [vmem:[%s372 + $0x28] sm:$0xff] %vm752, %v725
        %759 = vst.msk [vmem:[%s372 + $0x30] sm:$0xff] %vm752, %v726
        %760 = vst.msk [vmem:[%s372 + $0x38] sm:$0xff] %vm752, %v727
        %761 = vst.msk [vmem:[%s372 + $0x40] sm:$0xff] %vm752, %v728
        %762 = vst.msk [vmem:[%s372 + $0x48] sm:$0xff] %vm752, %v729
        %763 = vst.msk [vmem:[%s372 + $0x50] sm:$0xff] %vm752, %v730
        %764 = vst.msk [vmem:[%s372 + $0x58] sm:$0xff] %vm752, %v731
        %765 = vst.msk [vmem:[%s372 + $0x60] sm:$0xff] %vm752, %v732
        %766 = vst.msk [vmem:[%s372 + $0x68] sm:$0xff] %vm752, %v733
        %767 = vst.msk [vmem:[%s372 + $0x70] sm:$0xff] %vm752, %v734
        %768 = vst.msk [vmem:[%s372 + $0x78] sm:$0xff] %vm752, %v735
        %769 = vst.msk [vmem:[%s372 + $0x80] sm:$0xff] %vm752, %v736
        %770 = vst.msk [vmem:[%s372 + $0x88] sm:$0xff] %vm752, %v737
        %771 = vst.msk [vmem:[%s372 + $0x90] sm:$0xff] %vm752, %v738
        %772 = vst.msk [vmem:[%s372 + $0x98] sm:$0xff] %vm752, %v739
        %773 = vst.msk [vmem:[%s372 + $0xa0] sm:$0xff] %vm752, %v740
        %774 = vst.msk [vmem:[%s372 + $0xa8] sm:$0xff] %vm752, %v741
        %775 = vst.msk [vmem:[%s372 + $0xb0] sm:$0xff] %vm752, %v742
        %776 = vst.msk [vmem:[%s372 + $0xb8] sm:$0xff] %vm752, %v743
        %777 = vst.msk [vmem:[%s372 + $0xc0] sm:$0xff] %vm752, %v744
        %778 = vst.msk [vmem:[%s372 + $0xc8] sm:$0xff] %vm752, %v745
        %779 = vst.msk [vmem:[%s372 + $0xd0] sm:$0xff] %vm752, %v746
        %780 = vst.msk [vmem:[%s372 + $0xd8] sm:$0xff] %vm752, %v747
        %781 = vst.msk [vmem:[%s372 + $0xe0] sm:$0xff] %vm752, %v748
        %782 = vst.msk [vmem:[%s372 + $0xe8] sm:$0xff] %vm752, %v749
        %783 = vst.msk [vmem:[%s372 + $0xf0] sm:$0xff] %vm752, %v750
        %784 = vst.msk [vmem:[%s372 + $0xf8] sm:$0xff] %vm752, %v751
        %v785 = vpack.c.bf16 %v721, %v720
        %v786 = vpack.c.bf16 %v723, %v722
        %v787 = vpack.c.bf16 %v725, %v724
        %v788 = vpack.c.bf16 %v727, %v726
        %v789 = vpack.c.bf16 %v729, %v728
        %v790 = vpack.c.bf16 %v731, %v730
        %v791 = vpack.c.bf16 %v733, %v732
        %v792 = vpack.c.bf16 %v735, %v734
        %v793 = vpack.c.bf16 %v737, %v736
        %v794 = vpack.c.bf16 %v739, %v738
        %v795 = vpack.c.bf16 %v741, %v740
        %v796 = vpack.c.bf16 %v743, %v742
        %v797 = vpack.c.bf16 %v745, %v744
        %v798 = vpack.c.bf16 %v747, %v746
        %v799 = vpack.c.bf16 %v749, %v748
        %v800 = vpack.c.bf16 %v751, %v750
        %v801 = vld [vmem:[%s3] sm:$0xff]
        %v802 = vld [vmem:[%s3 + $0x8] sm:$0xff]
        %v803 = vld [vmem:[%s3 + $0x10] sm:$0xff]
        %v804 = vld [vmem:[%s3 + $0x18] sm:$0xff]
        %v805 = vld [vmem:[%s4] sm:$0x3]
        %v807 = vlaneseq
        %v808 = vshrl.u32 %v807, 7
        %v809 = vsub.s32 0, %v808
        %v810 = vrot.slane %v805, %v809
        %v811 = vlaneseq
        %v812 = vshrl.u32 %v811, 7
        %v813 = vsub.s32 1, %v812
        %v814 = vrot.slane %v805, %v813
        %v821 = vunpack.c.l.b16 %v801
        %v822 = vunpack.c.h.b16 %v801
        %v823 = vunpack.c.l.b16 %v802
        %v824 = vunpack.c.h.b16 %v802
        %v825 = vunpack.c.l.b16 %v803
        %v826 = vunpack.c.h.b16 %v803
        %v827 = vunpack.c.l.b16 %v804
        %v828 = vunpack.c.h.b16 %v804
        %v829 = vpack.c.b16 %v823, %v821
        %v830 = vpack.c.b16 %v824, %v822
        %v831 = vpack.c.b16 %v827, %v825
        %v832 = vpack.c.b16 %v828, %v826
        %v838 = vsel %vm752, %v785, 0
        %v841 = vsel %vm752, %v786, 0
        %v844 = vsel %vm752, %v787, 0
        %v847 = vsel %vm752, %v788, 0
        %v850 = vsel %vm752, %v789, 0
        %v853 = vsel %vm752, %v790, 0
        %v856 = vsel %vm752, %v791, 0
        %v859 = vsel %vm752, %v792, 0
        %v862 = vsel %vm752, %v793, 0
        %v865 = vsel %vm752, %v794, 0
        %v868 = vsel %vm752, %v795, 0
        %v871 = vsel %vm752, %v796, 0
        %v874 = vsel %vm752, %v797, 0
        %v877 = vsel %vm752, %v798, 0
        %v880 = vsel %vm752, %v799, 0
        %v883 = vsel %vm752, %v800, 0
        %885 = vmatprep.subr.bf16.mxu0 0
        %886 = vmatpush1.bf16.msra.mxu0 0
        %887 = vmatprep.subr.bf16.mxu0 0
        %888 = vmatpush1.bf16.msra.mxu0 0
        %889 = vmatprep.subr.bf16.mxu0 0
        %890 = vmatpush1.bf16.msra.mxu0 0
        %891 = vmatprep.subr.bf16.mxu0 0
        %892 = vmatpush1.bf16.msra.mxu0 0
        %893 = vmatprep.subr.bf16.mxu0 0
        %894 = vmatpush1.bf16.msra.mxu0 0
        %895 = vmatprep.subr.bf16.mxu0 0
        %896 = vmatpush1.bf16.msra.mxu0 0
        %897 = vmatprep.subr.bf16.mxu0 %v832
        %898 = vmatpush1.bf16.msra.mxu0 %v831
        %899 = vmatprep.subr.bf16.mxu0 %v830
        %900 = vmatpush1.bf16.msra.mxu0 %v829
        %901 = vmatprep.subr.bf16.mxu0 0
        %902 = vmatpush2.bf16.msra.mxu0 0
        %903 = vmatprep.subr.bf16.mxu0 0
        %904 = vmatpush2.bf16.msra.mxu0 0
        %905 = vmatprep.subr.bf16.mxu0 0
        %906 = vmatpush2.bf16.msra.mxu0 0
        %907 = vmatprep.subr.bf16.mxu0 0
        %908 = vmatpush2.bf16.msra.mxu0 0
        %909 = vmatprep.subr.bf16.mxu0 0
        %910 = vmatpush2.bf16.msra.mxu0 0
        %911 = vmatprep.subr.bf16.mxu0 0
        %912 = vmatpush2.bf16.msra.mxu0 0
        %913 = vmatprep.subr.bf16.mxu0 0
        %914 = vmatpush2.bf16.msra.mxu0 0
        %915 = vmatprep.subr.bf16.mxu0 0
        %916 = vmatpush2.bf16.msra.mxu0 0
        %917 = vmatprep.mubr.bf16.mxu0 0
        %918 = vmatmul.mubr.bf16.gmra.mxu0 %v838
        %v919 = vpop.f32.mrf.mxu0
        %v920 = vadd.f32 %v810, %v919
        %v921 = vpop.f32.mrf.mxu0
        %v922 = vadd.f32 %v814, %v921
        %v923 = vpop.f32.mrf.mxu0
        %v924 = vadd.f32 %v810, %v923
        %v925 = vpop.f32.mrf.mxu0
        %v926 = vadd.f32 %v814, %v925
        %927 = vmatprep.mubr.bf16.mxu0 0
        %928 = vmatmul.mubr.bf16.gmra.mxu0 %v841
        %v929 = vpop.f32.mrf.mxu0
        %v930 = vadd.f32 %v810, %v929
        %v931 = vpop.f32.mrf.mxu0
        %v932 = vadd.f32 %v814, %v931
        %v933 = vpop.f32.mrf.mxu0
        %v934 = vadd.f32 %v810, %v933
        %v935 = vpop.f32.mrf.mxu0
        %v936 = vadd.f32 %v814, %v935
        %937 = vmatprep.mubr.bf16.mxu0 0
        %938 = vmatmul.mubr.bf16.gmra.mxu0 %v844
        %v939 = vpop.f32.mrf.mxu0
        %v940 = vadd.f32 %v810, %v939
        %v941 = vpop.f32.mrf.mxu0
        %v942 = vadd.f32 %v814, %v941
        %v943 = vpop.f32.mrf.mxu0
        %v944 = vadd.f32 %v810, %v943
        %v945 = vpop.f32.mrf.mxu0
        %v946 = vadd.f32 %v814, %v945
        %947 = vmatprep.mubr.bf16.mxu0 0
        %948 = vmatmul.mubr.bf16.gmra.mxu0 %v847
        %v949 = vpop.f32.mrf.mxu0
        %v950 = vadd.f32 %v810, %v949
        %v951 = vpop.f32.mrf.mxu0
        %v952 = vadd.f32 %v814, %v951
        %v953 = vpop.f32.mrf.mxu0
        %v954 = vadd.f32 %v810, %v953
        %v955 = vpop.f32.mrf.mxu0
        %v956 = vadd.f32 %v814, %v955
        %957 = vmatprep.mubr.bf16.mxu0 0
        %958 = vmatmul.mubr.bf16.gmra.mxu0 %v850
        %v959 = vpop.f32.mrf.mxu0
        %v960 = vadd.f32 %v810, %v959
        %v961 = vpop.f32.mrf.mxu0
        %v962 = vadd.f32 %v814, %v961
        %v963 = vpop.f32.mrf.mxu0
        %v964 = vadd.f32 %v810, %v963
        %v965 = vpop.f32.mrf.mxu0
        %v966 = vadd.f32 %v814, %v965
        %967 = vmatprep.mubr.bf16.mxu0 0
        %968 = vmatmul.mubr.bf16.gmra.mxu0 %v853
        %v969 = vpop.f32.mrf.mxu0
        %v970 = vadd.f32 %v810, %v969
        %v971 = vpop.f32.mrf.mxu0
        %v972 = vadd.f32 %v814, %v971
        %v973 = vpop.f32.mrf.mxu0
        %v974 = vadd.f32 %v810, %v973
        %v975 = vpop.f32.mrf.mxu0
        %v976 = vadd.f32 %v814, %v975
        %977 = vmatprep.mubr.bf16.mxu0 0
        %978 = vmatmul.mubr.bf16.gmra.mxu0 %v856
        %v979 = vpop.f32.mrf.mxu0
        %v980 = vadd.f32 %v810, %v979
        %v981 = vpop.f32.mrf.mxu0
        %v982 = vadd.f32 %v814, %v981
        %v983 = vpop.f32.mrf.mxu0
        %v984 = vadd.f32 %v810, %v983
        %v985 = vpop.f32.mrf.mxu0
        %v986 = vadd.f32 %v814, %v985
        %987 = vmatprep.mubr.bf16.mxu0 0
        %988 = vmatmul.mubr.bf16.gmra.mxu0 %v859
        %v989 = vpop.f32.mrf.mxu0
        %v990 = vadd.f32 %v810, %v989
        %v991 = vpop.f32.mrf.mxu0
        %v992 = vadd.f32 %v814, %v991
        %v993 = vpop.f32.mrf.mxu0
        %v994 = vadd.f32 %v810, %v993
        %v995 = vpop.f32.mrf.mxu0
        %v996 = vadd.f32 %v814, %v995
        %997 = vmatprep.mubr.bf16.mxu0 0
        %998 = vmatmul.mubr.bf16.gmra.mxu0 %v862
        %v999 = vpop.f32.mrf.mxu0
        %v1000 = vadd.f32 %v810, %v999
        %v1001 = vpop.f32.mrf.mxu0
        %v1002 = vadd.f32 %v814, %v1001
        %v1003 = vpop.f32.mrf.mxu0
        %v1004 = vadd.f32 %v810, %v1003
        %v1005 = vpop.f32.mrf.mxu0
        %v1006 = vadd.f32 %v814, %v1005
        %1007 = vmatprep.mubr.bf16.mxu0 0
        %1008 = vmatmul.mubr.bf16.gmra.mxu0 %v865
        %v1009 = vpop.f32.mrf.mxu0
        %v1010 = vadd.f32 %v810, %v1009
        %v1011 = vpop.f32.mrf.mxu0
        %v1012 = vadd.f32 %v814, %v1011
        %v1013 = vpop.f32.mrf.mxu0
        %v1014 = vadd.f32 %v810, %v1013
        %v1015 = vpop.f32.mrf.mxu0
        %v1016 = vadd.f32 %v814, %v1015
        %1017 = vmatprep.mubr.bf16.mxu0 0
        %1018 = vmatmul.mubr.bf16.gmra.mxu0 %v868
        %v1019 = vpop.f32.mrf.mxu0
        %v1020 = vadd.f32 %v810, %v1019
        %v1021 = vpop.f32.mrf.mxu0
        %v1022 = vadd.f32 %v814, %v1021
        %v1023 = vpop.f32.mrf.mxu0
        %v1024 = vadd.f32 %v810, %v1023
        %v1025 = vpop.f32.mrf.mxu0
        %v1026 = vadd.f32 %v814, %v1025
        %1027 = vmatprep.mubr.bf16.mxu0 0
        %1028 = vmatmul.mubr.bf16.gmra.mxu0 %v871
        %v1029 = vpop.f32.mrf.mxu0
        %v1030 = vadd.f32 %v810, %v1029
        %v1031 = vpop.f32.mrf.mxu0
        %v1032 = vadd.f32 %v814, %v1031
        %v1033 = vpop.f32.mrf.mxu0
        %v1034 = vadd.f32 %v810, %v1033
        %v1035 = vpop.f32.mrf.mxu0
        %v1036 = vadd.f32 %v814, %v1035
        %1037 = vmatprep.mubr.bf16.mxu0 0
        %1038 = vmatmul.mubr.bf16.gmra.mxu0 %v874
        %v1039 = vpop.f32.mrf.mxu0
        %v1040 = vadd.f32 %v810, %v1039
        %v1041 = vpop.f32.mrf.mxu0
        %v1042 = vadd.f32 %v814, %v1041
        %v1043 = vpop.f32.mrf.mxu0
        %v1044 = vadd.f32 %v810, %v1043
        %v1045 = vpop.f32.mrf.mxu0
        %v1046 = vadd.f32 %v814, %v1045
        %1047 = vmatprep.mubr.bf16.mxu0 0
        %1048 = vmatmul.mubr.bf16.gmra.mxu0 %v877
        %v1049 = vpop.f32.mrf.mxu0
        %v1050 = vadd.f32 %v810, %v1049
        %v1051 = vpop.f32.mrf.mxu0
        %v1052 = vadd.f32 %v814, %v1051
        %v1053 = vpop.f32.mrf.mxu0
        %v1054 = vadd.f32 %v810, %v1053
        %v1055 = vpop.f32.mrf.mxu0
        %v1056 = vadd.f32 %v814, %v1055
        %1057 = vmatprep.mubr.bf16.mxu0 0
        %1058 = vmatmul.mubr.bf16.gmra.mxu0 %v880
        %v1059 = vpop.f32.mrf.mxu0
        %v1060 = vadd.f32 %v810, %v1059
        %v1061 = vpop.f32.mrf.mxu0
        %v1062 = vadd.f32 %v814, %v1061
        %v1063 = vpop.f32.mrf.mxu0
        %v1064 = vadd.f32 %v810, %v1063
        %v1065 = vpop.f32.mrf.mxu0
        %v1066 = vadd.f32 %v814, %v1065
        %1067 = vmatprep.mubr.bf16.mxu0 0
        %1068 = vmatmul.mubr.bf16.gmra.mxu0 %v883
        %v1069 = vpop.f32.mrf.mxu0
        %v1070 = vadd.f32 %v810, %v1069
        %v1071 = vpop.f32.mrf.mxu0
        %v1072 = vadd.f32 %v814, %v1071
        %v1073 = vpop.f32.mrf.mxu0
        %v1074 = vadd.f32 %v810, %v1073
        %v1075 = vpop.f32.mrf.mxu0
        %v1076 = vadd.f32 %v814, %v1075
        %1077 = vdwg.mxu0
        %vm1078 = vcmp.gt.f32.partialorder %v920, 0.0
        %vm1079 = vcmp.gt.f32.partialorder %v922, 0.0
        %vm1080 = vcmp.gt.f32.partialorder %v924, 0.0
        %vm1081 = vcmp.gt.f32.partialorder %v926, 0.0
        %vm1082 = vcmp.gt.f32.partialorder %v930, 0.0
        %vm1083 = vcmp.gt.f32.partialorder %v932, 0.0
        %vm1084 = vcmp.gt.f32.partialorder %v934, 0.0
        %vm1085 = vcmp.gt.f32.partialorder %v936, 0.0
        %vm1086 = vcmp.gt.f32.partialorder %v940, 0.0
        %vm1087 = vcmp.gt.f32.partialorder %v942, 0.0
        %vm1088 = vcmp.gt.f32.partialorder %v944, 0.0
        %vm1089 = vcmp.gt.f32.partialorder %v946, 0.0
        %vm1090 = vcmp.gt.f32.partialorder %v950, 0.0
        %vm1091 = vcmp.gt.f32.partialorder %v952, 0.0
        %vm1092 = vcmp.gt.f32.partialorder %v954, 0.0
        %vm1093 = vcmp.gt.f32.partialorder %v956, 0.0
        %vm1094 = vcmp.gt.f32.partialorder %v960, 0.0
        %vm1095 = vcmp.gt.f32.partialorder %v962, 0.0
        %vm1096 = vcmp.gt.f32.partialorder %v964, 0.0
        %vm1097 = vcmp.gt.f32.partialorder %v966, 0.0
        %vm1098 = vcmp.gt.f32.partialorder %v970, 0.0
        %vm1099 = vcmp.gt.f32.partialorder %v972, 0.0
        %vm1100 = vcmp.gt.f32.partialorder %v974, 0.0
        %vm1101 = vcmp.gt.f32.partialorder %v976, 0.0
        %vm1102 = vcmp.gt.f32.partialorder %v980, 0.0
        %vm1103 = vcmp.gt.f32.partialorder %v982, 0.0
        %vm1104 = vcmp.gt.f32.partialorder %v984, 0.0
        %vm1105 = vcmp.gt.f32.partialorder %v986, 0.0
        %vm1106 = vcmp.gt.f32.partialorder %v990, 0.0
        %vm1107 = vcmp.gt.f32.partialorder %v992, 0.0
        %vm1108 = vcmp.gt.f32.partialorder %v994, 0.0
        %vm1109 = vcmp.gt.f32.partialorder %v996, 0.0
        %vm1110 = vcmp.gt.f32.partialorder %v1000, 0.0
        %vm1111 = vcmp.gt.f32.partialorder %v1002, 0.0
        %vm1112 = vcmp.gt.f32.partialorder %v1004, 0.0
        %vm1113 = vcmp.gt.f32.partialorder %v1006, 0.0
        %vm1114 = vcmp.gt.f32.partialorder %v1010, 0.0
        %vm1115 = vcmp.gt.f32.partialorder %v1012, 0.0
        %vm1116 = vcmp.gt.f32.partialorder %v1014, 0.0
        %vm1117 = vcmp.gt.f32.partialorder %v1016, 0.0
        %vm1118 = vcmp.gt.f32.partialorder %v1020, 0.0
        %vm1119 = vcmp.gt.f32.partialorder %v1022, 0.0
        %vm1120 = vcmp.gt.f32.partialorder %v1024, 0.0
        %vm1121 = vcmp.gt.f32.partialorder %v1026, 0.0
        %vm1122 = vcmp.gt.f32.partialorder %v1030, 0.0
        %vm1123 = vcmp.gt.f32.partialorder %v1032, 0.0
        %vm1124 = vcmp.gt.f32.partialorder %v1034, 0.0
        %vm1125 = vcmp.gt.f32.partialorder %v1036, 0.0
        %vm1126 = vcmp.gt.f32.partialorder %v1040, 0.0
        %vm1127 = vcmp.gt.f32.partialorder %v1042, 0.0
        %vm1128 = vcmp.gt.f32.partialorder %v1044, 0.0
        %vm1129 = vcmp.gt.f32.partialorder %v1046, 0.0
        %vm1130 = vcmp.gt.f32.partialorder %v1050, 0.0
        %vm1131 = vcmp.gt.f32.partialorder %v1052, 0.0
        %vm1132 = vcmp.gt.f32.partialorder %v1054, 0.0
        %vm1133 = vcmp.gt.f32.partialorder %v1056, 0.0
        %vm1134 = vcmp.gt.f32.partialorder %v1060, 0.0
        %vm1135 = vcmp.gt.f32.partialorder %v1062, 0.0
        %vm1136 = vcmp.gt.f32.partialorder %v1064, 0.0
        %vm1137 = vcmp.gt.f32.partialorder %v1066, 0.0
        %vm1138 = vcmp.gt.f32.partialorder %v1070, 0.0
        %vm1139 = vcmp.gt.f32.partialorder %v1072, 0.0
        %vm1140 = vcmp.gt.f32.partialorder %v1074, 0.0
        %vm1141 = vcmp.gt.f32.partialorder %v1076, 0.0
        %v1142 = vmul.f32 %v920, 0.01
        %v1143 = vmul.f32 %v922, 0.01
        %v1144 = vmul.f32 %v924, 0.01
        %v1145 = vmul.f32 %v926, 0.01
        %v1146 = vmul.f32 %v930, 0.01
        %v1147 = vmul.f32 %v932, 0.01
        %v1148 = vmul.f32 %v934, 0.01
        %v1149 = vmul.f32 %v936, 0.01
        %v1150 = vmul.f32 %v940, 0.01
        %v1151 = vmul.f32 %v942, 0.01
        %v1152 = vmul.f32 %v944, 0.01
        %v1153 = vmul.f32 %v946, 0.01
        %v1154 = vmul.f32 %v950, 0.01
        %v1155 = vmul.f32 %v952, 0.01
        %v1156 = vmul.f32 %v954, 0.01
        %v1157 = vmul.f32 %v956, 0.01
        %v1158 = vmul.f32 %v960, 0.01
        %v1159 = vmul.f32 %v962, 0.01
        %v1160 = vmul.f32 %v964, 0.01
        %v1161 = vmul.f32 %v966, 0.01
        %v1162 = vmul.f32 %v970, 0.01
        %v1163 = vmul.f32 %v972, 0.01
        %v1164 = vmul.f32 %v974, 0.01
        %v1165 = vmul.f32 %v976, 0.01
        %v1166 = vmul.f32 %v980, 0.01
        %v1167 = vmul.f32 %v982, 0.01
        %v1168 = vmul.f32 %v984, 0.01
        %v1169 = vmul.f32 %v986, 0.01
        %v1170 = vmul.f32 %v990, 0.01
        %v1171 = vmul.f32 %v992, 0.01
        %v1172 = vmul.f32 %v994, 0.01
        %v1173 = vmul.f32 %v996, 0.01
        %v1174 = vmul.f32 %v1000, 0.01
        %v1175 = vmul.f32 %v1002, 0.01
        %v1176 = vmul.f32 %v1004, 0.01
        %v1177 = vmul.f32 %v1006, 0.01
        %v1178 = vmul.f32 %v1010, 0.01
        %v1179 = vmul.f32 %v1012, 0.01
        %v1180 = vmul.f32 %v1014, 0.01
        %v1181 = vmul.f32 %v1016, 0.01
        %v1182 = vmul.f32 %v1020, 0.01
        %v1183 = vmul.f32 %v1022, 0.01
        %v1184 = vmul.f32 %v1024, 0.01
        %v1185 = vmul.f32 %v1026, 0.01
        %v1186 = vmul.f32 %v1030, 0.01
        %v1187 = vmul.f32 %v1032, 0.01
        %v1188 = vmul.f32 %v1034, 0.01
        %v1189 = vmul.f32 %v1036, 0.01
        %v1190 = vmul.f32 %v1040, 0.01
        %v1191 = vmul.f32 %v1042, 0.01
        %v1192 = vmul.f32 %v1044, 0.01
        %v1193 = vmul.f32 %v1046, 0.01
        %v1194 = vmul.f32 %v1050, 0.01
        %v1195 = vmul.f32 %v1052, 0.01
        %v1196 = vmul.f32 %v1054, 0.01
        %v1197 = vmul.f32 %v1056, 0.01
        %v1198 = vmul.f32 %v1060, 0.01
        %v1199 = vmul.f32 %v1062, 0.01
        %v1200 = vmul.f32 %v1064, 0.01
        %v1201 = vmul.f32 %v1066, 0.01
        %v1202 = vmul.f32 %v1070, 0.01
        %v1203 = vmul.f32 %v1072, 0.01
        %v1204 = vmul.f32 %v1074, 0.01
        %v1205 = vmul.f32 %v1076, 0.01
        %v1206 = vsel %vm1078, %v920, %v1142
        %v1207 = vsel %vm1079, %v922, %v1143
        %v1208 = vsel %vm1080, %v924, %v1144
        %v1209 = vsel %vm1081, %v926, %v1145
        %v1210 = vsel %vm1082, %v930, %v1146
        %v1211 = vsel %vm1083, %v932, %v1147
        %v1212 = vsel %vm1084, %v934, %v1148
        %v1213 = vsel %vm1085, %v936, %v1149
        %v1214 = vsel %vm1086, %v940, %v1150
        %v1215 = vsel %vm1087, %v942, %v1151
        %v1216 = vsel %vm1088, %v944, %v1152
        %v1217 = vsel %vm1089, %v946, %v1153
        %v1218 = vsel %vm1090, %v950, %v1154
        %v1219 = vsel %vm1091, %v952, %v1155
        %v1220 = vsel %vm1092, %v954, %v1156
        %v1221 = vsel %vm1093, %v956, %v1157
        %v1222 = vsel %vm1094, %v960, %v1158
        %v1223 = vsel %vm1095, %v962, %v1159
        %v1224 = vsel %vm1096, %v964, %v1160
        %v1225 = vsel %vm1097, %v966, %v1161
        %v1226 = vsel %vm1098, %v970, %v1162
        %v1227 = vsel %vm1099, %v972, %v1163
        %v1228 = vsel %vm1100, %v974, %v1164
        %v1229 = vsel %vm1101, %v976, %v1165
        %v1230 = vsel %vm1102, %v980, %v1166
        %v1231 = vsel %vm1103, %v982, %v1167
        %v1232 = vsel %vm1104, %v984, %v1168
        %v1233 = vsel %vm1105, %v986, %v1169
        %v1234 = vsel %vm1106, %v990, %v1170
        %v1235 = vsel %vm1107, %v992, %v1171
        %v1236 = vsel %vm1108, %v994, %v1172
        %v1237 = vsel %vm1109, %v996, %v1173
        %v1238 = vsel %vm1110, %v1000, %v1174
        %v1239 = vsel %vm1111, %v1002, %v1175
        %v1240 = vsel %vm1112, %v1004, %v1176
        %v1241 = vsel %vm1113, %v1006, %v1177
        %v1242 = vsel %vm1114, %v1010, %v1178
        %v1243 = vsel %vm1115, %v1012, %v1179
        %v1244 = vsel %vm1116, %v1014, %v1180
        %v1245 = vsel %vm1117, %v1016, %v1181
        %v1246 = vsel %vm1118, %v1020, %v1182
        %v1247 = vsel %vm1119, %v1022, %v1183
        %v1248 = vsel %vm1120, %v1024, %v1184
        %v1249 = vsel %vm1121, %v1026, %v1185
        %v1250 = vsel %vm1122, %v1030, %v1186
        %v1251 = vsel %vm1123, %v1032, %v1187
        %v1252 = vsel %vm1124, %v1034, %v1188
        %v1253 = vsel %vm1125, %v1036, %v1189
        %v1254 = vsel %vm1126, %v1040, %v1190
        %v1255 = vsel %vm1127, %v1042, %v1191
        %v1256 = vsel %vm1128, %v1044, %v1192
        %v1257 = vsel %vm1129, %v1046, %v1193
        %v1258 = vsel %vm1130, %v1050, %v1194
        %v1259 = vsel %vm1131, %v1052, %v1195
        %v1260 = vsel %vm1132, %v1054, %v1196
        %v1261 = vsel %vm1133, %v1056, %v1197
        %v1262 = vsel %vm1134, %v1060, %v1198
        %v1263 = vsel %vm1135, %v1062, %v1199
        %v1264 = vsel %vm1136, %v1064, %v1200
        %v1265 = vsel %vm1137, %v1066, %v1201
        %v1266 = vsel %vm1138, %v1070, %v1202
        %v1267 = vsel %vm1139, %v1072, %v1203
        %v1268 = vsel %vm1140, %v1074, %v1204
        %v1269 = vsel %vm1141, %v1076, %v1205
        %v1270 = vpack.c.bf16 %v1208, %v1206
        %v1271 = vpack.c.bf16 %v1209, %v1207
        %v1272 = vpack.c.bf16 %v1212, %v1210
        %v1273 = vpack.c.bf16 %v1213, %v1211
        %v1274 = vpack.c.bf16 %v1216, %v1214
        %v1275 = vpack.c.bf16 %v1217, %v1215
        %v1276 = vpack.c.bf16 %v1220, %v1218
        %v1277 = vpack.c.bf16 %v1221, %v1219
        %v1278 = vpack.c.bf16 %v1224, %v1222
        %v1279 = vpack.c.bf16 %v1225, %v1223
        %v1280 = vpack.c.bf16 %v1228, %v1226
        %v1281 = vpack.c.bf16 %v1229, %v1227
        %v1282 = vpack.c.bf16 %v1232, %v1230
        %v1283 = vpack.c.bf16 %v1233, %v1231
        %v1284 = vpack.c.bf16 %v1236, %v1234
        %v1285 = vpack.c.bf16 %v1237, %v1235
        %v1286 = vpack.c.bf16 %v1240, %v1238
        %v1287 = vpack.c.bf16 %v1241, %v1239
        %v1288 = vpack.c.bf16 %v1244, %v1242
        %v1289 = vpack.c.bf16 %v1245, %v1243
        %v1290 = vpack.c.bf16 %v1248, %v1246
        %v1291 = vpack.c.bf16 %v1249, %v1247
        %v1292 = vpack.c.bf16 %v1252, %v1250
        %v1293 = vpack.c.bf16 %v1253, %v1251
        %v1294 = vpack.c.bf16 %v1256, %v1254
        %v1295 = vpack.c.bf16 %v1257, %v1255
        %v1296 = vpack.c.bf16 %v1260, %v1258
        %v1297 = vpack.c.bf16 %v1261, %v1259
        %v1298 = vpack.c.bf16 %v1264, %v1262
        %v1299 = vpack.c.bf16 %v1265, %v1263
        %v1300 = vpack.c.bf16 %v1268, %v1266
        %v1301 = vpack.c.bf16 %v1269, %v1267
        %v1302 = vld [vmem:[%s5] sm:$0xff]
        %v1303 = vld [vmem:[%s5 + $0x8] sm:$0xff]
        %v1304 = vld [vmem:[%s5 + $0x10] sm:$0xff]
        %v1305 = vld [vmem:[%s5 + $0x18] sm:$0xff]
        %v1306 = vld [vmem:[%s5 + $0x20] sm:$0xff]
        %v1307 = vld [vmem:[%s5 + $0x28] sm:$0xff]
        %v1308 = vld [vmem:[%s5 + $0x30] sm:$0xff]
        %v1309 = vld [vmem:[%s5 + $0x38] sm:$0xff]
        %v1310 = vld [vmem:[%s5 + $0x40] sm:$0xff]
        %v1311 = vld [vmem:[%s5 + $0x48] sm:$0xff]
        %v1312 = vld [vmem:[%s5 + $0x50] sm:$0xff]
        %v1313 = vld [vmem:[%s5 + $0x58] sm:$0xff]
        %v1314 = vld [vmem:[%s5 + $0x60] sm:$0xff]
        %v1315 = vld [vmem:[%s5 + $0x68] sm:$0xff]
        %v1316 = vld [vmem:[%s5 + $0x70] sm:$0xff]
        %v1317 = vld [vmem:[%s5 + $0x78] sm:$0xff]
        %v1318 = vld [vmem:[%s5 + $0x80] sm:$0xff]
        %v1319 = vld [vmem:[%s5 + $0x88] sm:$0xff]
        %v1320 = vld [vmem:[%s5 + $0x90] sm:$0xff]
        %v1321 = vld [vmem:[%s5 + $0x98] sm:$0xff]
        %v1322 = vld [vmem:[%s5 + $0xa0] sm:$0xff]
        %v1323 = vld [vmem:[%s5 + $0xa8] sm:$0xff]
        %v1324 = vld [vmem:[%s5 + $0xb0] sm:$0xff]
        %v1325 = vld [vmem:[%s5 + $0xb8] sm:$0xff]
        %v1326 = vld [vmem:[%s5 + $0xc0] sm:$0xff]
        %v1327 = vld [vmem:[%s5 + $0xc8] sm:$0xff]
        %v1328 = vld [vmem:[%s5 + $0xd0] sm:$0xff]
        %v1329 = vld [vmem:[%s5 + $0xd8] sm:$0xff]
        %v1330 = vld [vmem:[%s5 + $0xe0] sm:$0xff]
        %v1331 = vld [vmem:[%s5 + $0xe8] sm:$0xff]
        %v1332 = vld [vmem:[%s5 + $0xf0] sm:$0xff]
        %v1333 = vld [vmem:[%s5 + $0xf8] sm:$0xff]
        %v1334 = vld [vmem:[%s5 + $0x100] sm:$0xff]
        %v1335 = vld [vmem:[%s5 + $0x108] sm:$0xff]
        %v1336 = vld [vmem:[%s5 + $0x110] sm:$0xff]
        %v1337 = vld [vmem:[%s5 + $0x118] sm:$0xff]
        %v1338 = vld [vmem:[%s5 + $0x120] sm:$0xff]
        %v1339 = vld [vmem:[%s5 + $0x128] sm:$0xff]
        %v1340 = vld [vmem:[%s5 + $0x130] sm:$0xff]
        %v1341 = vld [vmem:[%s5 + $0x138] sm:$0xff]
        %v1342 = vld [vmem:[%s5 + $0x140] sm:$0xff]
        %v1343 = vld [vmem:[%s5 + $0x148] sm:$0xff]
        %v1344 = vld [vmem:[%s5 + $0x150] sm:$0xff]
        %v1345 = vld [vmem:[%s5 + $0x158] sm:$0xff]
        %v1346 = vld [vmem:[%s5 + $0x160] sm:$0xff]
        %v1347 = vld [vmem:[%s5 + $0x168] sm:$0xff]
        %v1348 = vld [vmem:[%s5 + $0x170] sm:$0xff]
        %v1349 = vld [vmem:[%s5 + $0x178] sm:$0xff]
        %v1350 = vld [vmem:[%s5 + $0x180] sm:$0xff]
        %v1351 = vld [vmem:[%s5 + $0x188] sm:$0xff]
        %v1352 = vld [vmem:[%s5 + $0x190] sm:$0xff]
        %v1353 = vld [vmem:[%s5 + $0x198] sm:$0xff]
        %v1354 = vld [vmem:[%s5 + $0x1a0] sm:$0xff]
        %v1355 = vld [vmem:[%s5 + $0x1a8] sm:$0xff]
        %v1356 = vld [vmem:[%s5 + $0x1b0] sm:$0xff]
        %v1357 = vld [vmem:[%s5 + $0x1b8] sm:$0xff]
        %v1358 = vld [vmem:[%s5 + $0x1c0] sm:$0xff]
        %v1359 = vld [vmem:[%s5 + $0x1c8] sm:$0xff]
        %v1360 = vld [vmem:[%s5 + $0x1d0] sm:$0xff]
        %v1361 = vld [vmem:[%s5 + $0x1d8] sm:$0xff]
        %v1362 = vld [vmem:[%s5 + $0x1e0] sm:$0xff]
        %v1363 = vld [vmem:[%s5 + $0x1e8] sm:$0xff]
        %v1364 = vld [vmem:[%s5 + $0x1f0] sm:$0xff]
        %v1365 = vld [vmem:[%s5 + $0x1f8] sm:$0xff]
        %v1366 = vld [vmem:[%s6] sm:$0xf]
        %v1368 = vlaneseq
        %v1369 = vshrl.u32 %v1368, 7
        %v1370 = vsub.s32 0, %v1369
        %v1371 = vrot.slane %v1366, %v1370
        %v1372 = vlaneseq
        %v1373 = vshrl.u32 %v1372, 7
        %v1374 = vsub.s32 1, %v1373
        %v1375 = vrot.slane %v1366, %v1374
        %v1376 = vlaneseq
        %v1377 = vshrl.u32 %v1376, 7
        %v1378 = vsub.s32 2, %v1377
        %v1379 = vrot.slane %v1366, %v1378
        %v1380 = vlaneseq
        %v1381 = vshrl.u32 %v1380, 7
        %v1382 = vsub.s32 3, %v1381
        %v1383 = vrot.slane %v1366, %v1382
        %v1452 = vunpack.c.l.b16 %v1302
        %v1453 = vunpack.c.h.b16 %v1302
        %v1454 = vunpack.c.l.b16 %v1303
        %v1455 = vunpack.c.h.b16 %v1303
        %v1456 = vunpack.c.l.b16 %v1304
        %v1457 = vunpack.c.h.b16 %v1304
        %v1458 = vunpack.c.l.b16 %v1305
        %v1459 = vunpack.c.h.b16 %v1305
        %v1460 = vunpack.c.l.b16 %v1306
        %v1461 = vunpack.c.h.b16 %v1306
        %v1462 = vunpack.c.l.b16 %v1307
        %v1463 = vunpack.c.h.b16 %v1307
        %v1464 = vunpack.c.l.b16 %v1308
        %v1465 = vunpack.c.h.b16 %v1308
        %v1466 = vunpack.c.l.b16 %v1309
        %v1467 = vunpack.c.h.b16 %v1309
        %v1468 = vunpack.c.l.b16 %v1310
        %v1469 = vunpack.c.h.b16 %v1310
        %v1470 = vunpack.c.l.b16 %v1311
        %v1471 = vunpack.c.h.b16 %v1311
        %v1472 = vunpack.c.l.b16 %v1312
        %v1473 = vunpack.c.h.b16 %v1312
        %v1474 = vunpack.c.l.b16 %v1313
        %v1475 = vunpack.c.h.b16 %v1313
        %v1476 = vunpack.c.l.b16 %v1314
        %v1477 = vunpack.c.h.b16 %v1314
        %v1478 = vunpack.c.l.b16 %v1315
        %v1479 = vunpack.c.h.b16 %v1315
        %v1480 = vunpack.c.l.b16 %v1316
        %v1481 = vunpack.c.h.b16 %v1316
        %v1482 = vunpack.c.l.b16 %v1317
        %v1483 = vunpack.c.h.b16 %v1317
        %v1484 = vunpack.c.l.b16 %v1318
        %v1485 = vunpack.c.h.b16 %v1318
        %v1486 = vunpack.c.l.b16 %v1319
        %v1487 = vunpack.c.h.b16 %v1319
        %v1488 = vunpack.c.l.b16 %v1320
        %v1489 = vunpack.c.h.b16 %v1320
        %v1490 = vunpack.c.l.b16 %v1321
        %v1491 = vunpack.c.h.b16 %v1321
        %v1492 = vunpack.c.l.b16 %v1322
        %v1493 = vunpack.c.h.b16 %v1322
        %v1494 = vunpack.c.l.b16 %v1323
        %v1495 = vunpack.c.h.b16 %v1323
        %v1496 = vunpack.c.l.b16 %v1324
        %v1497 = vunpack.c.h.b16 %v1324
        %v1498 = vunpack.c.l.b16 %v1325
        %v1499 = vunpack.c.h.b16 %v1325
        %v1500 = vunpack.c.l.b16 %v1326
        %v1501 = vunpack.c.h.b16 %v1326
        %v1502 = vunpack.c.l.b16 %v1327
        %v1503 = vunpack.c.h.b16 %v1327
        %v1504 = vunpack.c.l.b16 %v1328
        %v1505 = vunpack.c.h.b16 %v1328
        %v1506 = vunpack.c.l.b16 %v1329
        %v1507 = vunpack.c.h.b16 %v1329
        %v1508 = vunpack.c.l.b16 %v1330
        %v1509 = vunpack.c.h.b16 %v1330
        %v1510 = vunpack.c.l.b16 %v1331
        %v1511 = vunpack.c.h.b16 %v1331
        %v1512 = vunpack.c.l.b16 %v1332
        %v1513 = vunpack.c.h.b16 %v1332
        %v1514 = vunpack.c.l.b16 %v1333
        %v1515 = vunpack.c.h.b16 %v1333
        %v1516 = vunpack.c.l.b16 %v1334
        %v1517 = vunpack.c.h.b16 %v1334
        %v1518 = vunpack.c.l.b16 %v1335
        %v1519 = vunpack.c.h.b16 %v1335
        %v1520 = vunpack.c.l.b16 %v1336
        %v1521 = vunpack.c.h.b16 %v1336
        %v1522 = vunpack.c.l.b16 %v1337
        %v1523 = vunpack.c.h.b16 %v1337
        %v1524 = vunpack.c.l.b16 %v1338
        %v1525 = vunpack.c.h.b16 %v1338
        %v1526 = vunpack.c.l.b16 %v1339
        %v1527 = vunpack.c.h.b16 %v1339
        %v1528 = vunpack.c.l.b16 %v1340
        %v1529 = vunpack.c.h.b16 %v1340
        %v1530 = vunpack.c.l.b16 %v1341
        %v1531 = vunpack.c.h.b16 %v1341
        %v1532 = vunpack.c.l.b16 %v1342
        %v1533 = vunpack.c.h.b16 %v1342
        %v1534 = vunpack.c.l.b16 %v1343
        %v1535 = vunpack.c.h.b16 %v1343
        %v1536 = vunpack.c.l.b16 %v1344
        %v1537 = vunpack.c.h.b16 %v1344
        %v1538 = vunpack.c.l.b16 %v1345
        %v1539 = vunpack.c.h.b16 %v1345
        %v1540 = vunpack.c.l.b16 %v1346
        %v1541 = vunpack.c.h.b16 %v1346
        %v1542 = vunpack.c.l.b16 %v1347
        %v1543 = vunpack.c.h.b16 %v1347
        %v1544 = vunpack.c.l.b16 %v1348
        %v1545 = vunpack.c.h.b16 %v1348
        %v1546 = vunpack.c.l.b16 %v1349
        %v1547 = vunpack.c.h.b16 %v1349
        %v1548 = vunpack.c.l.b16 %v1350
        %v1549 = vunpack.c.h.b16 %v1350
        %v1550 = vunpack.c.l.b16 %v1351
        %v1551 = vunpack.c.h.b16 %v1351
        %v1552 = vunpack.c.l.b16 %v1352
        %v1553 = vunpack.c.h.b16 %v1352
        %v1554 = vunpack.c.l.b16 %v1353
        %v1555 = vunpack.c.h.b16 %v1353
        %v1556 = vunpack.c.l.b16 %v1354
        %v1557 = vunpack.c.h.b16 %v1354
        %v1558 = vunpack.c.l.b16 %v1355
        %v1559 = vunpack.c.h.b16 %v1355
        %v1560 = vunpack.c.l.b16 %v1356
        %v1561 = vunpack.c.h.b16 %v1356
        %v1562 = vunpack.c.l.b16 %v1357
        %v1563 = vunpack.c.h.b16 %v1357
        %v1564 = vunpack.c.l.b16 %v1358
        %v1565 = vunpack.c.h.b16 %v1358
        %v1566 = vunpack.c.l.b16 %v1359
        %v1567 = vunpack.c.h.b16 %v1359
        %v1568 = vunpack.c.l.b16 %v1360
        %v1569 = vunpack.c.h.b16 %v1360
        %v1570 = vunpack.c.l.b16 %v1361
        %v1571 = vunpack.c.h.b16 %v1361
        %v1572 = vunpack.c.l.b16 %v1362
        %v1573 = vunpack.c.h.b16 %v1362
        %v1574 = vunpack.c.l.b16 %v1363
        %v1575 = vunpack.c.h.b16 %v1363
        %v1576 = vunpack.c.l.b16 %v1364
        %v1577 = vunpack.c.h.b16 %v1364
        %v1578 = vunpack.c.l.b16 %v1365
        %v1579 = vunpack.c.h.b16 %v1365
        %v1580 = vpack.c.b16 %v1456, %v1452
        %v1581 = vpack.c.b16 %v1457, %v1453
        %v1582 = vpack.c.b16 %v1458, %v1454
        %v1583 = vpack.c.b16 %v1459, %v1455
        %v1584 = vpack.c.b16 %v1464, %v1460
        %v1585 = vpack.c.b16 %v1465, %v1461
        %v1586 = vpack.c.b16 %v1466, %v1462
        %v1587 = vpack.c.b16 %v1467, %v1463
        %v1588 = vpack.c.b16 %v1472, %v1468
        %v1589 = vpack.c.b16 %v1473, %v1469
        %v1590 = vpack.c.b16 %v1474, %v1470
        %v1591 = vpack.c.b16 %v1475, %v1471
        %v1592 = vpack.c.b16 %v1480, %v1476
        %v1593 = vpack.c.b16 %v1481, %v1477
        %v1594 = vpack.c.b16 %v1482, %v1478
        %v1595 = vpack.c.b16 %v1483, %v1479
        %v1596 = vpack.c.b16 %v1488, %v1484
        %v1597 = vpack.c.b16 %v1489, %v1485
        %v1598 = vpack.c.b16 %v1490, %v1486
        %v1599 = vpack.c.b16 %v1491, %v1487
        %v1600 = vpack.c.b16 %v1496, %v1492
        %v1601 = vpack.c.b16 %v1497, %v1493
        %v1602 = vpack.c.b16 %v1498, %v1494
        %v1603 = vpack.c.b16 %v1499, %v1495
        %v1604 = vpack.c.b16 %v1504, %v1500
        %v1605 = vpack.c.b16 %v1505, %v1501
        %v1606 = vpack.c.b16 %v1506, %v1502
        %v1607 = vpack.c.b16 %v1507, %v1503
        %v1608 = vpack.c.b16 %v1512, %v1508
        %v1609 = vpack.c.b16 %v1513, %v1509
        %v1610 = vpack.c.b16 %v1514, %v1510
        %v1611 = vpack.c.b16 %v1515, %v1511
        %v1612 = vpack.c.b16 %v1520, %v1516
        %v1613 = vpack.c.b16 %v1521, %v1517
        %v1614 = vpack.c.b16 %v1522, %v1518
        %v1615 = vpack.c.b16 %v1523, %v1519
        %v1616 = vpack.c.b16 %v1528, %v1524
        %v1617 = vpack.c.b16 %v1529, %v1525
        %v1618 = vpack.c.b16 %v1530, %v1526
        %v1619 = vpack.c.b16 %v1531, %v1527
        %v1620 = vpack.c.b16 %v1536, %v1532
        %v1621 = vpack.c.b16 %v1537, %v1533
        %v1622 = vpack.c.b16 %v1538, %v1534
        %v1623 = vpack.c.b16 %v1539, %v1535
        %v1624 = vpack.c.b16 %v1544, %v1540
        %v1625 = vpack.c.b16 %v1545, %v1541
        %v1626 = vpack.c.b16 %v1546, %v1542
        %v1627 = vpack.c.b16 %v1547, %v1543
        %v1628 = vpack.c.b16 %v1552, %v1548
        %v1629 = vpack.c.b16 %v1553, %v1549
        %v1630 = vpack.c.b16 %v1554, %v1550
        %v1631 = vpack.c.b16 %v1555, %v1551
        %v1632 = vpack.c.b16 %v1560, %v1556
        %v1633 = vpack.c.b16 %v1561, %v1557
        %v1634 = vpack.c.b16 %v1562, %v1558
        %v1635 = vpack.c.b16 %v1563, %v1559
        %v1636 = vpack.c.b16 %v1568, %v1564
        %v1637 = vpack.c.b16 %v1569, %v1565
        %v1638 = vpack.c.b16 %v1570, %v1566
        %v1639 = vpack.c.b16 %v1571, %v1567
        %v1640 = vpack.c.b16 %v1576, %v1572
        %v1641 = vpack.c.b16 %v1577, %v1573
        %v1642 = vpack.c.b16 %v1578, %v1574
        %v1643 = vpack.c.b16 %v1579, %v1575
        %1708 = vmatprep.subr.bf16.mxu0 %v1609
        %1709 = vmatpush1.bf16.msra.mxu0 %v1608
        %1710 = vmatprep.subr.bf16.mxu0 %v1605
        %1711 = vmatpush1.bf16.msra.mxu0 %v1604
        %1712 = vmatprep.subr.bf16.mxu0 %v1601
        %1713 = vmatpush1.bf16.msra.mxu0 %v1600
        %1714 = vmatprep.subr.bf16.mxu0 %v1597
        %1715 = vmatpush1.bf16.msra.mxu0 %v1596
        %1716 = vmatprep.subr.bf16.mxu0 %v1593
        %1717 = vmatpush1.bf16.msra.mxu0 %v1592
        %1718 = vmatprep.subr.bf16.mxu0 %v1589
        %1719 = vmatpush1.bf16.msra.mxu0 %v1588
        %1720 = vmatprep.subr.bf16.mxu0 %v1585
        %1721 = vmatpush1.bf16.msra.mxu0 %v1584
        %1722 = vmatprep.subr.bf16.mxu0 %v1581
        %1723 = vmatpush1.bf16.msra.mxu0 %v1580
        %1724 = vmatprep.subr.bf16.mxu0 %v1641
        %1725 = vmatpush2.bf16.msra.mxu0 %v1640
        %1726 = vmatprep.subr.bf16.mxu0 %v1637
        %1727 = vmatpush2.bf16.msra.mxu0 %v1636
        %1728 = vmatprep.subr.bf16.mxu0 %v1633
        %1729 = vmatpush2.bf16.msra.mxu0 %v1632
        %1730 = vmatprep.subr.bf16.mxu0 %v1629
        %1731 = vmatpush2.bf16.msra.mxu0 %v1628
        %1732 = vmatprep.subr.bf16.mxu0 %v1625
        %1733 = vmatpush2.bf16.msra.mxu0 %v1624
        %1734 = vmatprep.subr.bf16.mxu0 %v1621
        %1735 = vmatpush2.bf16.msra.mxu0 %v1620
        %1736 = vmatprep.subr.bf16.mxu0 %v1617
        %1737 = vmatpush2.bf16.msra.mxu0 %v1616
        %1738 = vmatprep.subr.bf16.mxu0 %v1613
        %1739 = vmatpush2.bf16.msra.mxu0 %v1612
        %1740 = vmatprep.mubr.bf16.mxu0 %v1271
        %1741 = vmatmul.mubr.bf16.gmra.mxu0 %v1270
        %v1742 = vpop.f32.mrf.mxu0
        %v1743 = vadd.f32 %v1371, %v1742
        %v1744 = vpop.f32.mrf.mxu0
        %v1745 = vadd.f32 %v1375, %v1744
        %v1746 = vpop.f32.mrf.mxu0
        %v1747 = vadd.f32 %v1371, %v1746
        %v1748 = vpop.f32.mrf.mxu0
        %v1749 = vadd.f32 %v1375, %v1748
        %1750 = vmatprep.mubr.bf16.mxu0 %v1273
        %1751 = vmatmul.mubr.bf16.gmra.mxu0 %v1272
        %v1752 = vpop.f32.mrf.mxu0
        %v1753 = vadd.f32 %v1371, %v1752
        %v1754 = vpop.f32.mrf.mxu0
        %v1755 = vadd.f32 %v1375, %v1754
        %v1756 = vpop.f32.mrf.mxu0
        %v1757 = vadd.f32 %v1371, %v1756
        %v1758 = vpop.f32.mrf.mxu0
        %v1759 = vadd.f32 %v1375, %v1758
        %1760 = vmatprep.mubr.bf16.mxu0 %v1275
        %1761 = vmatmul.mubr.bf16.gmra.mxu0 %v1274
        %v1762 = vpop.f32.mrf.mxu0
        %v1763 = vadd.f32 %v1371, %v1762
        %v1764 = vpop.f32.mrf.mxu0
        %v1765 = vadd.f32 %v1375, %v1764
        %v1766 = vpop.f32.mrf.mxu0
        %v1767 = vadd.f32 %v1371, %v1766
        %v1768 = vpop.f32.mrf.mxu0
        %v1769 = vadd.f32 %v1375, %v1768
        %1770 = vmatprep.mubr.bf16.mxu0 %v1277
        %1771 = vmatmul.mubr.bf16.gmra.mxu0 %v1276
        %v1772 = vpop.f32.mrf.mxu0
        %v1773 = vadd.f32 %v1371, %v1772
        %v1774 = vpop.f32.mrf.mxu0
        %v1775 = vadd.f32 %v1375, %v1774
        %v1776 = vpop.f32.mrf.mxu0
        %v1777 = vadd.f32 %v1371, %v1776
        %v1778 = vpop.f32.mrf.mxu0
        %v1779 = vadd.f32 %v1375, %v1778
        %1780 = vmatprep.mubr.bf16.mxu0 %v1279
        %1781 = vmatmul.mubr.bf16.gmra.mxu0 %v1278
        %v1782 = vpop.f32.mrf.mxu0
        %v1783 = vadd.f32 %v1371, %v1782
        %v1784 = vpop.f32.mrf.mxu0
        %v1785 = vadd.f32 %v1375, %v1784
        %v1786 = vpop.f32.mrf.mxu0
        %v1787 = vadd.f32 %v1371, %v1786
        %v1788 = vpop.f32.mrf.mxu0
        %v1789 = vadd.f32 %v1375, %v1788
        %1790 = vmatprep.mubr.bf16.mxu0 %v1281
        %1791 = vmatmul.mubr.bf16.gmra.mxu0 %v1280
        %v1792 = vpop.f32.mrf.mxu0
        %v1793 = vadd.f32 %v1371, %v1792
        %v1794 = vpop.f32.mrf.mxu0
        %v1795 = vadd.f32 %v1375, %v1794
        %v1796 = vpop.f32.mrf.mxu0
        %v1797 = vadd.f32 %v1371, %v1796
        %v1798 = vpop.f32.mrf.mxu0
        %v1799 = vadd.f32 %v1375, %v1798
        %1800 = vmatprep.mubr.bf16.mxu0 %v1283
        %1801 = vmatmul.mubr.bf16.gmra.mxu0 %v1282
        %v1802 = vpop.f32.mrf.mxu0
        %v1803 = vadd.f32 %v1371, %v1802
        %v1804 = vpop.f32.mrf.mxu0
        %v1805 = vadd.f32 %v1375, %v1804
        %v1806 = vpop.f32.mrf.mxu0
        %v1807 = vadd.f32 %v1371, %v1806
        %v1808 = vpop.f32.mrf.mxu0
        %v1809 = vadd.f32 %v1375, %v1808
        %1810 = vmatprep.mubr.bf16.mxu0 %v1285
        %1811 = vmatmul.mubr.bf16.gmra.mxu0 %v1284
        %v1812 = vpop.f32.mrf.mxu0
        %v1813 = vadd.f32 %v1371, %v1812
        %v1814 = vpop.f32.mrf.mxu0
        %v1815 = vadd.f32 %v1375, %v1814
        %v1816 = vpop.f32.mrf.mxu0
        %v1817 = vadd.f32 %v1371, %v1816
        %v1818 = vpop.f32.mrf.mxu0
        %v1819 = vadd.f32 %v1375, %v1818
        %1820 = vmatprep.mubr.bf16.mxu0 %v1287
        %1821 = vmatmul.mubr.bf16.gmra.mxu0 %v1286
        %v1822 = vpop.f32.mrf.mxu0
        %v1823 = vadd.f32 %v1371, %v1822
        %v1824 = vpop.f32.mrf.mxu0
        %v1825 = vadd.f32 %v1375, %v1824
        %v1826 = vpop.f32.mrf.mxu0
        %v1827 = vadd.f32 %v1371, %v1826
        %v1828 = vpop.f32.mrf.mxu0
        %v1829 = vadd.f32 %v1375, %v1828
        %1830 = vmatprep.mubr.bf16.mxu0 %v1289
        %1831 = vmatmul.mubr.bf16.gmra.mxu0 %v1288
        %v1832 = vpop.f32.mrf.mxu0
        %v1833 = vadd.f32 %v1371, %v1832
        %v1834 = vpop.f32.mrf.mxu0
        %v1835 = vadd.f32 %v1375, %v1834
        %v1836 = vpop.f32.mrf.mxu0
        %v1837 = vadd.f32 %v1371, %v1836
        %v1838 = vpop.f32.mrf.mxu0
        %v1839 = vadd.f32 %v1375, %v1838
        %1840 = vmatprep.mubr.bf16.mxu0 %v1291
        %1841 = vmatmul.mubr.bf16.gmra.mxu0 %v1290
        %v1842 = vpop.f32.mrf.mxu0
        %v1843 = vadd.f32 %v1371, %v1842
        %v1844 = vpop.f32.mrf.mxu0
        %v1845 = vadd.f32 %v1375, %v1844
        %v1846 = vpop.f32.mrf.mxu0
        %v1847 = vadd.f32 %v1371, %v1846
        %v1848 = vpop.f32.mrf.mxu0
        %v1849 = vadd.f32 %v1375, %v1848
        %1850 = vmatprep.mubr.bf16.mxu0 %v1293
        %1851 = vmatmul.mubr.bf16.gmra.mxu0 %v1292
        %v1852 = vpop.f32.mrf.mxu0
        %v1853 = vadd.f32 %v1371, %v1852
        %v1854 = vpop.f32.mrf.mxu0
        %v1855 = vadd.f32 %v1375, %v1854
        %v1856 = vpop.f32.mrf.mxu0
        %v1857 = vadd.f32 %v1371, %v1856
        %v1858 = vpop.f32.mrf.mxu0
        %v1859 = vadd.f32 %v1375, %v1858
        %1860 = vmatprep.mubr.bf16.mxu0 %v1295
        %1861 = vmatmul.mubr.bf16.gmra.mxu0 %v1294
        %v1862 = vpop.f32.mrf.mxu0
        %v1863 = vadd.f32 %v1371, %v1862
        %v1864 = vpop.f32.mrf.mxu0
        %v1865 = vadd.f32 %v1375, %v1864
        %v1866 = vpop.f32.mrf.mxu0
        %v1867 = vadd.f32 %v1371, %v1866
        %v1868 = vpop.f32.mrf.mxu0
        %v1869 = vadd.f32 %v1375, %v1868
        %1870 = vmatprep.mubr.bf16.mxu0 %v1297
        %1871 = vmatmul.mubr.bf16.gmra.mxu0 %v1296
        %v1872 = vpop.f32.mrf.mxu0
        %v1873 = vadd.f32 %v1371, %v1872
        %v1874 = vpop.f32.mrf.mxu0
        %v1875 = vadd.f32 %v1375, %v1874
        %v1876 = vpop.f32.mrf.mxu0
        %v1877 = vadd.f32 %v1371, %v1876
        %v1878 = vpop.f32.mrf.mxu0
        %v1879 = vadd.f32 %v1375, %v1878
        %1880 = vmatprep.mubr.bf16.mxu0 %v1299
        %1881 = vmatmul.mubr.bf16.gmra.mxu0 %v1298
        %v1882 = vpop.f32.mrf.mxu0
        %v1883 = vadd.f32 %v1371, %v1882
        %v1884 = vpop.f32.mrf.mxu0
        %v1885 = vadd.f32 %v1375, %v1884
        %v1886 = vpop.f32.mrf.mxu0
        %v1887 = vadd.f32 %v1371, %v1886
        %v1888 = vpop.f32.mrf.mxu0
        %v1889 = vadd.f32 %v1375, %v1888
        %1890 = vmatprep.mubr.bf16.mxu0 %v1301
        %1891 = vmatmul.mubr.bf16.gmra.mxu0 %v1300
        %v1892 = vpop.f32.mrf.mxu0
        %v1893 = vadd.f32 %v1371, %v1892
        %v1894 = vpop.f32.mrf.mxu0
        %v1895 = vadd.f32 %v1375, %v1894
        %v1896 = vpop.f32.mrf.mxu0
        %v1897 = vadd.f32 %v1371, %v1896
        %v1898 = vpop.f32.mrf.mxu0
        %v1899 = vadd.f32 %v1375, %v1898
        %1900 = vdwg.mxu0
        %1901 = vmatprep.subr.bf16.mxu0 %v1611
        %1902 = vmatpush1.bf16.msra.mxu0 %v1610
        %1903 = vmatprep.subr.bf16.mxu0 %v1607
        %1904 = vmatpush1.bf16.msra.mxu0 %v1606
        %1905 = vmatprep.subr.bf16.mxu0 %v1603
        %1906 = vmatpush1.bf16.msra.mxu0 %v1602
        %1907 = vmatprep.subr.bf16.mxu0 %v1599
        %1908 = vmatpush1.bf16.msra.mxu0 %v1598
        %1909 = vmatprep.subr.bf16.mxu0 %v1595
        %1910 = vmatpush1.bf16.msra.mxu0 %v1594
        %1911 = vmatprep.subr.bf16.mxu0 %v1591
        %1912 = vmatpush1.bf16.msra.mxu0 %v1590
        %1913 = vmatprep.subr.bf16.mxu0 %v1587
        %1914 = vmatpush1.bf16.msra.mxu0 %v1586
        %1915 = vmatprep.subr.bf16.mxu0 %v1583
        %1916 = vmatpush1.bf16.msra.mxu0 %v1582
        %1917 = vmatprep.subr.bf16.mxu0 %v1643
        %1918 = vmatpush2.bf16.msra.mxu0 %v1642
        %1919 = vmatprep.subr.bf16.mxu0 %v1639
        %1920 = vmatpush2.bf16.msra.mxu0 %v1638
        %1921 = vmatprep.subr.bf16.mxu0 %v1635
        %1922 = vmatpush2.bf16.msra.mxu0 %v1634
        %1923 = vmatprep.subr.bf16.mxu0 %v1631
        %1924 = vmatpush2.bf16.msra.mxu0 %v1630
        %1925 = vmatprep.subr.bf16.mxu0 %v1627
        %1926 = vmatpush2.bf16.msra.mxu0 %v1626
        %1927 = vmatprep.subr.bf16.mxu0 %v1623
        %1928 = vmatpush2.bf16.msra.mxu0 %v1622
        %1929 = vmatprep.subr.bf16.mxu0 %v1619
        %1930 = vmatpush2.bf16.msra.mxu0 %v1618
        %1931 = vmatprep.subr.bf16.mxu0 %v1615
        %1932 = vmatpush2.bf16.msra.mxu0 %v1614
        %1933 = vmatprep.mubr.bf16.mxu0 %v1271
        %1934 = vmatmul.mubr.bf16.gmra.mxu0 %v1270
        %v1935 = vpop.f32.mrf.mxu0
        %v1936 = vadd.f32 %v1379, %v1935
        %v1937 = vpop.f32.mrf.mxu0
        %v1938 = vadd.f32 %v1383, %v1937
        %v1939 = vpop.f32.mrf.mxu0
        %v1940 = vadd.f32 %v1379, %v1939
        %v1941 = vpop.f32.mrf.mxu0
        %v1942 = vadd.f32 %v1383, %v1941
        %1943 = vmatprep.mubr.bf16.mxu0 %v1273
        %1944 = vmatmul.mubr.bf16.gmra.mxu0 %v1272
        %v1945 = vpop.f32.mrf.mxu0
        %v1946 = vadd.f32 %v1379, %v1945
        %v1947 = vpop.f32.mrf.mxu0
        %v1948 = vadd.f32 %v1383, %v1947
        %v1949 = vpop.f32.mrf.mxu0
        %v1950 = vadd.f32 %v1379, %v1949
        %v1951 = vpop.f32.mrf.mxu0
        %v1952 = vadd.f32 %v1383, %v1951
        %1953 = vmatprep.mubr.bf16.mxu0 %v1275
        %1954 = vmatmul.mubr.bf16.gmra.mxu0 %v1274
        %v1955 = vpop.f32.mrf.mxu0
        %v1956 = vadd.f32 %v1379, %v1955
        %v1957 = vpop.f32.mrf.mxu0
        %v1958 = vadd.f32 %v1383, %v1957
        %v1959 = vpop.f32.mrf.mxu0
        %v1960 = vadd.f32 %v1379, %v1959
        %v1961 = vpop.f32.mrf.mxu0
        %v1962 = vadd.f32 %v1383, %v1961
        %1963 = vmatprep.mubr.bf16.mxu0 %v1277
        %1964 = vmatmul.mubr.bf16.gmra.mxu0 %v1276
        %v1965 = vpop.f32.mrf.mxu0
        %v1966 = vadd.f32 %v1379, %v1965
        %v1967 = vpop.f32.mrf.mxu0
        %v1968 = vadd.f32 %v1383, %v1967
        %v1969 = vpop.f32.mrf.mxu0
        %v1970 = vadd.f32 %v1379, %v1969
        %v1971 = vpop.f32.mrf.mxu0
        %v1972 = vadd.f32 %v1383, %v1971
        %1973 = vmatprep.mubr.bf16.mxu0 %v1279
        %1974 = vmatmul.mubr.bf16.gmra.mxu0 %v1278
        %v1975 = vpop.f32.mrf.mxu0
        %v1976 = vadd.f32 %v1379, %v1975
        %v1977 = vpop.f32.mrf.mxu0
        %v1978 = vadd.f32 %v1383, %v1977
        %v1979 = vpop.f32.mrf.mxu0
        %v1980 = vadd.f32 %v1379, %v1979
        %v1981 = vpop.f32.mrf.mxu0
        %v1982 = vadd.f32 %v1383, %v1981
        %1983 = vmatprep.mubr.bf16.mxu0 %v1281
        %1984 = vmatmul.mubr.bf16.gmra.mxu0 %v1280
        %v1985 = vpop.f32.mrf.mxu0
        %v1986 = vadd.f32 %v1379, %v1985
        %v1987 = vpop.f32.mrf.mxu0
        %v1988 = vadd.f32 %v1383, %v1987
        %v1989 = vpop.f32.mrf.mxu0
        %v1990 = vadd.f32 %v1379, %v1989
        %v1991 = vpop.f32.mrf.mxu0
        %v1992 = vadd.f32 %v1383, %v1991
        %1993 = vmatprep.mubr.bf16.mxu0 %v1283
        %1994 = vmatmul.mubr.bf16.gmra.mxu0 %v1282
        %v1995 = vpop.f32.mrf.mxu0
        %v1996 = vadd.f32 %v1379, %v1995
        %v1997 = vpop.f32.mrf.mxu0
        %v1998 = vadd.f32 %v1383, %v1997
        %v1999 = vpop.f32.mrf.mxu0
        %v2000 = vadd.f32 %v1379, %v1999
        %v2001 = vpop.f32.mrf.mxu0
        %v2002 = vadd.f32 %v1383, %v2001
        %2003 = vmatprep.mubr.bf16.mxu0 %v1285
        %2004 = vmatmul.mubr.bf16.gmra.mxu0 %v1284
        %v2005 = vpop.f32.mrf.mxu0
        %v2006 = vadd.f32 %v1379, %v2005
        %v2007 = vpop.f32.mrf.mxu0
        %v2008 = vadd.f32 %v1383, %v2007
        %v2009 = vpop.f32.mrf.mxu0
        %v2010 = vadd.f32 %v1379, %v2009
        %v2011 = vpop.f32.mrf.mxu0
        %v2012 = vadd.f32 %v1383, %v2011
        %2013 = vmatprep.mubr.bf16.mxu0 %v1287
        %2014 = vmatmul.mubr.bf16.gmra.mxu0 %v1286
        %v2015 = vpop.f32.mrf.mxu0
        %v2016 = vadd.f32 %v1379, %v2015
        %v2017 = vpop.f32.mrf.mxu0
        %v2018 = vadd.f32 %v1383, %v2017
        %v2019 = vpop.f32.mrf.mxu0
        %v2020 = vadd.f32 %v1379, %v2019
        %v2021 = vpop.f32.mrf.mxu0
        %v2022 = vadd.f32 %v1383, %v2021
        %2023 = vmatprep.mubr.bf16.mxu0 %v1289
        %2024 = vmatmul.mubr.bf16.gmra.mxu0 %v1288
        %v2025 = vpop.f32.mrf.mxu0
        %v2026 = vadd.f32 %v1379, %v2025
        %v2027 = vpop.f32.mrf.mxu0
        %v2028 = vadd.f32 %v1383, %v2027
        %v2029 = vpop.f32.mrf.mxu0
        %v2030 = vadd.f32 %v1379, %v2029
        %v2031 = vpop.f32.mrf.mxu0
        %v2032 = vadd.f32 %v1383, %v2031
        %2033 = vmatprep.mubr.bf16.mxu0 %v1291
        %2034 = vmatmul.mubr.bf16.gmra.mxu0 %v1290
        %v2035 = vpop.f32.mrf.mxu0
        %v2036 = vadd.f32 %v1379, %v2035
        %v2037 = vpop.f32.mrf.mxu0
        %v2038 = vadd.f32 %v1383, %v2037
        %v2039 = vpop.f32.mrf.mxu0
        %v2040 = vadd.f32 %v1379, %v2039
        %v2041 = vpop.f32.mrf.mxu0
        %v2042 = vadd.f32 %v1383, %v2041
        %2043 = vmatprep.mubr.bf16.mxu0 %v1293
        %2044 = vmatmul.mubr.bf16.gmra.mxu0 %v1292
        %v2045 = vpop.f32.mrf.mxu0
        %v2046 = vadd.f32 %v1379, %v2045
        %v2047 = vpop.f32.mrf.mxu0
        %v2048 = vadd.f32 %v1383, %v2047
        %v2049 = vpop.f32.mrf.mxu0
        %v2050 = vadd.f32 %v1379, %v2049
        %v2051 = vpop.f32.mrf.mxu0
        %v2052 = vadd.f32 %v1383, %v2051
        %2053 = vmatprep.mubr.bf16.mxu0 %v1295
        %2054 = vmatmul.mubr.bf16.gmra.mxu0 %v1294
        %v2055 = vpop.f32.mrf.mxu0
        %v2056 = vadd.f32 %v1379, %v2055
        %v2057 = vpop.f32.mrf.mxu0
        %v2058 = vadd.f32 %v1383, %v2057
        %v2059 = vpop.f32.mrf.mxu0
        %v2060 = vadd.f32 %v1379, %v2059
        %v2061 = vpop.f32.mrf.mxu0
        %v2062 = vadd.f32 %v1383, %v2061
        %2063 = vmatprep.mubr.bf16.mxu0 %v1297
        %2064 = vmatmul.mubr.bf16.gmra.mxu0 %v1296
        %v2065 = vpop.f32.mrf.mxu0
        %v2066 = vadd.f32 %v1379, %v2065
        %v2067 = vpop.f32.mrf.mxu0
        %v2068 = vadd.f32 %v1383, %v2067
        %v2069 = vpop.f32.mrf.mxu0
        %v2070 = vadd.f32 %v1379, %v2069
        %v2071 = vpop.f32.mrf.mxu0
        %v2072 = vadd.f32 %v1383, %v2071
        %2073 = vmatprep.mubr.bf16.mxu0 %v1299
        %2074 = vmatmul.mubr.bf16.gmra.mxu0 %v1298
        %v2075 = vpop.f32.mrf.mxu0
        %v2076 = vadd.f32 %v1379, %v2075
        %v2077 = vpop.f32.mrf.mxu0
        %v2078 = vadd.f32 %v1383, %v2077
        %v2079 = vpop.f32.mrf.mxu0
        %v2080 = vadd.f32 %v1379, %v2079
        %v2081 = vpop.f32.mrf.mxu0
        %v2082 = vadd.f32 %v1383, %v2081
        %2083 = vmatprep.mubr.bf16.mxu0 %v1301
        %2084 = vmatmul.mubr.bf16.gmra.mxu0 %v1300
        %v2085 = vpop.f32.mrf.mxu0
        %v2086 = vadd.f32 %v1379, %v2085
        %v2087 = vpop.f32.mrf.mxu0
        %v2088 = vadd.f32 %v1383, %v2087
        %v2089 = vpop.f32.mrf.mxu0
        %v2090 = vadd.f32 %v1379, %v2089
        %v2091 = vpop.f32.mrf.mxu0
        %v2092 = vadd.f32 %v1383, %v2091
        %2093 = vdwg.mxu0
        %vm2094 = vcmp.gt.f32.partialorder %v1743, 0.0
        %vm2095 = vcmp.gt.f32.partialorder %v1745, 0.0
        %vm2096 = vcmp.gt.f32.partialorder %v1936, 0.0
        %vm2097 = vcmp.gt.f32.partialorder %v1938, 0.0
        %vm2098 = vcmp.gt.f32.partialorder %v1747, 0.0
        %vm2099 = vcmp.gt.f32.partialorder %v1749, 0.0
        %vm2100 = vcmp.gt.f32.partialorder %v1940, 0.0
        %vm2101 = vcmp.gt.f32.partialorder %v1942, 0.0
        %vm2102 = vcmp.gt.f32.partialorder %v1753, 0.0
        %vm2103 = vcmp.gt.f32.partialorder %v1755, 0.0
        %vm2104 = vcmp.gt.f32.partialorder %v1946, 0.0
        %vm2105 = vcmp.gt.f32.partialorder %v1948, 0.0
        %vm2106 = vcmp.gt.f32.partialorder %v1757, 0.0
        %vm2107 = vcmp.gt.f32.partialorder %v1759, 0.0
        %vm2108 = vcmp.gt.f32.partialorder %v1950, 0.0
        %vm2109 = vcmp.gt.f32.partialorder %v1952, 0.0
        %vm2110 = vcmp.gt.f32.partialorder %v1763, 0.0
        %vm2111 = vcmp.gt.f32.partialorder %v1765, 0.0
        %vm2112 = vcmp.gt.f32.partialorder %v1956, 0.0
        %vm2113 = vcmp.gt.f32.partialorder %v1958, 0.0
        %vm2114 = vcmp.gt.f32.partialorder %v1767, 0.0
        %vm2115 = vcmp.gt.f32.partialorder %v1769, 0.0
        %vm2116 = vcmp.gt.f32.partialorder %v1960, 0.0
        %vm2117 = vcmp.gt.f32.partialorder %v1962, 0.0
        %vm2118 = vcmp.gt.f32.partialorder %v1773, 0.0
        %vm2119 = vcmp.gt.f32.partialorder %v1775, 0.0
        %vm2120 = vcmp.gt.f32.partialorder %v1966, 0.0
        %vm2121 = vcmp.gt.f32.partialorder %v1968, 0.0
        %vm2122 = vcmp.gt.f32.partialorder %v1777, 0.0
        %vm2123 = vcmp.gt.f32.partialorder %v1779, 0.0
        %vm2124 = vcmp.gt.f32.partialorder %v1970, 0.0
        %vm2125 = vcmp.gt.f32.partialorder %v1972, 0.0
        %vm2126 = vcmp.gt.f32.partialorder %v1783, 0.0
        %vm2127 = vcmp.gt.f32.partialorder %v1785, 0.0
        %vm2128 = vcmp.gt.f32.partialorder %v1976, 0.0
        %vm2129 = vcmp.gt.f32.partialorder %v1978, 0.0
        %vm2130 = vcmp.gt.f32.partialorder %v1787, 0.0
        %vm2131 = vcmp.gt.f32.partialorder %v1789, 0.0
        %vm2132 = vcmp.gt.f32.partialorder %v1980, 0.0
        %vm2133 = vcmp.gt.f32.partialorder %v1982, 0.0
        %vm2134 = vcmp.gt.f32.partialorder %v1793, 0.0
        %vm2135 = vcmp.gt.f32.partialorder %v1795, 0.0
        %vm2136 = vcmp.gt.f32.partialorder %v1986, 0.0
        %vm2137 = vcmp.gt.f32.partialorder %v1988, 0.0
        %vm2138 = vcmp.gt.f32.partialorder %v1797, 0.0
        %vm2139 = vcmp.gt.f32.partialorder %v1799, 0.0
        %vm2140 = vcmp.gt.f32.partialorder %v1990, 0.0
        %vm2141 = vcmp.gt.f32.partialorder %v1992, 0.0
        %vm2142 = vcmp.gt.f32.partialorder %v1803, 0.0
        %vm2143 = vcmp.gt.f32.partialorder %v1805, 0.0
        %vm2144 = vcmp.gt.f32.partialorder %v1996, 0.0
        %vm2145 = vcmp.gt.f32.partialorder %v1998, 0.0
        %vm2146 = vcmp.gt.f32.partialorder %v1807, 0.0
        %vm2147 = vcmp.gt.f32.partialorder %v1809, 0.0
        %vm2148 = vcmp.gt.f32.partialorder %v2000, 0.0
        %vm2149 = vcmp.gt.f32.partialorder %v2002, 0.0
        %vm2150 = vcmp.gt.f32.partialorder %v1813, 0.0
        %vm2151 = vcmp.gt.f32.partialorder %v1815, 0.0
        %vm2152 = vcmp.gt.f32.partialorder %v2006, 0.0
        %vm2153 = vcmp.gt.f32.partialorder %v2008, 0.0
        %vm2154 = vcmp.gt.f32.partialorder %v1817, 0.0
        %vm2155 = vcmp.gt.f32.partialorder %v1819, 0.0
        %vm2156 = vcmp.gt.f32.partialorder %v2010, 0.0
        %vm2157 = vcmp.gt.f32.partialorder %v2012, 0.0
        %vm2158 = vcmp.gt.f32.partialorder %v1823, 0.0
        %vm2159 = vcmp.gt.f32.partialorder %v1825, 0.0
        %vm2160 = vcmp.gt.f32.partialorder %v2016, 0.0
        %vm2161 = vcmp.gt.f32.partialorder %v2018, 0.0
        %vm2162 = vcmp.gt.f32.partialorder %v1827, 0.0
        %vm2163 = vcmp.gt.f32.partialorder %v1829, 0.0
        %vm2164 = vcmp.gt.f32.partialorder %v2020, 0.0
        %vm2165 = vcmp.gt.f32.partialorder %v2022, 0.0
        %vm2166 = vcmp.gt.f32.partialorder %v1833, 0.0
        %vm2167 = vcmp.gt.f32.partialorder %v1835, 0.0
        %vm2168 = vcmp.gt.f32.partialorder %v2026, 0.0
        %vm2169 = vcmp.gt.f32.partialorder %v2028, 0.0
        %vm2170 = vcmp.gt.f32.partialorder %v1837, 0.0
        %vm2171 = vcmp.gt.f32.partialorder %v1839, 0.0
        %vm2172 = vcmp.gt.f32.partialorder %v2030, 0.0
        %vm2173 = vcmp.gt.f32.partialorder %v2032, 0.0
        %vm2174 = vcmp.gt.f32.partialorder %v1843, 0.0
        %vm2175 = vcmp.gt.f32.partialorder %v1845, 0.0
        %vm2176 = vcmp.gt.f32.partialorder %v2036, 0.0
        %vm2177 = vcmp.gt.f32.partialorder %v2038, 0.0
        %vm2178 = vcmp.gt.f32.partialorder %v1847, 0.0
        %vm2179 = vcmp.gt.f32.partialorder %v1849, 0.0
        %vm2180 = vcmp.gt.f32.partialorder %v2040, 0.0
        %vm2181 = vcmp.gt.f32.partialorder %v2042, 0.0
        %vm2182 = vcmp.gt.f32.partialorder %v1853, 0.0
        %vm2183 = vcmp.gt.f32.partialorder %v1855, 0.0
        %vm2184 = vcmp.gt.f32.partialorder %v2046, 0.0
        %vm2185 = vcmp.gt.f32.partialorder %v2048, 0.0
        %vm2186 = vcmp.gt.f32.partialorder %v1857, 0.0
        %vm2187 = vcmp.gt.f32.partialorder %v1859, 0.0
        %vm2188 = vcmp.gt.f32.partialorder %v2050, 0.0
        %vm2189 = vcmp.gt.f32.partialorder %v2052, 0.0
        %vm2190 = vcmp.gt.f32.partialorder %v1863, 0.0
        %vm2191 = vcmp.gt.f32.partialorder %v1865, 0.0
        %vm2192 = vcmp.gt.f32.partialorder %v2056, 0.0
        %vm2193 = vcmp.gt.f32.partialorder %v2058, 0.0
        %vm2194 = vcmp.gt.f32.partialorder %v1867, 0.0
        %vm2195 = vcmp.gt.f32.partialorder %v1869, 0.0
        %vm2196 = vcmp.gt.f32.partialorder %v2060, 0.0
        %vm2197 = vcmp.gt.f32.partialorder %v2062, 0.0
        %vm2198 = vcmp.gt.f32.partialorder %v1873, 0.0
        %vm2199 = vcmp.gt.f32.partialorder %v1875, 0.0
        %vm2200 = vcmp.gt.f32.partialorder %v2066, 0.0
        %vm2201 = vcmp.gt.f32.partialorder %v2068, 0.0
        %vm2202 = vcmp.gt.f32.partialorder %v1877, 0.0
        %vm2203 = vcmp.gt.f32.partialorder %v1879, 0.0
        %vm2204 = vcmp.gt.f32.partialorder %v2070, 0.0
        %vm2205 = vcmp.gt.f32.partialorder %v2072, 0.0
        %vm2206 = vcmp.gt.f32.partialorder %v1883, 0.0
        %vm2207 = vcmp.gt.f32.partialorder %v1885, 0.0
        %vm2208 = vcmp.gt.f32.partialorder %v2076, 0.0
        %vm2209 = vcmp.gt.f32.partialorder %v2078, 0.0
        %vm2210 = vcmp.gt.f32.partialorder %v1887, 0.0
        %vm2211 = vcmp.gt.f32.partialorder %v1889, 0.0
        %vm2212 = vcmp.gt.f32.partialorder %v2080, 0.0
        %vm2213 = vcmp.gt.f32.partialorder %v2082, 0.0
        %vm2214 = vcmp.gt.f32.partialorder %v1893, 0.0
        %vm2215 = vcmp.gt.f32.partialorder %v1895, 0.0
        %vm2216 = vcmp.gt.f32.partialorder %v2086, 0.0
        %vm2217 = vcmp.gt.f32.partialorder %v2088, 0.0
        %vm2218 = vcmp.gt.f32.partialorder %v1897, 0.0
        %vm2219 = vcmp.gt.f32.partialorder %v1899, 0.0
        %vm2220 = vcmp.gt.f32.partialorder %v2090, 0.0
        %vm2221 = vcmp.gt.f32.partialorder %v2092, 0.0
        %v2222 = vmul.f32 %v1743, 0.01
        %v2223 = vmul.f32 %v1745, 0.01
        %v2224 = vmul.f32 %v1936, 0.01
        %v2225 = vmul.f32 %v1938, 0.01
        %v2226 = vmul.f32 %v1747, 0.01
        %v2227 = vmul.f32 %v1749, 0.01
        %v2228 = vmul.f32 %v1940, 0.01
        %v2229 = vmul.f32 %v1942, 0.01
        %v2230 = vmul.f32 %v1753, 0.01
        %v2231 = vmul.f32 %v1755, 0.01
        %v2232 = vmul.f32 %v1946, 0.01
        %v2233 = vmul.f32 %v1948, 0.01
        %v2234 = vmul.f32 %v1757, 0.01
        %v2235 = vmul.f32 %v1759, 0.01
        %v2236 = vmul.f32 %v1950, 0.01
        %v2237 = vmul.f32 %v1952, 0.01
        %v2238 = vmul.f32 %v1763, 0.01
        %v2239 = vmul.f32 %v1765, 0.01
        %v2240 = vmul.f32 %v1956, 0.01
        %v2241 = vmul.f32 %v1958, 0.01
        %v2242 = vmul.f32 %v1767, 0.01
        %v2243 = vmul.f32 %v1769, 0.01
        %v2244 = vmul.f32 %v1960, 0.01
        %v2245 = vmul.f32 %v1962, 0.01
        %v2246 = vmul.f32 %v1773, 0.01
        %v2247 = vmul.f32 %v1775, 0.01
        %v2248 = vmul.f32 %v1966, 0.01
        %v2249 = vmul.f32 %v1968, 0.01
        %v2250 = vmul.f32 %v1777, 0.01
        %v2251 = vmul.f32 %v1779, 0.01
        %v2252 = vmul.f32 %v1970, 0.01
        %v2253 = vmul.f32 %v1972, 0.01
        %v2254 = vmul.f32 %v1783, 0.01
        %v2255 = vmul.f32 %v1785, 0.01
        %v2256 = vmul.f32 %v1976, 0.01
        %v2257 = vmul.f32 %v1978, 0.01
        %v2258 = vmul.f32 %v1787, 0.01
        %v2259 = vmul.f32 %v1789, 0.01
        %v2260 = vmul.f32 %v1980, 0.01
        %v2261 = vmul.f32 %v1982, 0.01
        %v2262 = vmul.f32 %v1793, 0.01
        %v2263 = vmul.f32 %v1795, 0.01
        %v2264 = vmul.f32 %v1986, 0.01
        %v2265 = vmul.f32 %v1988, 0.01
        %v2266 = vmul.f32 %v1797, 0.01
        %v2267 = vmul.f32 %v1799, 0.01
        %v2268 = vmul.f32 %v1990, 0.01
        %v2269 = vmul.f32 %v1992, 0.01
        %v2270 = vmul.f32 %v1803, 0.01
        %v2271 = vmul.f32 %v1805, 0.01
        %v2272 = vmul.f32 %v1996, 0.01
        %v2273 = vmul.f32 %v1998, 0.01
        %v2274 = vmul.f32 %v1807, 0.01
        %v2275 = vmul.f32 %v1809, 0.01
        %v2276 = vmul.f32 %v2000, 0.01
        %v2277 = vmul.f32 %v2002, 0.01
        %v2278 = vmul.f32 %v1813, 0.01
        %v2279 = vmul.f32 %v1815, 0.01
        %v2280 = vmul.f32 %v2006, 0.01
        %v2281 = vmul.f32 %v2008, 0.01
        %v2282 = vmul.f32 %v1817, 0.01
        %v2283 = vmul.f32 %v1819, 0.01
        %v2284 = vmul.f32 %v2010, 0.01
        %v2285 = vmul.f32 %v2012, 0.01
        %v2286 = vmul.f32 %v1823, 0.01
        %v2287 = vmul.f32 %v1825, 0.01
        %v2288 = vmul.f32 %v2016, 0.01
        %v2289 = vmul.f32 %v2018, 0.01
        %v2290 = vmul.f32 %v1827, 0.01
        %v2291 = vmul.f32 %v1829, 0.01
        %v2292 = vmul.f32 %v2020, 0.01
        %v2293 = vmul.f32 %v2022, 0.01
        %v2294 = vmul.f32 %v1833, 0.01
        %v2295 = vmul.f32 %v1835, 0.01
        %v2296 = vmul.f32 %v2026, 0.01
        %v2297 = vmul.f32 %v2028, 0.01
        %v2298 = vmul.f32 %v1837, 0.01
        %v2299 = vmul.f32 %v1839, 0.01
        %v2300 = vmul.f32 %v2030, 0.01
        %v2301 = vmul.f32 %v2032, 0.01
        %v2302 = vmul.f32 %v1843, 0.01
        %v2303 = vmul.f32 %v1845, 0.01
        %v2304 = vmul.f32 %v2036, 0.01
        %v2305 = vmul.f32 %v2038, 0.01
        %v2306 = vmul.f32 %v1847, 0.01
        %v2307 = vmul.f32 %v1849, 0.01
        %v2308 = vmul.f32 %v2040, 0.01
        %v2309 = vmul.f32 %v2042, 0.01
        %v2310 = vmul.f32 %v1853, 0.01
        %v2311 = vmul.f32 %v1855, 0.01
        %v2312 = vmul.f32 %v2046, 0.01
        %v2313 = vmul.f32 %v2048, 0.01
        %v2314 = vmul.f32 %v1857, 0.01
        %v2315 = vmul.f32 %v1859, 0.01
        %v2316 = vmul.f32 %v2050, 0.01
        %v2317 = vmul.f32 %v2052, 0.01
        %v2318 = vmul.f32 %v1863, 0.01
        %v2319 = vmul.f32 %v1865, 0.01
        %v2320 = vmul.f32 %v2056, 0.01
        %v2321 = vmul.f32 %v2058, 0.01
        %v2322 = vmul.f32 %v1867, 0.01
        %v2323 = vmul.f32 %v1869, 0.01
        %v2324 = vmul.f32 %v2060, 0.01
        %v2325 = vmul.f32 %v2062, 0.01
        %v2326 = vmul.f32 %v1873, 0.01
        %v2327 = vmul.f32 %v1875, 0.01
        %v2328 = vmul.f32 %v2066, 0.01
        %v2329 = vmul.f32 %v2068, 0.01
        %v2330 = vmul.f32 %v1877, 0.01
        %v2331 = vmul.f32 %v1879, 0.01
        %v2332 = vmul.f32 %v2070, 0.01
        %v2333 = vmul.f32 %v2072, 0.01
        %v2334 = vmul.f32 %v1883, 0.01
        %v2335 = vmul.f32 %v1885, 0.01
        %v2336 = vmul.f32 %v2076, 0.01
        %v2337 = vmul.f32 %v2078, 0.01
        %v2338 = vmul.f32 %v1887, 0.01
        %v2339 = vmul.f32 %v1889, 0.01
        %v2340 = vmul.f32 %v2080, 0.01
        %v2341 = vmul.f32 %v2082, 0.01
        %v2342 = vmul.f32 %v1893, 0.01
        %v2343 = vmul.f32 %v1895, 0.01
        %v2344 = vmul.f32 %v2086, 0.01
        %v2345 = vmul.f32 %v2088, 0.01
        %v2346 = vmul.f32 %v1897, 0.01
        %v2347 = vmul.f32 %v1899, 0.01
        %v2348 = vmul.f32 %v2090, 0.01
        %v2349 = vmul.f32 %v2092, 0.01
        %v2350 = vsel %vm2094, %v1743, %v2222
        %v2351 = vsel %vm2095, %v1745, %v2223
        %v2352 = vsel %vm2096, %v1936, %v2224
        %v2353 = vsel %vm2097, %v1938, %v2225
        %v2354 = vsel %vm2098, %v1747, %v2226
        %v2355 = vsel %vm2099, %v1749, %v2227
        %v2356 = vsel %vm2100, %v1940, %v2228
        %v2357 = vsel %vm2101, %v1942, %v2229
        %v2358 = vsel %vm2102, %v1753, %v2230
        %v2359 = vsel %vm2103, %v1755, %v2231
        %v2360 = vsel %vm2104, %v1946, %v2232
        %v2361 = vsel %vm2105, %v1948, %v2233
        %v2362 = vsel %vm2106, %v1757, %v2234
        %v2363 = vsel %vm2107, %v1759, %v2235
        %v2364 = vsel %vm2108, %v1950, %v2236
        %v2365 = vsel %vm2109, %v1952, %v2237
        %v2366 = vsel %vm2110, %v1763, %v2238
        %v2367 = vsel %vm2111, %v1765, %v2239
        %v2368 = vsel %vm2112, %v1956, %v2240
        %v2369 = vsel %vm2113, %v1958, %v2241
        %v2370 = vsel %vm2114, %v1767, %v2242
        %v2371 = vsel %vm2115, %v1769, %v2243
        %v2372 = vsel %vm2116, %v1960, %v2244
        %v2373 = vsel %vm2117, %v1962, %v2245
        %v2374 = vsel %vm2118, %v1773, %v2246
        %v2375 = vsel %vm2119, %v1775, %v2247
        %v2376 = vsel %vm2120, %v1966, %v2248
        %v2377 = vsel %vm2121, %v1968, %v2249
        %v2378 = vsel %vm2122, %v1777, %v2250
        %v2379 = vsel %vm2123, %v1779, %v2251
        %v2380 = vsel %vm2124, %v1970, %v2252
        %v2381 = vsel %vm2125, %v1972, %v2253
        %v2382 = vsel %vm2126, %v1783, %v2254
        %v2383 = vsel %vm2127, %v1785, %v2255
        %v2384 = vsel %vm2128, %v1976, %v2256
        %v2385 = vsel %vm2129, %v1978, %v2257
        %v2386 = vsel %vm2130, %v1787, %v2258
        %v2387 = vsel %vm2131, %v1789, %v2259
        %v2388 = vsel %vm2132, %v1980, %v2260
        %v2389 = vsel %vm2133, %v1982, %v2261
        %v2390 = vsel %vm2134, %v1793, %v2262
        %v2391 = vsel %vm2135, %v1795, %v2263
        %v2392 = vsel %vm2136, %v1986, %v2264
        %v2393 = vsel %vm2137, %v1988, %v2265
        %v2394 = vsel %vm2138, %v1797, %v2266
        %v2395 = vsel %vm2139, %v1799, %v2267
        %v2396 = vsel %vm2140, %v1990, %v2268
        %v2397 = vsel %vm2141, %v1992, %v2269
        %v2398 = vsel %vm2142, %v1803, %v2270
        %v2399 = vsel %vm2143, %v1805, %v2271
        %v2400 = vsel %vm2144, %v1996, %v2272
        %v2401 = vsel %vm2145, %v1998, %v2273
        %v2402 = vsel %vm2146, %v1807, %v2274
        %v2403 = vsel %vm2147, %v1809, %v2275
        %v2404 = vsel %vm2148, %v2000, %v2276
        %v2405 = vsel %vm2149, %v2002, %v2277
        %v2406 = vsel %vm2150, %v1813, %v2278
        %v2407 = vsel %vm2151, %v1815, %v2279
        %v2408 = vsel %vm2152, %v2006, %v2280
        %v2409 = vsel %vm2153, %v2008, %v2281
        %v2410 = vsel %vm2154, %v1817, %v2282
        %v2411 = vsel %vm2155, %v1819, %v2283
        %v2412 = vsel %vm2156, %v2010, %v2284
        %v2413 = vsel %vm2157, %v2012, %v2285
        %v2414 = vsel %vm2158, %v1823, %v2286
        %v2415 = vsel %vm2159, %v1825, %v2287
        %v2416 = vsel %vm2160, %v2016, %v2288
        %v2417 = vsel %vm2161, %v2018, %v2289
        %v2418 = vsel %vm2162, %v1827, %v2290
        %v2419 = vsel %vm2163, %v1829, %v2291
        %v2420 = vsel %vm2164, %v2020, %v2292
        %v2421 = vsel %vm2165, %v2022, %v2293
        %v2422 = vsel %vm2166, %v1833, %v2294
        %v2423 = vsel %vm2167, %v1835, %v2295
        %v2424 = vsel %vm2168, %v2026, %v2296
        %v2425 = vsel %vm2169, %v2028, %v2297
        %v2426 = vsel %vm2170, %v1837, %v2298
        %v2427 = vsel %vm2171, %v1839, %v2299
        %v2428 = vsel %vm2172, %v2030, %v2300
        %v2429 = vsel %vm2173, %v2032, %v2301
        %v2430 = vsel %vm2174, %v1843, %v2302
        %v2431 = vsel %vm2175, %v1845, %v2303
        %v2432 = vsel %vm2176, %v2036, %v2304
        %v2433 = vsel %vm2177, %v2038, %v2305
        %v2434 = vsel %vm2178, %v1847, %v2306
        %v2435 = vsel %vm2179, %v1849, %v2307
        %v2436 = vsel %vm2180, %v2040, %v2308
        %v2437 = vsel %vm2181, %v2042, %v2309
        %v2438 = vsel %vm2182, %v1853, %v2310
        %v2439 = vsel %vm2183, %v1855, %v2311
        %v2440 = vsel %vm2184, %v2046, %v2312
        %v2441 = vsel %vm2185, %v2048, %v2313
        %v2442 = vsel %vm2186, %v1857, %v2314
        %v2443 = vsel %vm2187, %v1859, %v2315
        %v2444 = vsel %vm2188, %v2050, %v2316
        %v2445 = vsel %vm2189, %v2052, %v2317
        %v2446 = vsel %vm2190, %v1863, %v2318
        %v2447 = vsel %vm2191, %v1865, %v2319
        %v2448 = vsel %vm2192, %v2056, %v2320
        %v2449 = vsel %vm2193, %v2058, %v2321
        %v2450 = vsel %vm2194, %v1867, %v2322
        %v2451 = vsel %vm2195, %v1869, %v2323
        %v2452 = vsel %vm2196, %v2060, %v2324
        %v2453 = vsel %vm2197, %v2062, %v2325
        %v2454 = vsel %vm2198, %v1873, %v2326
        %v2455 = vsel %vm2199, %v1875, %v2327
        %v2456 = vsel %vm2200, %v2066, %v2328
        %v2457 = vsel %vm2201, %v2068, %v2329
        %v2458 = vsel %vm2202, %v1877, %v2330
        %v2459 = vsel %vm2203, %v1879, %v2331
        %v2460 = vsel %vm2204, %v2070, %v2332
        %v2461 = vsel %vm2205, %v2072, %v2333
        %v2462 = vsel %vm2206, %v1883, %v2334
        %v2463 = vsel %vm2207, %v1885, %v2335
        %v2464 = vsel %vm2208, %v2076, %v2336
        %v2465 = vsel %vm2209, %v2078, %v2337
        %v2466 = vsel %vm2210, %v1887, %v2338
        %v2467 = vsel %vm2211, %v1889, %v2339
        %v2468 = vsel %vm2212, %v2080, %v2340
        %v2469 = vsel %vm2213, %v2082, %v2341
        %v2470 = vsel %vm2214, %v1893, %v2342
        %v2471 = vsel %vm2215, %v1895, %v2343
        %v2472 = vsel %vm2216, %v2086, %v2344
        %v2473 = vsel %vm2217, %v2088, %v2345
        %v2474 = vsel %vm2218, %v1897, %v2346
        %v2475 = vsel %vm2219, %v1899, %v2347
        %v2476 = vsel %vm2220, %v2090, %v2348
        %v2477 = vsel %vm2221, %v2092, %v2349
        %v2478 = vpack.c.bf16 %v2354, %v2350
        %v2479 = vpack.c.bf16 %v2355, %v2351
        %v2480 = vpack.c.bf16 %v2356, %v2352
        %v2481 = vpack.c.bf16 %v2357, %v2353
        %v2482 = vpack.c.bf16 %v2362, %v2358
        %v2483 = vpack.c.bf16 %v2363, %v2359
        %v2484 = vpack.c.bf16 %v2364, %v2360
        %v2485 = vpack.c.bf16 %v2365, %v2361
        %v2486 = vpack.c.bf16 %v2370, %v2366
        %v2487 = vpack.c.bf16 %v2371, %v2367
        %v2488 = vpack.c.bf16 %v2372, %v2368
        %v2489 = vpack.c.bf16 %v2373, %v2369
        %v2490 = vpack.c.bf16 %v2378, %v2374
        %v2491 = vpack.c.bf16 %v2379, %v2375
        %v2492 = vpack.c.bf16 %v2380, %v2376
        %v2493 = vpack.c.bf16 %v2381, %v2377
        %v2494 = vpack.c.bf16 %v2386, %v2382
        %v2495 = vpack.c.bf16 %v2387, %v2383
        %v2496 = vpack.c.bf16 %v2388, %v2384
        %v2497 = vpack.c.bf16 %v2389, %v2385
        %v2498 = vpack.c.bf16 %v2394, %v2390
        %v2499 = vpack.c.bf16 %v2395, %v2391
        %v2500 = vpack.c.bf16 %v2396, %v2392
        %v2501 = vpack.c.bf16 %v2397, %v2393
        %v2502 = vpack.c.bf16 %v2402, %v2398
        %v2503 = vpack.c.bf16 %v2403, %v2399
        %v2504 = vpack.c.bf16 %v2404, %v2400
        %v2505 = vpack.c.bf16 %v2405, %v2401
        %v2506 = vpack.c.bf16 %v2410, %v2406
        %v2507 = vpack.c.bf16 %v2411, %v2407
        %v2508 = vpack.c.bf16 %v2412, %v2408
        %v2509 = vpack.c.bf16 %v2413, %v2409
        %v2510 = vpack.c.bf16 %v2418, %v2414
        %v2511 = vpack.c.bf16 %v2419, %v2415
        %v2512 = vpack.c.bf16 %v2420, %v2416
        %v2513 = vpack.c.bf16 %v2421, %v2417
        %v2514 = vpack.c.bf16 %v2426, %v2422
        %v2515 = vpack.c.bf16 %v2427, %v2423
        %v2516 = vpack.c.bf16 %v2428, %v2424
        %v2517 = vpack.c.bf16 %v2429, %v2425
        %v2518 = vpack.c.bf16 %v2434, %v2430
        %v2519 = vpack.c.bf16 %v2435, %v2431
        %v2520 = vpack.c.bf16 %v2436, %v2432
        %v2521 = vpack.c.bf16 %v2437, %v2433
        %v2522 = vpack.c.bf16 %v2442, %v2438
        %v2523 = vpack.c.bf16 %v2443, %v2439
        %v2524 = vpack.c.bf16 %v2444, %v2440
        %v2525 = vpack.c.bf16 %v2445, %v2441
        %v2526 = vpack.c.bf16 %v2450, %v2446
        %v2527 = vpack.c.bf16 %v2451, %v2447
        %v2528 = vpack.c.bf16 %v2452, %v2448
        %v2529 = vpack.c.bf16 %v2453, %v2449
        %v2530 = vpack.c.bf16 %v2458, %v2454
        %v2531 = vpack.c.bf16 %v2459, %v2455
        %v2532 = vpack.c.bf16 %v2460, %v2456
        %v2533 = vpack.c.bf16 %v2461, %v2457
        %v2534 = vpack.c.bf16 %v2466, %v2462
        %v2535 = vpack.c.bf16 %v2467, %v2463
        %v2536 = vpack.c.bf16 %v2468, %v2464
        %v2537 = vpack.c.bf16 %v2469, %v2465
        %v2538 = vpack.c.bf16 %v2474, %v2470
        %v2539 = vpack.c.bf16 %v2475, %v2471
        %v2540 = vpack.c.bf16 %v2476, %v2472
        %v2541 = vpack.c.bf16 %v2477, %v2473
        %v2542 = vld [vmem:[%s7] sm:$0xf]
        %v2543 = vld [vmem:[%s7 + $0x4] sm:$0xf]
        %v2544 = vld [vmem:[%s7 + $0x8] sm:$0xf]
        %v2545 = vld [vmem:[%s7 + $0xc] sm:$0xf]
        %v2546 = vld [vmem:[%s7 + $0x10] sm:$0xf]
        %v2547 = vld [vmem:[%s7 + $0x14] sm:$0xf]
        %v2548 = vld [vmem:[%s7 + $0x18] sm:$0xf]
        %v2549 = vld [vmem:[%s7 + $0x1c] sm:$0xf]
        %v2550 = vld [vmem:[%s7 + $0x20] sm:$0xf]
        %v2551 = vld [vmem:[%s7 + $0x24] sm:$0xf]
        %v2552 = vld [vmem:[%s7 + $0x28] sm:$0xf]
        %v2553 = vld [vmem:[%s7 + $0x2c] sm:$0xf]
        %v2554 = vld [vmem:[%s7 + $0x30] sm:$0xf]
        %v2555 = vld [vmem:[%s7 + $0x34] sm:$0xf]
        %v2556 = vld [vmem:[%s7 + $0x38] sm:$0xf]
        %v2557 = vld [vmem:[%s7 + $0x3c] sm:$0xf]
        %v2558 = vld [vmem:[%s7 + $0x40] sm:$0xf]
        %v2559 = vld [vmem:[%s7 + $0x44] sm:$0xf]
        %v2560 = vld [vmem:[%s7 + $0x48] sm:$0xf]
        %v2561 = vld [vmem:[%s7 + $0x4c] sm:$0xf]
        %v2562 = vld [vmem:[%s7 + $0x50] sm:$0xf]
        %v2563 = vld [vmem:[%s7 + $0x54] sm:$0xf]
        %v2564 = vld [vmem:[%s7 + $0x58] sm:$0xf]
        %v2565 = vld [vmem:[%s7 + $0x5c] sm:$0xf]
        %v2566 = vld [vmem:[%s7 + $0x60] sm:$0xf]
        %v2567 = vld [vmem:[%s7 + $0x64] sm:$0xf]
        %v2568 = vld [vmem:[%s7 + $0x68] sm:$0xf]
        %v2569 = vld [vmem:[%s7 + $0x6c] sm:$0xf]
        %v2570 = vld [vmem:[%s7 + $0x70] sm:$0xf]
        %v2571 = vld [vmem:[%s7 + $0x74] sm:$0xf]
        %v2572 = vld [vmem:[%s7 + $0x78] sm:$0xf]
        %v2573 = vld [vmem:[%s7 + $0x7c] sm:$0xf]
        %v2574 = vld [vmem:[%s7 + $0x80] sm:$0xf]
        %v2575 = vld [vmem:[%s7 + $0x84] sm:$0xf]
        %v2576 = vld [vmem:[%s7 + $0x88] sm:$0xf]
        %v2577 = vld [vmem:[%s7 + $0x8c] sm:$0xf]
        %v2578 = vld [vmem:[%s7 + $0x90] sm:$0xf]
        %v2579 = vld [vmem:[%s7 + $0x94] sm:$0xf]
        %v2580 = vld [vmem:[%s7 + $0x98] sm:$0xf]
        %v2581 = vld [vmem:[%s7 + $0x9c] sm:$0xf]
        %v2582 = vld [vmem:[%s7 + $0xa0] sm:$0xf]
        %v2583 = vld [vmem:[%s7 + $0xa4] sm:$0xf]
        %v2584 = vld [vmem:[%s7 + $0xa8] sm:$0xf]
        %v2585 = vld [vmem:[%s7 + $0xac] sm:$0xf]
        %v2586 = vld [vmem:[%s7 + $0xb0] sm:$0xf]
        %v2587 = vld [vmem:[%s7 + $0xb4] sm:$0xf]
        %v2588 = vld [vmem:[%s7 + $0xb8] sm:$0xf]
        %v2589 = vld [vmem:[%s7 + $0xbc] sm:$0xf]
        %v2590 = vld [vmem:[%s7 + $0xc0] sm:$0xf]
        %v2591 = vld [vmem:[%s7 + $0xc4] sm:$0xf]
        %v2592 = vld [vmem:[%s7 + $0xc8] sm:$0xf]
        %v2593 = vld [vmem:[%s7 + $0xcc] sm:$0xf]
        %v2594 = vld [vmem:[%s7 + $0xd0] sm:$0xf]
        %v2595 = vld [vmem:[%s7 + $0xd4] sm:$0xf]
        %v2596 = vld [vmem:[%s7 + $0xd8] sm:$0xf]
        %v2597 = vld [vmem:[%s7 + $0xdc] sm:$0xf]
        %v2598 = vld [vmem:[%s7 + $0xe0] sm:$0xf]
        %v2599 = vld [vmem:[%s7 + $0xe4] sm:$0xf]
        %v2600 = vld [vmem:[%s7 + $0xe8] sm:$0xf]
        %v2601 = vld [vmem:[%s7 + $0xec] sm:$0xf]
        %v2602 = vld [vmem:[%s7 + $0xf0] sm:$0xf]
        %v2603 = vld [vmem:[%s7 + $0xf4] sm:$0xf]
        %v2604 = vld [vmem:[%s7 + $0xf8] sm:$0xf]
        %v2605 = vld [vmem:[%s7 + $0xfc] sm:$0xf]
        %v2606 = vld [vmem:[%s8] sm:$0x1]
        %v2608 = vlaneseq
        %v2609 = vshrl.u32 %v2608, 7
        %v2610 = vsub.s32 0, %v2609
        %v2611 = vrot.slane %v2606, %v2610
        %v2677 = vunpack.c.l.b16 %v2542
        %v2678 = vunpack.c.l.b16 %v2543
        %v2679 = vunpack.c.l.b16 %v2544
        %v2680 = vunpack.c.l.b16 %v2545
        %v2681 = vunpack.c.l.b16 %v2546
        %v2682 = vunpack.c.l.b16 %v2547
        %v2683 = vunpack.c.l.b16 %v2548
        %v2684 = vunpack.c.l.b16 %v2549
        %v2685 = vunpack.c.l.b16 %v2550
        %v2686 = vunpack.c.l.b16 %v2551
        %v2687 = vunpack.c.l.b16 %v2552
        %v2688 = vunpack.c.l.b16 %v2553
        %v2689 = vunpack.c.l.b16 %v2554
        %v2690 = vunpack.c.l.b16 %v2555
        %v2691 = vunpack.c.l.b16 %v2556
        %v2692 = vunpack.c.l.b16 %v2557
        %v2693 = vunpack.c.l.b16 %v2558
        %v2694 = vunpack.c.l.b16 %v2559
        %v2695 = vunpack.c.l.b16 %v2560
        %v2696 = vunpack.c.l.b16 %v2561
        %v2697 = vunpack.c.l.b16 %v2562
        %v2698 = vunpack.c.l.b16 %v2563
        %v2699 = vunpack.c.l.b16 %v2564
        %v2700 = vunpack.c.l.b16 %v2565
        %v2701 = vunpack.c.l.b16 %v2566
        %v2702 = vunpack.c.l.b16 %v2567
        %v2703 = vunpack.c.l.b16 %v2568
        %v2704 = vunpack.c.l.b16 %v2569
        %v2705 = vunpack.c.l.b16 %v2570
        %v2706 = vunpack.c.l.b16 %v2571
        %v2707 = vunpack.c.l.b16 %v2572
        %v2708 = vunpack.c.l.b16 %v2573
        %v2709 = vunpack.c.l.b16 %v2574
        %v2710 = vunpack.c.l.b16 %v2575
        %v2711 = vunpack.c.l.b16 %v2576
        %v2712 = vunpack.c.l.b16 %v2577
        %v2713 = vunpack.c.l.b16 %v2578
        %v2714 = vunpack.c.l.b16 %v2579
        %v2715 = vunpack.c.l.b16 %v2580
        %v2716 = vunpack.c.l.b16 %v2581
        %v2717 = vunpack.c.l.b16 %v2582
        %v2718 = vunpack.c.l.b16 %v2583
        %v2719 = vunpack.c.l.b16 %v2584
        %v2720 = vunpack.c.l.b16 %v2585
        %v2721 = vunpack.c.l.b16 %v2586
        %v2722 = vunpack.c.l.b16 %v2587
        %v2723 = vunpack.c.l.b16 %v2588
        %v2724 = vunpack.c.l.b16 %v2589
        %v2725 = vunpack.c.l.b16 %v2590
        %v2726 = vunpack.c.l.b16 %v2591
        %v2727 = vunpack.c.l.b16 %v2592
        %v2728 = vunpack.c.l.b16 %v2593
        %v2729 = vunpack.c.l.b16 %v2594
        %v2730 = vunpack.c.l.b16 %v2595
        %v2731 = vunpack.c.l.b16 %v2596
        %v2732 = vunpack.c.l.b16 %v2597
        %v2733 = vunpack.c.l.b16 %v2598
        %v2734 = vunpack.c.l.b16 %v2599
        %v2735 = vunpack.c.l.b16 %v2600
        %v2736 = vunpack.c.l.b16 %v2601
        %v2737 = vunpack.c.l.b16 %v2602
        %v2738 = vunpack.c.l.b16 %v2603
        %v2739 = vunpack.c.l.b16 %v2604
        %v2740 = vunpack.c.l.b16 %v2605
        %v2741 = vpack.c.b16 %v2678, %v2677
        %v2742 = vpack.c.b16 %v2680, %v2679
        %v2743 = vpack.c.b16 %v2682, %v2681
        %v2744 = vpack.c.b16 %v2684, %v2683
        %v2745 = vpack.c.b16 %v2686, %v2685
        %v2746 = vpack.c.b16 %v2688, %v2687
        %v2747 = vpack.c.b16 %v2690, %v2689
        %v2748 = vpack.c.b16 %v2692, %v2691
        %v2749 = vpack.c.b16 %v2694, %v2693
        %v2750 = vpack.c.b16 %v2696, %v2695
        %v2751 = vpack.c.b16 %v2698, %v2697
        %v2752 = vpack.c.b16 %v2700, %v2699
        %v2753 = vpack.c.b16 %v2702, %v2701
        %v2754 = vpack.c.b16 %v2704, %v2703
        %v2755 = vpack.c.b16 %v2706, %v2705
        %v2756 = vpack.c.b16 %v2708, %v2707
        %v2757 = vpack.c.b16 %v2710, %v2709
        %v2758 = vpack.c.b16 %v2712, %v2711
        %v2759 = vpack.c.b16 %v2714, %v2713
        %v2760 = vpack.c.b16 %v2716, %v2715
        %v2761 = vpack.c.b16 %v2718, %v2717
        %v2762 = vpack.c.b16 %v2720, %v2719
        %v2763 = vpack.c.b16 %v2722, %v2721
        %v2764 = vpack.c.b16 %v2724, %v2723
        %v2765 = vpack.c.b16 %v2726, %v2725
        %v2766 = vpack.c.b16 %v2728, %v2727
        %v2767 = vpack.c.b16 %v2730, %v2729
        %v2768 = vpack.c.b16 %v2732, %v2731
        %v2769 = vpack.c.b16 %v2734, %v2733
        %v2770 = vpack.c.b16 %v2736, %v2735
        %v2771 = vpack.c.b16 %v2738, %v2737
        %v2772 = vpack.c.b16 %v2740, %v2739
        %2805 = vmatprep.subr.bf16.mxu0 0
        %2806 = vmatpush1.bf16.msra.mxu0 %v2748
        %2807 = vmatprep.subr.bf16.mxu0 0
        %2808 = vmatpush1.bf16.msra.mxu0 %v2747
        %2809 = vmatprep.subr.bf16.mxu0 0
        %2810 = vmatpush1.bf16.msra.mxu0 %v2746
        %2811 = vmatprep.subr.bf16.mxu0 0
        %2812 = vmatpush1.bf16.msra.mxu0 %v2745
        %2813 = vmatprep.subr.bf16.mxu0 0
        %2814 = vmatpush1.bf16.msra.mxu0 %v2744
        %2815 = vmatprep.subr.bf16.mxu0 0
        %2816 = vmatpush1.bf16.msra.mxu0 %v2743
        %2817 = vmatprep.subr.bf16.mxu0 0
        %2818 = vmatpush1.bf16.msra.mxu0 %v2742
        %2819 = vmatprep.subr.bf16.mxu0 0
        %2820 = vmatpush1.bf16.msra.mxu0 %v2741
        %2821 = vmatprep.subr.bf16.mxu0 0
        %2822 = vmatpush2.bf16.msra.mxu0 %v2756
        %2823 = vmatprep.subr.bf16.mxu0 0
        %2824 = vmatpush2.bf16.msra.mxu0 %v2755
        %2825 = vmatprep.subr.bf16.mxu0 0
        %2826 = vmatpush2.bf16.msra.mxu0 %v2754
        %2827 = vmatprep.subr.bf16.mxu0 0
        %2828 = vmatpush2.bf16.msra.mxu0 %v2753
        %2829 = vmatprep.subr.bf16.mxu0 0
        %2830 = vmatpush2.bf16.msra.mxu0 %v2752
        %2831 = vmatprep.subr.bf16.mxu0 0
        %2832 = vmatpush2.bf16.msra.mxu0 %v2751
        %2833 = vmatprep.subr.bf16.mxu0 0
        %2834 = vmatpush2.bf16.msra.mxu0 %v2750
        %2835 = vmatprep.subr.bf16.mxu0 0
        %2836 = vmatpush2.bf16.msra.mxu0 %v2749
        %2837 = vmatprep.mubr.bf16.mxu0 %v2479
        %2838 = vmatmul.mubr.bf16.gmra.mxu0 %v2478
        %v2839 = vpop.f32.mrf.mxu0
        %v2840 = vadd.f32 %v2611, %v2839
        %v2841 = vpop.f32.mrf.mxu0
        %v2842 = vpop.f32.mrf.mxu0
        %v2843 = vadd.f32 %v2611, %v2842
        %v2844 = vpop.f32.mrf.mxu0
        %2845 = vmatprep.mubr.bf16.mxu0 %v2483
        %2846 = vmatmul.mubr.bf16.gmra.mxu0 %v2482
        %v2847 = vpop.f32.mrf.mxu0
        %v2848 = vadd.f32 %v2611, %v2847
        %v2849 = vpop.f32.mrf.mxu0
        %v2850 = vpop.f32.mrf.mxu0
        %v2851 = vadd.f32 %v2611, %v2850
        %v2852 = vpop.f32.mrf.mxu0
        %2853 = vmatprep.mubr.bf16.mxu0 %v2487
        %2854 = vmatmul.mubr.bf16.gmra.mxu0 %v2486
        %v2855 = vpop.f32.mrf.mxu0
        %v2856 = vadd.f32 %v2611, %v2855
        %v2857 = vpop.f32.mrf.mxu0
        %v2858 = vpop.f32.mrf.mxu0
        %v2859 = vadd.f32 %v2611, %v2858
        %v2860 = vpop.f32.mrf.mxu0
        %2861 = vmatprep.mubr.bf16.mxu0 %v2491
        %2862 = vmatmul.mubr.bf16.gmra.mxu0 %v2490
        %v2863 = vpop.f32.mrf.mxu0
        %v2864 = vadd.f32 %v2611, %v2863
        %v2865 = vpop.f32.mrf.mxu0
        %v2866 = vpop.f32.mrf.mxu0
        %v2867 = vadd.f32 %v2611, %v2866
        %v2868 = vpop.f32.mrf.mxu0
        %2869 = vmatprep.mubr.bf16.mxu0 %v2495
        %2870 = vmatmul.mubr.bf16.gmra.mxu0 %v2494
        %v2871 = vpop.f32.mrf.mxu0
        %v2872 = vadd.f32 %v2611, %v2871
        %v2873 = vpop.f32.mrf.mxu0
        %v2874 = vpop.f32.mrf.mxu0
        %v2875 = vadd.f32 %v2611, %v2874
        %v2876 = vpop.f32.mrf.mxu0
        %2877 = vmatprep.mubr.bf16.mxu0 %v2499
        %2878 = vmatmul.mubr.bf16.gmra.mxu0 %v2498
        %v2879 = vpop.f32.mrf.mxu0
        %v2880 = vadd.f32 %v2611, %v2879
        %v2881 = vpop.f32.mrf.mxu0
        %v2882 = vpop.f32.mrf.mxu0
        %v2883 = vadd.f32 %v2611, %v2882
        %v2884 = vpop.f32.mrf.mxu0
        %2885 = vmatprep.mubr.bf16.mxu0 %v2503
        %2886 = vmatmul.mubr.bf16.gmra.mxu0 %v2502
        %v2887 = vpop.f32.mrf.mxu0
        %v2888 = vadd.f32 %v2611, %v2887
        %v2889 = vpop.f32.mrf.mxu0
        %v2890 = vpop.f32.mrf.mxu0
        %v2891 = vadd.f32 %v2611, %v2890
        %v2892 = vpop.f32.mrf.mxu0
        %2893 = vmatprep.mubr.bf16.mxu0 %v2507
        %2894 = vmatmul.mubr.bf16.gmra.mxu0 %v2506
        %v2895 = vpop.f32.mrf.mxu0
        %v2896 = vadd.f32 %v2611, %v2895
        %v2897 = vpop.f32.mrf.mxu0
        %v2898 = vpop.f32.mrf.mxu0
        %v2899 = vadd.f32 %v2611, %v2898
        %v2900 = vpop.f32.mrf.mxu0
        %2901 = vmatprep.mubr.bf16.mxu0 %v2511
        %2902 = vmatmul.mubr.bf16.gmra.mxu0 %v2510
        %v2903 = vpop.f32.mrf.mxu0
        %v2904 = vadd.f32 %v2611, %v2903
        %v2905 = vpop.f32.mrf.mxu0
        %v2906 = vpop.f32.mrf.mxu0
        %v2907 = vadd.f32 %v2611, %v2906
        %v2908 = vpop.f32.mrf.mxu0
        %2909 = vmatprep.mubr.bf16.mxu0 %v2515
        %2910 = vmatmul.mubr.bf16.gmra.mxu0 %v2514
        %v2911 = vpop.f32.mrf.mxu0
        %v2912 = vadd.f32 %v2611, %v2911
        %v2913 = vpop.f32.mrf.mxu0
        %v2914 = vpop.f32.mrf.mxu0
        %v2915 = vadd.f32 %v2611, %v2914
        %v2916 = vpop.f32.mrf.mxu0
        %2917 = vmatprep.mubr.bf16.mxu0 %v2519
        %2918 = vmatmul.mubr.bf16.gmra.mxu0 %v2518
        %v2919 = vpop.f32.mrf.mxu0
        %v2920 = vadd.f32 %v2611, %v2919
        %v2921 = vpop.f32.mrf.mxu0
        %v2922 = vpop.f32.mrf.mxu0
        %v2923 = vadd.f32 %v2611, %v2922
        %v2924 = vpop.f32.mrf.mxu0
        %2925 = vmatprep.mubr.bf16.mxu0 %v2523
        %2926 = vmatmul.mubr.bf16.gmra.mxu0 %v2522
        %v2927 = vpop.f32.mrf.mxu0
        %v2928 = vadd.f32 %v2611, %v2927
        %v2929 = vpop.f32.mrf.mxu0
        %v2930 = vpop.f32.mrf.mxu0
        %v2931 = vadd.f32 %v2611, %v2930
        %v2932 = vpop.f32.mrf.mxu0
        %2933 = vmatprep.mubr.bf16.mxu0 %v2527
        %2934 = vmatmul.mubr.bf16.gmra.mxu0 %v2526
        %v2935 = vpop.f32.mrf.mxu0
        %v2936 = vadd.f32 %v2611, %v2935
        %v2937 = vpop.f32.mrf.mxu0
        %v2938 = vpop.f32.mrf.mxu0
        %v2939 = vadd.f32 %v2611, %v2938
        %v2940 = vpop.f32.mrf.mxu0
        %2941 = vmatprep.mubr.bf16.mxu0 %v2531
        %2942 = vmatmul.mubr.bf16.gmra.mxu0 %v2530
        %v2943 = vpop.f32.mrf.mxu0
        %v2944 = vadd.f32 %v2611, %v2943
        %v2945 = vpop.f32.mrf.mxu0
        %v2946 = vpop.f32.mrf.mxu0
        %v2947 = vadd.f32 %v2611, %v2946
        %v2948 = vpop.f32.mrf.mxu0
        %2949 = vmatprep.mubr.bf16.mxu0 %v2535
        %2950 = vmatmul.mubr.bf16.gmra.mxu0 %v2534
        %v2951 = vpop.f32.mrf.mxu0
        %v2952 = vadd.f32 %v2611, %v2951
        %v2953 = vpop.f32.mrf.mxu0
        %v2954 = vpop.f32.mrf.mxu0
        %v2955 = vadd.f32 %v2611, %v2954
        %v2956 = vpop.f32.mrf.mxu0
        %2957 = vmatprep.mubr.bf16.mxu0 %v2539
        %2958 = vmatmul.mubr.bf16.gmra.mxu0 %v2538
        %v2959 = vpop.f32.mrf.mxu0
        %v2960 = vadd.f32 %v2611, %v2959
        %v2961 = vpop.f32.mrf.mxu0
        %v2962 = vpop.f32.mrf.mxu0
        %v2963 = vadd.f32 %v2611, %v2962
        %v2964 = vpop.f32.mrf.mxu0
        %2965 = vdwg.mxu0
        %2966 = vmatprep.subr.bf16.mxu0 0
        %2967 = vmatpush1.bf16.msra.mxu0 %v2764
        %2968 = vmatprep.subr.bf16.mxu0 0
        %2969 = vmatpush1.bf16.msra.mxu0 %v2763
        %2970 = vmatprep.subr.bf16.mxu0 0
        %2971 = vmatpush1.bf16.msra.mxu0 %v2762
        %2972 = vmatprep.subr.bf16.mxu0 0
        %2973 = vmatpush1.bf16.msra.mxu0 %v2761
        %2974 = vmatprep.subr.bf16.mxu0 0
        %2975 = vmatpush1.bf16.msra.mxu0 %v2760
        %2976 = vmatprep.subr.bf16.mxu0 0
        %2977 = vmatpush1.bf16.msra.mxu0 %v2759
        %2978 = vmatprep.subr.bf16.mxu0 0
        %2979 = vmatpush1.bf16.msra.mxu0 %v2758
        %2980 = vmatprep.subr.bf16.mxu0 0
        %2981 = vmatpush1.bf16.msra.mxu0 %v2757
        %2982 = vmatprep.subr.bf16.mxu0 0
        %2983 = vmatpush2.bf16.msra.mxu0 %v2772
        %2984 = vmatprep.subr.bf16.mxu0 0
        %2985 = vmatpush2.bf16.msra.mxu0 %v2771
        %2986 = vmatprep.subr.bf16.mxu0 0
        %2987 = vmatpush2.bf16.msra.mxu0 %v2770
        %2988 = vmatprep.subr.bf16.mxu0 0
        %2989 = vmatpush2.bf16.msra.mxu0 %v2769
        %2990 = vmatprep.subr.bf16.mxu0 0
        %2991 = vmatpush2.bf16.msra.mxu0 %v2768
        %2992 = vmatprep.subr.bf16.mxu0 0
        %2993 = vmatpush2.bf16.msra.mxu0 %v2767
        %2994 = vmatprep.subr.bf16.mxu0 0
        %2995 = vmatpush2.bf16.msra.mxu0 %v2766
        %2996 = vmatprep.subr.bf16.mxu0 0
        %2997 = vmatpush2.bf16.msra.mxu0 %v2765
        %2998 = vmatprep.mubr.bf16.mxu0 %v2481
        %2999 = vmatmul.mubr.bf16.gmra.mxu0 %v2480
        %v3000 = vpop.f32.mrf.mxu0
        %v3001 = vadd.f32 %v2840, %v3000
        %v3002 = vpop.f32.mrf.mxu0
        %v3003 = vpop.f32.mrf.mxu0
        %v3004 = vadd.f32 %v2843, %v3003
        %v3005 = vpop.f32.mrf.mxu0
        %3006 = vmatprep.mubr.bf16.mxu0 %v2485
        %3007 = vmatmul.mubr.bf16.gmra.mxu0 %v2484
        %v3008 = vpop.f32.mrf.mxu0
        %v3009 = vadd.f32 %v2848, %v3008
        %v3010 = vpop.f32.mrf.mxu0
        %v3011 = vpop.f32.mrf.mxu0
        %v3012 = vadd.f32 %v2851, %v3011
        %v3013 = vpop.f32.mrf.mxu0
        %3014 = vmatprep.mubr.bf16.mxu0 %v2489
        %3015 = vmatmul.mubr.bf16.gmra.mxu0 %v2488
        %v3016 = vpop.f32.mrf.mxu0
        %v3017 = vadd.f32 %v2856, %v3016
        %v3018 = vpop.f32.mrf.mxu0
        %v3019 = vpop.f32.mrf.mxu0
        %v3020 = vadd.f32 %v2859, %v3019
        %v3021 = vpop.f32.mrf.mxu0
        %3022 = vmatprep.mubr.bf16.mxu0 %v2493
        %3023 = vmatmul.mubr.bf16.gmra.mxu0 %v2492
        %v3024 = vpop.f32.mrf.mxu0
        %v3025 = vadd.f32 %v2864, %v3024
        %v3026 = vpop.f32.mrf.mxu0
        %v3027 = vpop.f32.mrf.mxu0
        %v3028 = vadd.f32 %v2867, %v3027
        %v3029 = vpop.f32.mrf.mxu0
        %3030 = vmatprep.mubr.bf16.mxu0 %v2497
        %3031 = vmatmul.mubr.bf16.gmra.mxu0 %v2496
        %v3032 = vpop.f32.mrf.mxu0
        %v3033 = vadd.f32 %v2872, %v3032
        %v3034 = vpop.f32.mrf.mxu0
        %v3035 = vpop.f32.mrf.mxu0
        %v3036 = vadd.f32 %v2875, %v3035
        %v3037 = vpop.f32.mrf.mxu0
        %3038 = vmatprep.mubr.bf16.mxu0 %v2501
        %3039 = vmatmul.mubr.bf16.gmra.mxu0 %v2500
        %v3040 = vpop.f32.mrf.mxu0
        %v3041 = vadd.f32 %v2880, %v3040
        %v3042 = vpop.f32.mrf.mxu0
        %v3043 = vpop.f32.mrf.mxu0
        %v3044 = vadd.f32 %v2883, %v3043
        %v3045 = vpop.f32.mrf.mxu0
        %3046 = vmatprep.mubr.bf16.mxu0 %v2505
        %3047 = vmatmul.mubr.bf16.gmra.mxu0 %v2504
        %v3048 = vpop.f32.mrf.mxu0
        %v3049 = vadd.f32 %v2888, %v3048
        %v3050 = vpop.f32.mrf.mxu0
        %v3051 = vpop.f32.mrf.mxu0
        %v3052 = vadd.f32 %v2891, %v3051
        %v3053 = vpop.f32.mrf.mxu0
        %3054 = vmatprep.mubr.bf16.mxu0 %v2509
        %3055 = vmatmul.mubr.bf16.gmra.mxu0 %v2508
        %v3056 = vpop.f32.mrf.mxu0
        %v3057 = vadd.f32 %v2896, %v3056
        %v3058 = vpop.f32.mrf.mxu0
        %v3059 = vpop.f32.mrf.mxu0
        %v3060 = vadd.f32 %v2899, %v3059
        %v3061 = vpop.f32.mrf.mxu0
        %3062 = vmatprep.mubr.bf16.mxu0 %v2513
        %3063 = vmatmul.mubr.bf16.gmra.mxu0 %v2512
        %v3064 = vpop.f32.mrf.mxu0
        %v3065 = vadd.f32 %v2904, %v3064
        %v3066 = vpop.f32.mrf.mxu0
        %v3067 = vpop.f32.mrf.mxu0
        %v3068 = vadd.f32 %v2907, %v3067
        %v3069 = vpop.f32.mrf.mxu0
        %3070 = vmatprep.mubr.bf16.mxu0 %v2517
        %3071 = vmatmul.mubr.bf16.gmra.mxu0 %v2516
        %v3072 = vpop.f32.mrf.mxu0
        %v3073 = vadd.f32 %v2912, %v3072
        %v3074 = vpop.f32.mrf.mxu0
        %v3075 = vpop.f32.mrf.mxu0
        %v3076 = vadd.f32 %v2915, %v3075
        %v3077 = vpop.f32.mrf.mxu0
        %3078 = vmatprep.mubr.bf16.mxu0 %v2521
        %3079 = vmatmul.mubr.bf16.gmra.mxu0 %v2520
        %v3080 = vpop.f32.mrf.mxu0
        %v3081 = vadd.f32 %v2920, %v3080
        %v3082 = vpop.f32.mrf.mxu0
        %v3083 = vpop.f32.mrf.mxu0
        %v3084 = vadd.f32 %v2923, %v3083
        %v3085 = vpop.f32.mrf.mxu0
        %3086 = vmatprep.mubr.bf16.mxu0 %v2525
        %3087 = vmatmul.mubr.bf16.gmra.mxu0 %v2524
        %v3088 = vpop.f32.mrf.mxu0
        %v3089 = vadd.f32 %v2928, %v3088
        %v3090 = vpop.f32.mrf.mxu0
        %v3091 = vpop.f32.mrf.mxu0
        %v3092 = vadd.f32 %v2931, %v3091
        %v3093 = vpop.f32.mrf.mxu0
        %3094 = vmatprep.mubr.bf16.mxu0 %v2529
        %3095 = vmatmul.mubr.bf16.gmra.mxu0 %v2528
        %v3096 = vpop.f32.mrf.mxu0
        %v3097 = vadd.f32 %v2936, %v3096
        %v3098 = vpop.f32.mrf.mxu0
        %v3099 = vpop.f32.mrf.mxu0
        %v3100 = vadd.f32 %v2939, %v3099
        %v3101 = vpop.f32.mrf.mxu0
        %3102 = vmatprep.mubr.bf16.mxu0 %v2533
        %3103 = vmatmul.mubr.bf16.gmra.mxu0 %v2532
        %v3104 = vpop.f32.mrf.mxu0
        %v3105 = vadd.f32 %v2944, %v3104
        %v3106 = vpop.f32.mrf.mxu0
        %v3107 = vpop.f32.mrf.mxu0
        %v3108 = vadd.f32 %v2947, %v3107
        %v3109 = vpop.f32.mrf.mxu0
        %3110 = vmatprep.mubr.bf16.mxu0 %v2537
        %3111 = vmatmul.mubr.bf16.gmra.mxu0 %v2536
        %v3112 = vpop.f32.mrf.mxu0
        %v3113 = vadd.f32 %v2952, %v3112
        %v3114 = vpop.f32.mrf.mxu0
        %v3115 = vpop.f32.mrf.mxu0
        %v3116 = vadd.f32 %v2955, %v3115
        %v3117 = vpop.f32.mrf.mxu0
        %3118 = vmatprep.mubr.bf16.mxu0 %v2541
        %3119 = vmatmul.mubr.bf16.gmra.mxu0 %v2540
        %v3120 = vpop.f32.mrf.mxu0
        %v3121 = vadd.f32 %v2960, %v3120
        %v3122 = vpop.f32.mrf.mxu0
        %v3123 = vpop.f32.mrf.mxu0
        %v3124 = vadd.f32 %v2963, %v3123
        %v3125 = vpop.f32.mrf.mxu0
        %3126 = vdwg.mxu0
        %vm3127 = vcmp.gt.f32.partialorder %v3001, 0.0
        %vm3128 = vcmp.gt.f32.partialorder %v3004, 0.0
        %vm3129 = vcmp.gt.f32.partialorder %v3009, 0.0
        %vm3130 = vcmp.gt.f32.partialorder %v3012, 0.0
        %vm3131 = vcmp.gt.f32.partialorder %v3017, 0.0
        %vm3132 = vcmp.gt.f32.partialorder %v3020, 0.0
        %vm3133 = vcmp.gt.f32.partialorder %v3025, 0.0
        %vm3134 = vcmp.gt.f32.partialorder %v3028, 0.0
        %vm3135 = vcmp.gt.f32.partialorder %v3033, 0.0
        %vm3136 = vcmp.gt.f32.partialorder %v3036, 0.0
        %vm3137 = vcmp.gt.f32.partialorder %v3041, 0.0
        %vm3138 = vcmp.gt.f32.partialorder %v3044, 0.0
        %vm3139 = vcmp.gt.f32.partialorder %v3049, 0.0
        %vm3140 = vcmp.gt.f32.partialorder %v3052, 0.0
        %vm3141 = vcmp.gt.f32.partialorder %v3057, 0.0
        %vm3142 = vcmp.gt.f32.partialorder %v3060, 0.0
        %vm3143 = vcmp.gt.f32.partialorder %v3065, 0.0
        %vm3144 = vcmp.gt.f32.partialorder %v3068, 0.0
        %vm3145 = vcmp.gt.f32.partialorder %v3073, 0.0
        %vm3146 = vcmp.gt.f32.partialorder %v3076, 0.0
        %vm3147 = vcmp.gt.f32.partialorder %v3081, 0.0
        %vm3148 = vcmp.gt.f32.partialorder %v3084, 0.0
        %vm3149 = vcmp.gt.f32.partialorder %v3089, 0.0
        %vm3150 = vcmp.gt.f32.partialorder %v3092, 0.0
        %vm3151 = vcmp.gt.f32.partialorder %v3097, 0.0
        %vm3152 = vcmp.gt.f32.partialorder %v3100, 0.0
        %vm3153 = vcmp.gt.f32.partialorder %v3105, 0.0
        %vm3154 = vcmp.gt.f32.partialorder %v3108, 0.0
        %vm3155 = vcmp.gt.f32.partialorder %v3113, 0.0
        %vm3156 = vcmp.gt.f32.partialorder %v3116, 0.0
        %vm3157 = vcmp.gt.f32.partialorder %v3121, 0.0
        %vm3158 = vcmp.gt.f32.partialorder %v3124, 0.0
        %v3159 = vmul.f32 %v3001, 0.01
        %v3160 = vmul.f32 %v3004, 0.01
        %v3161 = vmul.f32 %v3009, 0.01
        %v3162 = vmul.f32 %v3012, 0.01
        %v3163 = vmul.f32 %v3017, 0.01
        %v3164 = vmul.f32 %v3020, 0.01
        %v3165 = vmul.f32 %v3025, 0.01
        %v3166 = vmul.f32 %v3028, 0.01
        %v3167 = vmul.f32 %v3033, 0.01
        %v3168 = vmul.f32 %v3036, 0.01
        %v3169 = vmul.f32 %v3041, 0.01
        %v3170 = vmul.f32 %v3044, 0.01
        %v3171 = vmul.f32 %v3049, 0.01
        %v3172 = vmul.f32 %v3052, 0.01
        %v3173 = vmul.f32 %v3057, 0.01
        %v3174 = vmul.f32 %v3060, 0.01
        %v3175 = vmul.f32 %v3065, 0.01
        %v3176 = vmul.f32 %v3068, 0.01
        %v3177 = vmul.f32 %v3073, 0.01
        %v3178 = vmul.f32 %v3076, 0.01
        %v3179 = vmul.f32 %v3081, 0.01
        %v3180 = vmul.f32 %v3084, 0.01
        %v3181 = vmul.f32 %v3089, 0.01
        %v3182 = vmul.f32 %v3092, 0.01
        %v3183 = vmul.f32 %v3097, 0.01
        %v3184 = vmul.f32 %v3100, 0.01
        %v3185 = vmul.f32 %v3105, 0.01
        %v3186 = vmul.f32 %v3108, 0.01
        %v3187 = vmul.f32 %v3113, 0.01
        %v3188 = vmul.f32 %v3116, 0.01
        %v3189 = vmul.f32 %v3121, 0.01
        %v3190 = vmul.f32 %v3124, 0.01
        %v3191 = vsel %vm3127, %v3001, %v3159
        %v3192 = vsel %vm3128, %v3004, %v3160
        %v3193 = vsel %vm3129, %v3009, %v3161
        %v3194 = vsel %vm3130, %v3012, %v3162
        %v3195 = vsel %vm3131, %v3017, %v3163
        %v3196 = vsel %vm3132, %v3020, %v3164
        %v3197 = vsel %vm3133, %v3025, %v3165
        %v3198 = vsel %vm3134, %v3028, %v3166
        %v3199 = vsel %vm3135, %v3033, %v3167
        %v3200 = vsel %vm3136, %v3036, %v3168
        %v3201 = vsel %vm3137, %v3041, %v3169
        %v3202 = vsel %vm3138, %v3044, %v3170
        %v3203 = vsel %vm3139, %v3049, %v3171
        %v3204 = vsel %vm3140, %v3052, %v3172
        %v3205 = vsel %vm3141, %v3057, %v3173
        %v3206 = vsel %vm3142, %v3060, %v3174
        %v3207 = vsel %vm3143, %v3065, %v3175
        %v3208 = vsel %vm3144, %v3068, %v3176
        %v3209 = vsel %vm3145, %v3073, %v3177
        %v3210 = vsel %vm3146, %v3076, %v3178
        %v3211 = vsel %vm3147, %v3081, %v3179
        %v3212 = vsel %vm3148, %v3084, %v3180
        %v3213 = vsel %vm3149, %v3089, %v3181
        %v3214 = vsel %vm3150, %v3092, %v3182
        %v3215 = vsel %vm3151, %v3097, %v3183
        %v3216 = vsel %vm3152, %v3100, %v3184
        %v3217 = vsel %vm3153, %v3105, %v3185
        %v3218 = vsel %vm3154, %v3108, %v3186
        %v3219 = vsel %vm3155, %v3113, %v3187
        %v3220 = vsel %vm3156, %v3116, %v3188
        %v3221 = vsel %vm3157, %v3121, %v3189
        %v3222 = vsel %vm3158, %v3124, %v3190
        %3223 = vst [vmem:[%s361] sm:$0xff] %v3191
        %3224 = vst [vmem:[%s361 + $0x8] sm:$0xff] %v3192
        %3225 = vst [vmem:[%s361 + $0x10] sm:$0xff] %v3193
        %3226 = vst [vmem:[%s361 + $0x18] sm:$0xff] %v3194
        %3227 = vst [vmem:[%s361 + $0x20] sm:$0xff] %v3195
        %3228 = vst [vmem:[%s361 + $0x28] sm:$0xff] %v3196
        %3229 = vst [vmem:[%s361 + $0x30] sm:$0xff] %v3197
        %3230 = vst [vmem:[%s361 + $0x38] sm:$0xff] %v3198
        %3231 = vst [vmem:[%s361 + $0x40] sm:$0xff] %v3199
        %3232 = vst [vmem:[%s361 + $0x48] sm:$0xff] %v3200
        %3233 = vst [vmem:[%s361 + $0x50] sm:$0xff] %v3201
        %3234 = vst [vmem:[%s361 + $0x58] sm:$0xff] %v3202
        %3235 = vst [vmem:[%s361 + $0x60] sm:$0xff] %v3203
        %3236 = vst [vmem:[%s361 + $0x68] sm:$0xff] %v3204
        %3237 = vst [vmem:[%s361 + $0x70] sm:$0xff] %v3205
        %3238 = vst [vmem:[%s361 + $0x78] sm:$0xff] %v3206
        %3239 = vst [vmem:[%s361 + $0x80] sm:$0xff] %v3207
        %3240 = vst [vmem:[%s361 + $0x88] sm:$0xff] %v3208
        %3241 = vst [vmem:[%s361 + $0x90] sm:$0xff] %v3209
        %3242 = vst [vmem:[%s361 + $0x98] sm:$0xff] %v3210
        %3243 = vst [vmem:[%s361 + $0xa0] sm:$0xff] %v3211
        %3244 = vst [vmem:[%s361 + $0xa8] sm:$0xff] %v3212
        %3245 = vst [vmem:[%s361 + $0xb0] sm:$0xff] %v3213
        %3246 = vst [vmem:[%s361 + $0xb8] sm:$0xff] %v3214
        %3247 = vst [vmem:[%s361 + $0xc0] sm:$0xff] %v3215
        %3248 = vst [vmem:[%s361 + $0xc8] sm:$0xff] %v3216
        %3249 = vst [vmem:[%s361 + $0xd0] sm:$0xff] %v3217
        %3250 = vst [vmem:[%s361 + $0xd8] sm:$0xff] %v3218
        %3251 = vst [vmem:[%s361 + $0xe0] sm:$0xff] %v3219
        %3252 = vst [vmem:[%s361 + $0xe8] sm:$0xff] %v3220
        %3253 = vst [vmem:[%s361 + $0xf0] sm:$0xff] %v3221
        %3254 = vst [vmem:[%s361 + $0xf8] sm:$0xff] %v3222
        %s3255 = smul.u32 32, %s25
        %p3256 = scmp.lt.s32.totalorder %s3255, 63
        %s3257 = scalar_select %p3256, %s3255, 63
        %s3258 = smul.addr %s3257, 8
        %s3259 = scalar_lea.vmem %s9, %s3258
        %s3260 = sand.u32 %s253, 1
        %s3261 = scalar_lea.sflag [#allocation3], %s3260
        %s3262 = sand.u32 %s253, 1
        %s3263 = smul.addr %s3262, 256
        %s3264 = scalar_lea.vmem [#allocation2], %s3263
        // Predicated region
        $region57: #{autoencoder_forward.1} parent=55 // pred_check
          %p3265 = pneg %p237
        $region58: #{autoencoder_forward.1} parent=55 // pred_check_branch
          %3267 = sbr.rel (%p3265) target = $region60
        $region59: #{autoencoder_forward.1} parent=55 // pred_region
          %s3268 = smul.u32 32, %s25
        $region60: #{autoencoder_forward.1} parent=55 // pred_fallthru
          _
        // Predicated region
        $region61: #{autoencoder_forward.1} parent=55 // pred_check
          %p3269 = pneg %p263
        $region62: #{autoencoder_forward.1} parent=55 // pred_check_branch
          %3271 = sbr.rel (%p3269) target = $region64
        $region63: #{autoencoder_forward.1} parent=55 // pred_region
          %s3272 = smul.u32 32, %s25
          %s3274 = ssub.s32 4096, 4096
          %3275 = vsyncadd %s3261, %s3274
          %s3276 = smul.addr %s3272, 128
          %s3277 = scalar_lea.hbm %s10, %s3276
          %s3278 = sshll.u32 %s3264, 4
          %s3279 = int_to_ptr.vmem [resolvable:$true] %s3278
          %3284 = dma.vmem_to_hbm [thread:$0]  %s3279, 4096, %s3277, %s3261, 128, 128, 8
        $region64: #{autoencoder_forward.1} parent=55 // pred_fallthru
          _
      $region56: #{autoencoder_forward.1} parent=5 // pred_fallthru
        _
      %p3285 = scmp.le.s32.totalorder 2, %s20
      // Predicated region
      $region65: #{autoencoder_forward.1} parent=5 // pred_check
        %p3286 = pneg %p3285
      $region66: #{autoencoder_forward.1} parent=5 // pred_check_branch
        %3288 = sbr.rel (%p3286) target = $region68
      $region67: #{autoencoder_forward.1} parent=5 // pred_region
        %s3289 = ssub.s32 %s20, 2
        // Predicated region
        $region69: #{autoencoder_forward.1} parent=67 // pred_check
          %p3290 = pneg %p243
        $region70: #{autoencoder_forward.1} parent=67 // pred_check_branch
          %3292 = sbr.rel (%p3290) target = $region72
        $region71: #{autoencoder_forward.1} parent=67 // pred_region
          %s3293 = smul.u32 32, %s26
          %p3294 = scmp.lt.s32.totalorder %s3293, 63
          %s3295 = scalar_select %p3294, %s3293, 63
          %s3296 = smul.addr %s3295, 8
          %s3297 = scalar_lea.vmem %s9, %s3296
        $region72: #{autoencoder_forward.1} parent=67 // pred_fallthru
          _
        // Predicated region
        $region73: #{autoencoder_forward.1} parent=67 // pred_check
          %p3298 = pneg %p269
        $region74: #{autoencoder_forward.1} parent=67 // pred_check_branch
          %3300 = sbr.rel (%p3298) target = $region76
        $region75: #{autoencoder_forward.1} parent=67 // pred_region
          %s3301 = sand.u32 %s254, 1
          %s3302 = scalar_lea.sflag [#allocation3], %s3301
          %s3303 = sand.u32 %s254, 1
          %s3304 = smul.addr %s3303, 256
          %s3305 = scalar_lea.vmem [#allocation2], %s3304
          %3306 = dma.done %s3302, 4096
        $region76: #{autoencoder_forward.1} parent=67 // pred_fallthru
          _
      $region68: #{autoencoder_forward.1} parent=5 // pred_fallthru
        _
    $region6: #{autoencoder_forward.1} parent=1 // loop_footer
      %s24 = sadd.s32 1, %s20
    $region7: #{autoencoder_forward.1} parent=1 // loop_footer_branch
      %19 = sbr.rel target = $region3
    $region8: #{autoencoder_forward.1} parent=1 // loop_exit
      _
    %3307 = vsyncpa [#allocation3], 1
    %s3308 = scalar_lea.sflag [#allocation3], 1
    %3309 = vsyncpa %s3308, 1

</llo_original>
